<compile_context>
chip_gen: v6e
topology: v6e:2x2x1
jax: 0.10.0
libtpu: 0.0.40
codegen_flags: <defaults>
</compile_context>

<pallas_src>
import numpy as np
import jax
import jax.numpy as jnp
from jax import lax
from jax.experimental import pallas as pl
from jax.experimental.pallas import tpu as pltpu

LATENT_DIM = 8
C, H, W = 32, 32, 32
HW = H * W                      # 1024
K = 4
NTAP = K * K                    # 16
OUT_H, OUT_W = 64, 64
N_FC = C * HW                   # 32768

# Transposed-conv tap table (stride=2, padding=1, kernel=4):
#   out[2j+py, 2i+px] = sum over (dy,dx,ky,kx) of x[j+dy, i+dx, :] . w[:, ky, kx]
#   (terms with j+dy or i+dx outside [0, 32) contribute zero).
_TAPS = {
    (0, 0): ((0, 0, 1, 1), (-1, 0, 3, 1), (0, -1, 1, 3), (-1, -1, 3, 3)),
    (0, 1): ((0, 1, 1, 0), (0, 0, 1, 2), (-1, 1, 3, 0), (-1, 0, 3, 2)),
    (1, 0): ((1, 0, 0, 1), (0, 0, 2, 1), (1, -1, 0, 3), (0, -1, 2, 3)),
    (1, 1): ((1, 1, 0, 0), (1, 0, 0, 2), (0, 1, 2, 0), (0, 0, 2, 2)),
}

_PAD = 128   # lane-aligned zero padding; every tap shift (|dy*W+dx| <= 33) stays in-bounds


# ------------------------------ fused decoder kernel ------------------------------
def decoder_kernel(z_ref, w3_ref, fcb_ref, wt_ref, ctb_ref, o_ref, tpad_ref):
    # z_ref   : (B, L)          f32 in SMEM (whole array, scalar reads)
    # w3_ref  : (L, C, HW)      resident FC weight, w3[l, c, s] = fc_w[c*HW + s, l]
    # fcb_ref : (C, HW)         FC bias in NCHW-view layout
    # wt_ref  : (NTAP, C)       convt tap matrix, row t = ky*4+kx holds w[:, ky, kx]
    # ctb_ref : (1, 1)          convt bias in SMEM
    # o_ref   : (1, 4, HW)      4 parity planes (p = 2*py + px), lane-dense last dim
    # tpad_ref: (NTAP, HW+2PAD) VMEM scratch for the padded tap planes
    b = pl.program_id(0)

    # ---- fc + relu, computed directly in the (C, H*W) NCHW-view layout ----
    # x[c, s] = relu(fcb[c, s] + sum_l z[l] * w3[l, c, s]); 8 scalar-broadcast FMAs on
    # the VPU (exact f32) -- no M=1 MXU matmul and no (1,32768)->(32,1024) relayout.
    x = fcb_ref[...]
    for l in range(LATENT_DIM):
        x = x + z_ref[b, l] * w3_ref[l]
    x = jnp.maximum(x, 0.0)                                                   # (C, HW)

    # ---- transposed conv: channel contraction for all 16 taps at once on the MXU ----
    #   T[t, j*W + i] = sum_c w[c, ky, kx] * x[c, j, i]
    t_mat = jnp.dot(wt_ref[...], x, preferred_element_type=jnp.float32)       # (16, HW)

    # Padded tap planes live in scratch: zero the (lane-aligned) pads and store the
    # center with static slices -- no jnp.concatenate copies.  Row (dy) overflow of a
    # shifted slice then lands in the zero pad.
    tpad_ref[:, 0:_PAD] = jnp.zeros((NTAP, _PAD), jnp.float32)
    tpad_ref[:, _PAD + HW:_PAD + HW + _PAD] = jnp.zeros((NTAP, _PAD), jnp.float32)
    tpad_ref[:, _PAD:_PAD + HW] = t_mat

    # Column masks handle the i+dx wrap across image rows (dx = -1 / +1 only).
    col = lax.broadcasted_iota(jnp.int32, (1, HW), 1) & (W - 1)               # i = hw % W (W is 2^k)
    col_masks = {-1: col >= 1, 0: None, 1: col <= (W - 2)}

    bias = ctb_ref[0, 0]
    for p, (py, px) in enumerate(((0, 0), (0, 1), (1, 0), (1, 1))):           # p = 2*py + px
        acc = jnp.zeros((1, HW), jnp.float32)
        for (dy, dx, ky, kx) in _TAPS[(py, px)]:
            t = ky * K + kx
            s = dy * W + dx
            contrib = tpad_ref[t:t + 1, _PAD + s:_PAD + s + HW]               # (1, HW)
            m = col_masks[dx]
            if m is not None:
                contrib = jnp.where(m, contrib, 0.0)
            acc = acc + contrib
        o_ref[0, p:p + 1, :] = jax.nn.sigmoid(acc + bias)                     # per-parity store


def decoder_pallas(z, w3, b_chw, wt, ctb):
    B = z.shape[0]
    return pl.pallas_call(
        decoder_kernel,
        out_shape=jax.ShapeDtypeStruct((B, 4, HW), jnp.float32),
        grid_spec=pltpu.PrefetchScalarGridSpec(
            num_scalar_prefetch=0,
            grid=(B,),                                             # >=2 -> both v7x TCs busy
            in_specs=[
                pl.BlockSpec(memory_space=pltpu.MemorySpace.SMEM),            # z (B, L)
                pl.BlockSpec((LATENT_DIM, C, HW), lambda b: (0, 0, 0)),       # w3: resident
                pl.BlockSpec((C, HW), lambda b: (0, 0)),                      # fc bias: resident
                pl.BlockSpec((NTAP, C), lambda b: (0, 0)),                    # tap matrix
                pl.BlockSpec(memory_space=pltpu.MemorySpace.SMEM),            # convt bias (1,1)
            ],
            out_specs=pl.BlockSpec((1, 4, HW), lambda b: (b, 0, 0)),
            scratch_shapes=[pltpu.VMEM((NTAP, HW + 2 * _PAD), jnp.float32)],
        ),
        compiler_params=pltpu.CompilerParams(dimension_semantics=("parallel",)),
    )(z, w3, b_chw, wt, ctb)


# -------------------- one-time parameter prep (outside the jitted forward) --------------------
def prepare_params(fc_w, fc_b, ct_w, ct_b):
    # fc_w (N_FC, L) -> (L, C, HW): w3[l, c, s] = fc_w[c*HW + s, l]   (lane-dense, ~1 MiB)
    w3 = jnp.transpose(fc_w, (1, 0)).reshape(LATENT_DIM, C, HW)
    b_chw = fc_b.reshape(C, HW)
    # ConvTranspose2d weight (C_in, 1, kH, kW) -> (NTAP, C) tap matrix (2 KiB).
    wt = jnp.transpose(ct_w[:, 0].reshape(C, NTAP), (1, 0))
    ctb = ct_b.reshape(1, 1)
    return w3, b_chw, wt, ctb


# ----------------------------------- wrapper ------------------------------------
@jax.jit
def decoder2d_forward(z, w3, b_chw, wt, ctb):
    B = z.shape[0]
    planes = decoder_pallas(z, w3, b_chw, wt, ctb)                 # (B, 4, 1024)
    # Interleave parity planes: (b, py, px, j, i) -> (B, 64, 64)   (32 KiB transpose).
    out = planes.reshape(B, 2, 2, H, W)
    out = jnp.transpose(out, (0, 3, 1, 4, 2)).reshape(B, OUT_H, OUT_W)
    return out[:, None, :, :]


# ------------------------------- pure-JAX reference ------------------------------
@jax.jit
def decoder2d_reference(z, fc_w, fc_b, ct_w, ct_b):
    y = jnp.maximum(z @ fc_w.T + fc_b, 0.0)
    x = y.reshape(-1, C, H, W)
    # ConvTranspose2d == dilated conv with spatially flipped, in/out-swapped weights.
    w_conv = jnp.transpose(jnp.flip(ct_w, axis=(2, 3)), (1, 0, 2, 3))  # (1, C, 4, 4)
    out = lax.conv_general_dilated(
        x, w_conv, window_strides=(1, 1), padding=((2, 2), (2, 2)),
        lhs_dilation=(2, 2), dimension_numbers=("NCHW", "OIHW", "NCHW"))
    return jax.nn.sigmoid(out + ct_b.reshape(1, 1, 1, 1))


if __name__ == "__main__":
    key = jax.random.PRNGKey(0)
    k1, k2, k3, k4, k5 = jax.random.split(key, 5)
    fc_w = 0.05 * jax.random.normal(k1, (N_FC, LATENT_DIM), jnp.float32)
    fc_b = 0.05 * jax.random.normal(k2, (N_FC,), jnp.float32)
    ct_w = 0.10 * jax.random.normal(k3, (C, 1, K, K), jnp.float32)
    ct_b = 0.10 * jax.random.normal(k4, (1,), jnp.float32)
    z = jax.random.normal(k5, (2, LATENT_DIM), jnp.float32)

    # One-time weight preparation (hoisted out of the per-call forward).
    params = prepare_params(fc_w, fc_b, ct_w, ct_b)
    params = tuple(jax.block_until_ready(p) for p in params)

    x_hat = jax.block_until_ready(decoder2d_forward(z, *params))
    ref = jax.block_until_ready(decoder2d_reference(z, fc_w, fc_b, ct_w, ct_b))

    assert x_hat.shape == (2, 1, OUT_H, OUT_W) and x_hat.dtype == jnp.float32
    np.testing.assert_allclose(np.asarray(x_hat), np.asarray(ref), rtol=1e-3, atol=2e-3)
    print("KERNEL_OK")
</pallas_src>

<mosaic_0001>
module attributes {stable_mosaic.version = 11 : i64} {
  func.func @decoder_kernel(%arg0: i32, %arg1: memref<2x8xf32, #tpu.memory_space<smem>>, %arg2: memref<8x32x1024xf32, #tpu.memory_space<vmem>>, %arg3: memref<32x1024xf32, #tpu.memory_space<vmem>>, %arg4: memref<16x32xf32, #tpu.memory_space<vmem>>, %arg5: memref<1x1xf32, #tpu.memory_space<smem>>, %arg6: memref<1x4x1024xf32, #tpu.memory_space<vmem>>, %arg7: memref<16x1280xf32, #tpu.memory_space<vmem>>) attributes {dimension_semantics = [#tpu.dimension_semantics<parallel>], iteration_bounds = array<i64: 2>, scalar_prefetch = 0 : i64, scratch_operands = 1 : i64, tpu.core_type = #tpu.core_type<tc>, window_params = [{transform_indices = @transform_0, window_bounds = array<i64: 2, 8>}, {pipeline_mode = #tpu.pipeline_mode<synchronous>, transform_indices = @transform_1, window_bounds = array<i64: 8, 32, 1024>}, {pipeline_mode = #tpu.pipeline_mode<synchronous>, transform_indices = @transform_2, window_bounds = array<i64: 32, 1024>}, {pipeline_mode = #tpu.pipeline_mode<synchronous>, transform_indices = @transform_3, window_bounds = array<i64: 16, 32>}, {transform_indices = @transform_4, window_bounds = array<i64: 1, 1>}, {transform_indices = @transform_5, window_bounds = array<i64: 1, 4, 1024>}]} {
    %c0 = arith.constant 0 : index
    %c0_0 = arith.constant 0 : index
    %0 = vector.load %arg3[%c0, %c0_0] : memref<32x1024xf32, #tpu.memory_space<vmem>>, vector<32x1024xf32>
    %1 = arith.index_cast %arg0 : i32 to index
    %c0_1 = arith.constant 0 : index
    %2 = memref.load %arg1[%1, %c0_1] : memref<2x8xf32, #tpu.memory_space<smem>>
    %c0_2 = arith.constant 0 : index
    %c0_3 = arith.constant 0 : index
    %c0_4 = arith.constant 0 : index
    %3 = vector.load %arg2[%c0_2, %c0_3, %c0_4] : memref<8x32x1024xf32, #tpu.memory_space<vmem>>, vector<1x32x1024xf32>
    %4 = vector.shape_cast %3 : vector<1x32x1024xf32> to vector<32x1024xf32>
    %5 = vector.broadcast %2 : f32 to vector<32x1024xf32>
    %6 = arith.mulf %5, %4 : vector<32x1024xf32>
    %7 = arith.addf %0, %6 : vector<32x1024xf32>
    %8 = arith.index_cast %arg0 : i32 to index
    %c1 = arith.constant 1 : index
    %9 = memref.load %arg1[%8, %c1] : memref<2x8xf32, #tpu.memory_space<smem>>
    %c1_5 = arith.constant 1 : index
    %c0_6 = arith.constant 0 : index
    %c0_7 = arith.constant 0 : index
    %10 = vector.load %arg2[%c1_5, %c0_6, %c0_7] : memref<8x32x1024xf32, #tpu.memory_space<vmem>>, vector<1x32x1024xf32>
    %11 = vector.shape_cast %10 : vector<1x32x1024xf32> to vector<32x1024xf32>
    %12 = vector.broadcast %9 : f32 to vector<32x1024xf32>
    %13 = arith.mulf %12, %11 : vector<32x1024xf32>
    %14 = arith.addf %7, %13 : vector<32x1024xf32>
    %15 = arith.index_cast %arg0 : i32 to index
    %c2 = arith.constant 2 : index
    %16 = memref.load %arg1[%15, %c2] : memref<2x8xf32, #tpu.memory_space<smem>>
    %c2_8 = arith.constant 2 : index
    %c0_9 = arith.constant 0 : index
    %c0_10 = arith.constant 0 : index
    %17 = vector.load %arg2[%c2_8, %c0_9, %c0_10] : memref<8x32x1024xf32, #tpu.memory_space<vmem>>, vector<1x32x1024xf32>
    %18 = vector.shape_cast %17 : vector<1x32x1024xf32> to vector<32x1024xf32>
    %19 = vector.broadcast %16 : f32 to vector<32x1024xf32>
    %20 = arith.mulf %19, %18 : vector<32x1024xf32>
    %21 = arith.addf %14, %20 : vector<32x1024xf32>
    %22 = arith.index_cast %arg0 : i32 to index
    %c3 = arith.constant 3 : index
    %23 = memref.load %arg1[%22, %c3] : memref<2x8xf32, #tpu.memory_space<smem>>
    %c3_11 = arith.constant 3 : index
    %c0_12 = arith.constant 0 : index
    %c0_13 = arith.constant 0 : index
    %24 = vector.load %arg2[%c3_11, %c0_12, %c0_13] : memref<8x32x1024xf32, #tpu.memory_space<vmem>>, vector<1x32x1024xf32>
    %25 = vector.shape_cast %24 : vector<1x32x1024xf32> to vector<32x1024xf32>
    %26 = vector.broadcast %23 : f32 to vector<32x1024xf32>
    %27 = arith.mulf %26, %25 : vector<32x1024xf32>
    %28 = arith.addf %21, %27 : vector<32x1024xf32>
    %29 = arith.index_cast %arg0 : i32 to index
    %c4 = arith.constant 4 : index
    %30 = memref.load %arg1[%29, %c4] : memref<2x8xf32, #tpu.memory_space<smem>>
    %c4_14 = arith.constant 4 : index
    %c0_15 = arith.constant 0 : index
    %c0_16 = arith.constant 0 : index
    %31 = vector.load %arg2[%c4_14, %c0_15, %c0_16] : memref<8x32x1024xf32, #tpu.memory_space<vmem>>, vector<1x32x1024xf32>
    %32 = vector.shape_cast %31 : vector<1x32x1024xf32> to vector<32x1024xf32>
    %33 = vector.broadcast %30 : f32 to vector<32x1024xf32>
    %34 = arith.mulf %33, %32 : vector<32x1024xf32>
    %35 = arith.addf %28, %34 : vector<32x1024xf32>
    %36 = arith.index_cast %arg0 : i32 to index
    %c5 = arith.constant 5 : index
    %37 = memref.load %arg1[%36, %c5] : memref<2x8xf32, #tpu.memory_space<smem>>
    %c5_17 = arith.constant 5 : index
    %c0_18 = arith.constant 0 : index
    %c0_19 = arith.constant 0 : index
    %38 = vector.load %arg2[%c5_17, %c0_18, %c0_19] : memref<8x32x1024xf32, #tpu.memory_space<vmem>>, vector<1x32x1024xf32>
    %39 = vector.shape_cast %38 : vector<1x32x1024xf32> to vector<32x1024xf32>
    %40 = vector.broadcast %37 : f32 to vector<32x1024xf32>
    %41 = arith.mulf %40, %39 : vector<32x1024xf32>
    %42 = arith.addf %35, %41 : vector<32x1024xf32>
    %43 = arith.index_cast %arg0 : i32 to index
    %c6 = arith.constant 6 : index
    %44 = memref.load %arg1[%43, %c6] : memref<2x8xf32, #tpu.memory_space<smem>>
    %c6_20 = arith.constant 6 : index
    %c0_21 = arith.constant 0 : index
    %c0_22 = arith.constant 0 : index
    %45 = vector.load %arg2[%c6_20, %c0_21, %c0_22] : memref<8x32x1024xf32, #tpu.memory_space<vmem>>, vector<1x32x1024xf32>
    %46 = vector.shape_cast %45 : vector<1x32x1024xf32> to vector<32x1024xf32>
    %47 = vector.broadcast %44 : f32 to vector<32x1024xf32>
    %48 = arith.mulf %47, %46 : vector<32x1024xf32>
    %49 = arith.addf %42, %48 : vector<32x1024xf32>
    %50 = arith.index_cast %arg0 : i32 to index
    %c7 = arith.constant 7 : index
    %51 = memref.load %arg1[%50, %c7] : memref<2x8xf32, #tpu.memory_space<smem>>
    %c7_23 = arith.constant 7 : index
    %c0_24 = arith.constant 0 : index
    %c0_25 = arith.constant 0 : index
    %52 = vector.load %arg2[%c7_23, %c0_24, %c0_25] : memref<8x32x1024xf32, #tpu.memory_space<vmem>>, vector<1x32x1024xf32>
    %53 = vector.shape_cast %52 : vector<1x32x1024xf32> to vector<32x1024xf32>
    %54 = vector.broadcast %51 : f32 to vector<32x1024xf32>
    %55 = arith.mulf %54, %53 : vector<32x1024xf32>
    %56 = arith.addf %49, %55 : vector<32x1024xf32>
    %cst = arith.constant 0.000000e+00 : f32
    %57 = vector.broadcast %cst : f32 to vector<32x1024xf32>
    %58 = arith.maximumf %56, %57 : vector<32x1024xf32>
    %c0_26 = arith.constant 0 : index
    %c0_27 = arith.constant 0 : index
    %59 = vector.load %arg4[%c0_26, %c0_27] : memref<16x32xf32, #tpu.memory_space<vmem>>, vector<16x32xf32>
    %cst_28 = arith.constant dense<0.000000e+00> : vector<16x1024xf32>
    %60 = tpu.matmul %59, %58, %cst_28 {dimension_numbers = #tpu.dot_dimension_numbers<[1], [0], [0], [1], [0, 0, 1, 1], [], []>} : vector<16x32xf32>, vector<32x1024xf32>, vector<16x1024xf32> -> vector<16x1024xf32>
    %cst_29 = arith.constant 0.000000e+00 : f32
    %61 = vector.broadcast %cst_29 : f32 to vector<16x128xf32>
    %c0_30 = arith.constant 0 : index
    %c0_31 = arith.constant 0 : index
    %62 = vector.load %arg7[%c0_30, %c0_31] : memref<16x1280xf32, #tpu.memory_space<vmem>>, vector<16x128xf32>
    tpu.vector_store %arg7[%c0_30, %c0_31], %61 {strides = array<i32>} : memref<16x1280xf32, #tpu.memory_space<vmem>>, vector<16x128xf32>,
    %cst_32 = arith.constant 0.000000e+00 : f32
    %63 = vector.broadcast %cst_32 : f32 to vector<16x128xf32>
    %c0_33 = arith.constant 0 : index
    %c1152 = arith.constant 1152 : index
    %64 = vector.load %arg7[%c0_33, %c1152] : memref<16x1280xf32, #tpu.memory_space<vmem>>, vector<16x128xf32>
    tpu.vector_store %arg7[%c0_33, %c1152], %63 {strides = array<i32>} : memref<16x1280xf32, #tpu.memory_space<vmem>>, vector<16x128xf32>,
    %c0_34 = arith.constant 0 : index
    %c128 = arith.constant 128 : index
    %65 = vector.load %arg7[%c0_34, %c128] : memref<16x1280xf32, #tpu.memory_space<vmem>>, vector<16x1024xf32>
    tpu.vector_store %arg7[%c0_34, %c128], %60 {strides = array<i32>} : memref<16x1280xf32, #tpu.memory_space<vmem>>, vector<16x1024xf32>,
    %66 = tpu.iota {dimensions = array<i32: 1>} : vector<1x1024xi32>
    %c31_i32 = arith.constant 31 : i32
    %67 = vector.broadcast %c31_i32 : i32 to vector<1x1024xi32>
    %68 = arith.andi %66, %67 : vector<1x1024xi32>
    %c1_i32 = arith.constant 1 : i32
    %69 = vector.broadcast %c1_i32 : i32 to vector<1x1024xi32>
    %70 = arith.cmpi sge, %68, %69 : vector<1x1024xi32>
    %c30_i32 = arith.constant 30 : i32
    %71 = vector.broadcast %c30_i32 : i32 to vector<1x1024xi32>
    %72 = arith.cmpi sle, %68, %71 : vector<1x1024xi32>
    %c0_35 = arith.constant 0 : index
    %c0_36 = arith.constant 0 : index
    %73 = memref.load %arg5[%c0_35, %c0_36] : memref<1x1xf32, #tpu.memory_space<smem>>
    %cst_37 = arith.constant 0.000000e+00 : f32
    %74 = vector.broadcast %cst_37 : f32 to vector<1x1024xf32>
    %c5_38 = arith.constant 5 : index
    %c128_39 = arith.constant 128 : index
    %75 = vector.load %arg7[%c5_38, %c128_39] : memref<16x1280xf32, #tpu.memory_space<vmem>>, vector<1x1024xf32>
    %76 = arith.addf %74, %75 : vector<1x1024xf32>
    %c13 = arith.constant 13 : index
    %c96 = arith.constant 96 : index
    %77 = vector.load %arg7[%c13, %c96] : memref<16x1280xf32, #tpu.memory_space<vmem>>, vector<1x1024xf32>
    %78 = arith.addf %76, %77 : vector<1x1024xf32>
    %c7_40 = arith.constant 7 : index
    %c127 = arith.constant 127 : index
    %79 = vector.load %arg7[%c7_40, %c127] : memref<16x1280xf32, #tpu.memory_space<vmem>>, vector<1x1024xf32>
    %cst_41 = arith.constant 0.000000e+00 : f32
    %80 = vector.broadcast %cst_41 : f32 to vector<1x1024xf32>
    %81 = arith.select %70, %79, %80 : vector<1x1024xi1>, vector<1x1024xf32>
    %82 = arith.addf %78, %81 : vector<1x1024xf32>
    %c15 = arith.constant 15 : index
    %c95 = arith.constant 95 : index
    %83 = vector.load %arg7[%c15, %c95] : memref<16x1280xf32, #tpu.memory_space<vmem>>, vector<1x1024xf32>
    %cst_42 = arith.constant 0.000000e+00 : f32
    %84 = vector.broadcast %cst_42 : f32 to vector<1x1024xf32>
    %85 = arith.select %70, %83, %84 : vector<1x1024xi1>, vector<1x1024xf32>
    %86 = arith.addf %82, %85 : vector<1x1024xf32>
    %87 = vector.broadcast %73 : f32 to vector<1x1024xf32>
    %88 = arith.addf %86, %87 : vector<1x1024xf32>
    %89 = arith.negf %88 : vector<1x1024xf32>
    %90 = math.exp %89 : vector<1x1024xf32>
    %cst_43 = arith.constant 1.000000e+00 : f32
    %91 = vector.broadcast %cst_43 : f32 to vector<1x1024xf32>
    %92 = arith.addf %91, %90 : vector<1x1024xf32>
    %93 = arith.divf %91, %92 : vector<1x1024xf32>
    %c0_44 = arith.constant 0 : index
    %c0_45 = arith.constant 0 : index
    %c0_46 = arith.constant 0 : index
    %94 = vector.load %arg6[%c0_44, %c0_45, %c0_46] : memref<1x4x1024xf32, #tpu.memory_space<vmem>>, vector<1x1x1024xf32>
    %95 = vector.shape_cast %94 : vector<1x1x1024xf32> to vector<1x1024xf32>
    %96 = vector.shape_cast %93 : vector<1x1024xf32> to vector<1x1x1024xf32>
    tpu.vector_store %arg6[%c0_44, %c0_45, %c0_46], %96 {strides = array<i32>} : memref<1x4x1024xf32, #tpu.memory_space<vmem>>, vector<1x1x1024xf32>,
    %cst_47 = arith.constant 0.000000e+00 : f32
    %97 = vector.broadcast %cst_47 : f32 to vector<1x1024xf32>
    %c4_48 = arith.constant 4 : index
    %c129 = arith.constant 129 : index
    %98 = vector.load %arg7[%c4_48, %c129] : memref<16x1280xf32, #tpu.memory_space<vmem>>, vector<1x1024xf32>
    %cst_49 = arith.constant 0.000000e+00 : f32
    %99 = vector.broadcast %cst_49 : f32 to vector<1x1024xf32>
    %100 = arith.select %72, %98, %99 : vector<1x1024xi1>, vector<1x1024xf32>
    %101 = arith.addf %97, %100 : vector<1x1024xf32>
    %c6_50 = arith.constant 6 : index
    %c128_51 = arith.constant 128 : index
    %102 = vector.load %arg7[%c6_50, %c128_51] : memref<16x1280xf32, #tpu.memory_space<vmem>>, vector<1x1024xf32>
    %103 = arith.addf %101, %102 : vector<1x1024xf32>
    %c12 = arith.constant 12 : index
    %c97 = arith.constant 97 : index
    %104 = vector.load %arg7[%c12, %c97] : memref<16x1280xf32, #tpu.memory_space<vmem>>, vector<1x1024xf32>
    %cst_52 = arith.constant 0.000000e+00 : f32
    %105 = vector.broadcast %cst_52 : f32 to vector<1x1024xf32>
    %106 = arith.select %72, %104, %105 : vector<1x1024xi1>, vector<1x1024xf32>
    %107 = arith.addf %103, %106 : vector<1x1024xf32>
    %c14 = arith.constant 14 : index
    %c96_53 = arith.constant 96 : index
    %108 = vector.load %arg7[%c14, %c96_53] : memref<16x1280xf32, #tpu.memory_space<vmem>>, vector<1x1024xf32>
    %109 = arith.addf %107, %108 : vector<1x1024xf32>
    %110 = vector.broadcast %73 : f32 to vector<1x1024xf32>
    %111 = arith.addf %109, %110 : vector<1x1024xf32>
    %112 = arith.negf %111 : vector<1x1024xf32>
    %113 = math.exp %112 : vector<1x1024xf32>
    %cst_54 = arith.constant 1.000000e+00 : f32
    %114 = vector.broadcast %cst_54 : f32 to vector<1x1024xf32>
    %115 = arith.addf %114, %113 : vector<1x1024xf32>
    %116 = arith.divf %114, %115 : vector<1x1024xf32>
    %c0_55 = arith.constant 0 : index
    %c1_56 = arith.constant 1 : index
    %c0_57 = arith.constant 0 : index
    %117 = vector.load %arg6[%c0_55, %c1_56, %c0_57] : memref<1x4x1024xf32, #tpu.memory_space<vmem>>, vector<1x1x1024xf32>
    %118 = vector.shape_cast %117 : vector<1x1x1024xf32> to vector<1x1024xf32>
    %119 = vector.shape_cast %116 : vector<1x1024xf32> to vector<1x1x1024xf32>
    tpu.vector_store %arg6[%c0_55, %c1_56, %c0_57], %119 {strides = array<i32>} : memref<1x4x1024xf32, #tpu.memory_space<vmem>>, vector<1x1x1024xf32>,
    %cst_58 = arith.constant 0.000000e+00 : f32
    %120 = vector.broadcast %cst_58 : f32 to vector<1x1024xf32>
    %c1_59 = arith.constant 1 : index
    %c160 = arith.constant 160 : index
    %121 = vector.load %arg7[%c1_59, %c160] : memref<16x1280xf32, #tpu.memory_space<vmem>>, vector<1x1024xf32>
    %122 = arith.addf %120, %121 : vector<1x1024xf32>
    %c9 = arith.constant 9 : index
    %c128_60 = arith.constant 128 : index
    %123 = vector.load %arg7[%c9, %c128_60] : memref<16x1280xf32, #tpu.memory_space<vmem>>, vector<1x1024xf32>
    %124 = arith.addf %122, %123 : vector<1x1024xf32>
    %c3_61 = arith.constant 3 : index
    %c159 = arith.constant 159 : index
    %125 = vector.load %arg7[%c3_61, %c159] : memref<16x1280xf32, #tpu.memory_space<vmem>>, vector<1x1024xf32>
    %cst_62 = arith.constant 0.000000e+00 : f32
    %126 = vector.broadcast %cst_62 : f32 to vector<1x1024xf32>
    %127 = arith.select %70, %125, %126 : vector<1x1024xi1>, vector<1x1024xf32>
    %128 = arith.addf %124, %127 : vector<1x1024xf32>
    %c11 = arith.constant 11 : index
    %c127_63 = arith.constant 127 : index
    %129 = vector.load %arg7[%c11, %c127_63] : memref<16x1280xf32, #tpu.memory_space<vmem>>, vector<1x1024xf32>
    %cst_64 = arith.constant 0.000000e+00 : f32
    %130 = vector.broadcast %cst_64 : f32 to vector<1x1024xf32>
    %131 = arith.select %70, %129, %130 : vector<1x1024xi1>, vector<1x1024xf32>
    %132 = arith.addf %128, %131 : vector<1x1024xf32>
    %133 = vector.broadcast %73 : f32 to vector<1x1024xf32>
    %134 = arith.addf %132, %133 : vector<1x1024xf32>
    %135 = arith.negf %134 : vector<1x1024xf32>
    %136 = math.exp %135 : vector<1x1024xf32>
    %cst_65 = arith.constant 1.000000e+00 : f32
    %137 = vector.broadcast %cst_65 : f32 to vector<1x1024xf32>
    %138 = arith.addf %137, %136 : vector<1x1024xf32>
    %139 = arith.divf %137, %138 : vector<1x1024xf32>
    %c0_66 = arith.constant 0 : index
    %c2_67 = arith.constant 2 : index
    %c0_68 = arith.constant 0 : index
    %140 = vector.load %arg6[%c0_66, %c2_67, %c0_68] : memref<1x4x1024xf32, #tpu.memory_space<vmem>>, vector<1x1x1024xf32>
    %141 = vector.shape_cast %140 : vector<1x1x1024xf32> to vector<1x1024xf32>
    %142 = vector.shape_cast %139 : vector<1x1024xf32> to vector<1x1x1024xf32>
    tpu.vector_store %arg6[%c0_66, %c2_67, %c0_68], %142 {strides = array<i32>} : memref<1x4x1024xf32, #tpu.memory_space<vmem>>, vector<1x1x1024xf32>,
    %cst_69 = arith.constant 0.000000e+00 : f32
    %143 = vector.broadcast %cst_69 : f32 to vector<1x1024xf32>
    %c0_70 = arith.constant 0 : index
    %c161 = arith.constant 161 : index
    %144 = vector.load %arg7[%c0_70, %c161] : memref<16x1280xf32, #tpu.memory_space<vmem>>, vector<1x1024xf32>
    %cst_71 = arith.constant 0.000000e+00 : f32
    %145 = vector.broadcast %cst_71 : f32 to vector<1x1024xf32>
    %146 = arith.select %72, %144, %145 : vector<1x1024xi1>, vector<1x1024xf32>
    %147 = arith.addf %143, %146 : vector<1x1024xf32>
    %c2_72 = arith.constant 2 : index
    %c160_73 = arith.constant 160 : index
    %148 = vector.load %arg7[%c2_72, %c160_73] : memref<16x1280xf32, #tpu.memory_space<vmem>>, vector<1x1024xf32>
    %149 = arith.addf %147, %148 : vector<1x1024xf32>
    %c8 = arith.constant 8 : index
    %c129_74 = arith.constant 129 : index
    %150 = vector.load %arg7[%c8, %c129_74] : memref<16x1280xf32, #tpu.memory_space<vmem>>, vector<1x1024xf32>
    %cst_75 = arith.constant 0.000000e+00 : f32
    %151 = vector.broadcast %cst_75 : f32 to vector<1x1024xf32>
    %152 = arith.select %72, %150, %151 : vector<1x1024xi1>, vector<1x1024xf32>
    %153 = arith.addf %149, %152 : vector<1x1024xf32>
    %c10 = arith.constant 10 : index
    %c128_76 = arith.constant 128 : index
    %154 = vector.load %arg7[%c10, %c128_76] : memref<16x1280xf32, #tpu.memory_space<vmem>>, vector<1x1024xf32>
    %155 = arith.addf %153, %154 : vector<1x1024xf32>
    %156 = vector.broadcast %73 : f32 to vector<1x1024xf32>
    %157 = arith.addf %155, %156 : vector<1x1024xf32>
    %158 = arith.negf %157 : vector<1x1024xf32>
    %159 = math.exp %158 : vector<1x1024xf32>
    %cst_77 = arith.constant 1.000000e+00 : f32
    %160 = vector.broadcast %cst_77 : f32 to vector<1x1024xf32>
    %161 = arith.addf %160, %159 : vector<1x1024xf32>
    %162 = arith.divf %160, %161 : vector<1x1024xf32>
    %c0_78 = arith.constant 0 : index
    %c3_79 = arith.constant 3 : index
    %c0_80 = arith.constant 0 : index
    %163 = vector.load %arg6[%c0_78, %c3_79, %c0_80] : memref<1x4x1024xf32, #tpu.memory_space<vmem>>, vector<1x1x1024xf32>
    %164 = vector.shape_cast %163 : vector<1x1x1024xf32> to vector<1x1024xf32>
    %165 = vector.shape_cast %162 : vector<1x1024xf32> to vector<1x1x1024xf32>
    tpu.vector_store %arg6[%c0_78, %c3_79, %c0_80], %165 {strides = array<i32>} : memref<1x4x1024xf32, #tpu.memory_space<vmem>>, vector<1x1x1024xf32>,
    return
  }
  func.func @transform_0(%arg0: i32) -> (i32, i32) {
    %c0_i32 = arith.constant 0 : i32
    %c0_i32_0 = arith.constant 0 : i32
    %c0_i32_1 = arith.constant 0 : i32
    return %c0_i32, %c0_i32_0 : i32, i32
  }
  func.func @transform_1(%arg0: i32) -> (i32, i32, i32) {
    %c0_i32 = arith.constant 0 : i32
    %c0_i32_0 = arith.constant 0 : i32
    %c0_i32_1 = arith.constant 0 : i32
    %c0_i32_2 = arith.constant 0 : i32
    return %c0_i32, %c0_i32_0, %c0_i32_1 : i32, i32, i32
  }
  func.func @transform_2(%arg0: i32) -> (i32, i32) {
    %c0_i32 = arith.constant 0 : i32
    %c0_i32_0 = arith.constant 0 : i32
    %c0_i32_1 = arith.constant 0 : i32
    return %c0_i32, %c0_i32_0 : i32, i32
  }
  func.func @transform_3(%arg0: i32) -> (i32, i32) {
    %c0_i32 = arith.constant 0 : i32
    %c0_i32_0 = arith.constant 0 : i32
    %c0_i32_1 = arith.constant 0 : i32
    return %c0_i32, %c0_i32_0 : i32, i32
  }
  func.func @transform_4(%arg0: i32) -> (i32, i32) {
    %c0_i32 = arith.constant 0 : i32
    %c0_i32_0 = arith.constant 0 : i32
    %c0_i32_1 = arith.constant 0 : i32
    return %c0_i32, %c0_i32_0 : i32, i32
  }
  func.func @transform_5(%arg0: i32) -> (i32, i32, i32) {
    %c0_i32 = arith.constant 0 : i32
    %c0_i32_0 = arith.constant 0 : i32
    %c0_i32_1 = arith.constant 0 : i32
    return %arg0, %c0_i32, %c0_i32_0 : i32, i32, i32
  }
}

</mosaic_0001>

<llo_original>
// kernel: decoder2d_forward.1
$region0: #{decoder2d_forward.1}
  #allocation0 [shape = 'u32[]', space=smem, size = 0x4, offset = 0x4, fixed_abs, tag = 'smem constant byte address 0x4 - core index']
  #allocation1 [shape = 'u32[144,128]{1,0:T(1,128)}', space=vmem, size = 0x12000, scoped, tag = 'internal scratch']
  #allocation2 [shape = 'f32[16,1280]{1,0:T(8,128)}', space=vmem, size = 0x14000, scoped, tag = 'scratch operand']
  #allocation3 [shape = 'f32[1,1]{1,0:T(1,128)S(6)}', space=smem, size = 0x200, scoped, tag = 'scoped memory for decoder2d_forward.1']
  %s0 = inlined_call_operand.hbm [shape: f32[2,8], index: 0, kind: input, shape index: {}]
  %s1 = inlined_call_operand.hbm [shape: f32[8,32,1024], index: 1, kind: input, shape index: {}]
  %s2 = inlined_call_operand.hbm [shape: f32[32,1024], index: 2, kind: input, shape index: {}]
  %s3 = inlined_call_operand.hbm [shape: f32[16,32], index: 3, kind: input, shape index: {}]
  %s4 = inlined_call_operand.<no memory space> [shape: f32[1,1], index: 4, kind: input, shape index: {}]
  %s5 = inlined_call_operand.vmem [shape: f32[2,4,1024], index: 5, kind: output, shape index: {}]
  %s6 = sld [smem:[#allocation0]]
  $region69: #{decoder2d_forward.1} parent=0
    _
  %s8 = ssub.s32 1, %s6
  %s9 = scalar_select 0, %s8, %s6
  %10 = sst [smem:[#allocation3]] %s4
  $region1: #{decoder2d_forward.1} parent=0
    #allocation4 [shape = 'u8[1024]{0}', space=smem, size = 0x400, scoped, tag = 'input window, operand 0, single buffered']
    #allocation5 [shape = 's32[2]{0}', space=sflag, size = 0x8, scoped, tag = 'scoped memory for decoder2d_forward.1']
    #allocation6 [shape = 's32[2]{0}', space=sflag, size = 0x8, scoped, tag = 'scoped memory for decoder2d_forward.1']
    #allocation7 [shape = 'u8[1048576]{0}', space=vmem, size = 0x100000, scoped, tag = 'input window, operand 1, single buffered']
    #allocation8 [shape = 'u8[131072]{0}', space=vmem, size = 0x20000, scoped, tag = 'input window, operand 2, single buffered']
    #allocation9 [shape = 's32[1]{0}', space=sflag, size = 0x4, scoped, tag = 'scoped memory for decoder2d_forward.1']
    #allocation10 [shape = 'u8[8192]{0}', space=vmem, size = 0x2000, scoped, tag = 'input window, operand 3, single buffered']
    %11 = vsyncpa [#allocation6], 0
    %12 = vsyncpa [#allocation5], 0
    %13 = vsyncpa [#allocation9], 0
    loop: start=0, step=1, limit=4
    $region2: #{decoder2d_forward.1} parent=1 // loop_pre_header
      _
    $region3: #{decoder2d_forward.1} parent=1 // loop_header
      %s15 = sphi 0, %s19
      %p16 = scmp.ge.s32.totalorder %s15, 4
      %s23 = sphi 0, %s23
      %s25 = sphi 0, %s23
      %s26 = sphi 0, %s25
      %s40 = sphi 0, %s26
      %s44 = sphi 0, %s44
      %s46 = sphi 0, %s44
      %s47 = sphi 0, %s46
      %s61 = sphi 0, %s47
      %s65 = sphi 0, %s65
      %s67 = sphi 0, %s65
      %s68 = sphi 0, %s67
      %s82 = sphi 0, %s68
      %s86 = sphi 0, %s86
      %s88 = sphi 0, %s86
      %s89 = sphi 0, %s88
      %s103 = sphi 0, %s89
      %s107 = sphi 0, %s107
      %s109 = sphi 0, %s107
      %s110 = sphi 0, %s109
      %s124 = sphi 0, %s110
      %s130 = sphi 0, %s132
      %s133 = sphi 0, %s130
      %s134 = sphi 0, %s133
      %s150 = sphi 0, %s134
    $region4: #{decoder2d_forward.1} parent=1 // loop_header_branch
      %18 = sbr.rel (%p16) target = $region8
    $region5: #{decoder2d_forward.1} parent=1 // loop_body
      %s20 = ssub.s32 %s15, 1
      %s21 = ssub.s32 %s15, 2
      %s22 = sadd.s32 %s15, 1
      %s24 = sadd.s32 %s23, 1
      %p27 = scmp.eq.s32.totalorder %s15, 1
      %p28 = scmp.ne.s32.totalorder %s23, %s25
      %p29 = scmp.eq.s32.totalorder %s15, 0
      %p30 = por %p28, %p29
      %p31 = scmp.ne.s32.totalorder %s23, %s25
      %p32 = scmp.eq.s32.totalorder %s20, 1
      %p33 = por %p31, %p32
      %p34 = scmp.ne.s32.totalorder %s25, %s26
      %p35 = scmp.eq.s32.totalorder %s20, 0
      %p36 = por %p34, %p35
      %p37 = scmp.ne.s32.totalorder %s25, %s26
      %p38 = scmp.eq.s32.totalorder %s21, 1
      %p39 = por %p37, %p38
      %p41 = scmp.ne.s32.totalorder %s26, %s40
      %p42 = scmp.eq.s32.totalorder %s21, 0
      %p43 = por %p41, %p42
      %s45 = sadd.s32 %s44, 1
      %p48 = scmp.eq.s32.totalorder %s15, 1
      %p49 = scmp.ne.s32.totalorder %s44, %s46
      %p50 = scmp.eq.s32.totalorder %s15, 0
      %p51 = por %p49, %p50
      %p52 = scmp.ne.s32.totalorder %s44, %s46
      %p53 = scmp.eq.s32.totalorder %s20, 1
      %p54 = por %p52, %p53
      %p55 = scmp.ne.s32.totalorder %s46, %s47
      %p56 = scmp.eq.s32.totalorder %s20, 0
      %p57 = por %p55, %p56
      %p58 = scmp.ne.s32.totalorder %s46, %s47
      %p59 = scmp.eq.s32.totalorder %s21, 1
      %p60 = por %p58, %p59
      %p62 = scmp.ne.s32.totalorder %s47, %s61
      %p63 = scmp.eq.s32.totalorder %s21, 0
      %p64 = por %p62, %p63
      %s66 = sadd.s32 %s65, 1
      %p69 = scmp.eq.s32.totalorder %s15, 1
      %p70 = scmp.ne.s32.totalorder %s65, %s67
      %p71 = scmp.eq.s32.totalorder %s15, 0
      %p72 = por %p70, %p71
      %p73 = scmp.ne.s32.totalorder %s65, %s67
      %p74 = scmp.eq.s32.totalorder %s20, 1
      %p75 = por %p73, %p74
      %p76 = scmp.ne.s32.totalorder %s67, %s68
      %p77 = scmp.eq.s32.totalorder %s20, 0
      %p78 = por %p76, %p77
      %p79 = scmp.ne.s32.totalorder %s67, %s68
      %p80 = scmp.eq.s32.totalorder %s21, 1
      %p81 = por %p79, %p80
      %p83 = scmp.ne.s32.totalorder %s68, %s82
      %p84 = scmp.eq.s32.totalorder %s21, 0
      %p85 = por %p83, %p84
      %s87 = sadd.s32 %s86, 1
      %p90 = scmp.eq.s32.totalorder %s15, 1
      %p91 = scmp.ne.s32.totalorder %s86, %s88
      %p92 = scmp.eq.s32.totalorder %s15, 0
      %p93 = por %p91, %p92
      %p94 = scmp.ne.s32.totalorder %s86, %s88
      %p95 = scmp.eq.s32.totalorder %s20, 1
      %p96 = por %p94, %p95
      %p97 = scmp.ne.s32.totalorder %s88, %s89
      %p98 = scmp.eq.s32.totalorder %s20, 0
      %p99 = por %p97, %p98
      %p100 = scmp.ne.s32.totalorder %s88, %s89
      %p101 = scmp.eq.s32.totalorder %s21, 1
      %p102 = por %p100, %p101
      %p104 = scmp.ne.s32.totalorder %s89, %s103
      %p105 = scmp.eq.s32.totalorder %s21, 0
      %p106 = por %p104, %p105
      %s108 = sadd.s32 %s107, 1
      %p111 = scmp.eq.s32.totalorder %s15, 1
      %p112 = scmp.ne.s32.totalorder %s107, %s109
      %p113 = scmp.eq.s32.totalorder %s15, 0
      %p114 = por %p112, %p113
      %p115 = scmp.ne.s32.totalorder %s107, %s109
      %p116 = scmp.eq.s32.totalorder %s20, 1
      %p117 = por %p115, %p116
      %p118 = scmp.ne.s32.totalorder %s109, %s110
      %p119 = scmp.eq.s32.totalorder %s20, 0
      %p120 = por %p118, %p119
      %p121 = scmp.ne.s32.totalorder %s109, %s110
      %p122 = scmp.eq.s32.totalorder %s21, 1
      %p123 = por %p121, %p122
      %p125 = scmp.ne.s32.totalorder %s110, %s124
      %p126 = scmp.eq.s32.totalorder %s21, 0
      %p127 = por %p125, %p126
      %s128 = ssub.s32 %s15, %s22
      %p129 = scmp.eq.s32.totalorder %s128, 0
      %s131 = sadd.s32 %s130, 1
      %s132 = scalar_select %p129, %s130, %s131
      %p135 = pneg %p129
      %p136 = scmp.eq.s32.totalorder %s15, 1
      %p137 = por %p135, %p136
      %p138 = scmp.ne.s32.totalorder %s130, %s133
      %p139 = scmp.eq.s32.totalorder %s15, 0
      %p140 = por %p138, %p139
      %p141 = scmp.ne.s32.totalorder %s130, %s133
      %p142 = scmp.eq.s32.totalorder %s20, 1
      %p143 = por %p141, %p142
      %p144 = scmp.ne.s32.totalorder %s133, %s134
      %p145 = scmp.eq.s32.totalorder %s20, 0
      %p146 = por %p144, %p145
      %p147 = scmp.ne.s32.totalorder %s133, %s134
      %p148 = scmp.eq.s32.totalorder %s21, 1
      %p149 = por %p147, %p148
      %p151 = scmp.ne.s32.totalorder %s134, %s150
      %p152 = scmp.eq.s32.totalorder %s21, 0
      %p153 = por %p151, %p152
      %p154 = scmp.le.s32.totalorder 1, %s15
      %p155 = scmp.lt.s32.totalorder %s15, 3
      %p156 = pnand %p154, %p155
      %p157 = pneg %p156
      // Predicated region
      $region9: #{decoder2d_forward.1} parent=5 // pred_check
        _
      $region10: #{decoder2d_forward.1} parent=5 // pred_check_branch
        %159 = sbr.rel (%p156) target = $region12
      $region11: #{decoder2d_forward.1} parent=5 // pred_region
        %s160 = ssub.s32 %s15, 1
        // Predicated region
        $region13: #{decoder2d_forward.1} parent=11 // pred_check
          %p161 = pneg %p36
        $region14: #{decoder2d_forward.1} parent=11 // pred_check_branch
          %163 = sbr.rel (%p161) target = $region16
        $region15: #{decoder2d_forward.1} parent=11 // pred_region
          %s165 = ssub.s32 32, 32
          %166 = vsyncadd [#allocation6], %s165
          %169 = dma.hbm_to_smem %s0, 32, [#allocation4], [#allocation6]
        $region16: #{decoder2d_forward.1} parent=11 // pred_fallthru
          _
        // Predicated region
        $region17: #{decoder2d_forward.1} parent=11 // pred_check
          %p170 = pneg %p57
        $region18: #{decoder2d_forward.1} parent=11 // pred_check_branch
          %172 = sbr.rel (%p170) target = $region20
        $region19: #{decoder2d_forward.1} parent=11 // pred_region
          %s174 = ssub.s32 32768, 32768
          %175 = vsyncadd [#allocation5], %s174
          %s176 = sshll.u32 [#allocation7], 4
          %s177 = int_to_ptr.vmem [resolvable:$true] %s176
          %182 = dma.hbm_to_vmem [thread:$0]  %s1, 32768, %s177, [#allocation5], 1024, 1024, 64
        $region20: #{decoder2d_forward.1} parent=11 // pred_fallthru
          _
        // Predicated region
        $region21: #{decoder2d_forward.1} parent=11 // pred_check
          %p183 = pneg %p78
        $region22: #{decoder2d_forward.1} parent=11 // pred_check_branch
          %185 = sbr.rel (%p183) target = $region24
        $region23: #{decoder2d_forward.1} parent=11 // pred_region
          %s187 = ssub.s32 4096, 4096
          %188 = vsyncadd [#allocation9], %s187
          %s189 = sshll.u32 [#allocation8], 4
          %s190 = int_to_ptr.vmem [resolvable:$true] %s189
          %195 = dma.hbm_to_vmem [thread:$0]  %s2, 4096, %s190, [#allocation9], 1024, 1024, 64
        $region24: #{decoder2d_forward.1} parent=11 // pred_fallthru
          _
        // Predicated region
        $region25: #{decoder2d_forward.1} parent=11 // pred_check
          %p196 = pneg %p99
        $region26: #{decoder2d_forward.1} parent=11 // pred_check_branch
          %198 = sbr.rel (%p196) target = $region28
        $region27: #{decoder2d_forward.1} parent=11 // pred_region
          %s200 = ssub.s32 256, 256
          %201 = vsyncadd [#allocation9], %s200
          %s202 = sshll.u32 [#allocation10], 4
          %s203 = int_to_ptr.vmem [resolvable:$true] %s202
          %208 = dma.hbm_to_vmem [thread:$0]  %s3, 256, %s203, [#allocation9], 128, 128, 8
        $region28: #{decoder2d_forward.1} parent=11 // pred_fallthru
          _
        // Predicated region
        $region29: #{decoder2d_forward.1} parent=11 // pred_check
          %p209 = pneg %p120
        $region30: #{decoder2d_forward.1} parent=11 // pred_check_branch
          %211 = sbr.rel (%p209) target = $region32
        $region31: #{decoder2d_forward.1} parent=11 // pred_region
          _
        $region32: #{decoder2d_forward.1} parent=11 // pred_fallthru
          _
      $region12: #{decoder2d_forward.1} parent=5 // pred_fallthru
        _
      %p212 = scmp.lt.s32.totalorder %s15, 2
      // Predicated region
      $region33: #{decoder2d_forward.1} parent=5 // pred_check
        %p213 = pneg %p212
      $region34: #{decoder2d_forward.1} parent=5 // pred_check_branch
        %215 = sbr.rel (%p213) target = $region36
      $region35: #{decoder2d_forward.1} parent=5 // pred_region
        _
      $region36: #{decoder2d_forward.1} parent=5 // pred_fallthru
        _
      %p216 = scmp.le.s32.totalorder 1, %s15
      %p217 = scmp.lt.s32.totalorder %s15, 3
      %p218 = pnand %p216, %p217
      %p219 = pneg %p218
      // Predicated region
      $region37: #{decoder2d_forward.1} parent=5 // pred_check
        _
      $region38: #{decoder2d_forward.1} parent=5 // pred_check_branch
        %221 = sbr.rel (%p218) target = $region40
      $region39: #{decoder2d_forward.1} parent=5 // pred_region
        %s222 = ssub.s32 %s15, 1
        // Predicated region
        $region41: #{decoder2d_forward.1} parent=39 // pred_check
          %p223 = pneg %p36
        $region42: #{decoder2d_forward.1} parent=39 // pred_check_branch
          %225 = sbr.rel (%p223) target = $region44
        $region43: #{decoder2d_forward.1} parent=39 // pred_region
          %226 = dma.done [#allocation6], 32
        $region44: #{decoder2d_forward.1} parent=39 // pred_fallthru
          _
        // Predicated region
        $region45: #{decoder2d_forward.1} parent=39 // pred_check
          %p227 = pneg %p57
        $region46: #{decoder2d_forward.1} parent=39 // pred_check_branch
          %229 = sbr.rel (%p227) target = $region48
        $region47: #{decoder2d_forward.1} parent=39 // pred_region
          %230 = dma.done [#allocation5], 32768
        $region48: #{decoder2d_forward.1} parent=39 // pred_fallthru
          _
        // Predicated region
        $region49: #{decoder2d_forward.1} parent=39 // pred_check
          %p231 = pneg %p78
        $region50: #{decoder2d_forward.1} parent=39 // pred_check_branch
          %233 = sbr.rel (%p231) target = $region52
        $region51: #{decoder2d_forward.1} parent=39 // pred_region
          %234 = dma.done [#allocation9], 4096
        $region52: #{decoder2d_forward.1} parent=39 // pred_fallthru
          _
        // Predicated region
        $region53: #{decoder2d_forward.1} parent=39 // pred_check
          %p235 = pneg %p99
        $region54: #{decoder2d_forward.1} parent=39 // pred_check_branch
          %237 = sbr.rel (%p235) target = $region56
        $region55: #{decoder2d_forward.1} parent=39 // pred_region
          %238 = dma.done [#allocation9], 256
        $region56: #{decoder2d_forward.1} parent=39 // pred_fallthru
          _
        %239 = sfence
        %p240 = pneg %p36
        %p241 = pneg %p33
        %p242 = pneg %p57
        %p243 = pneg %p54
        %p244 = pneg %p78
        %p245 = pneg %p75
        %p246 = pneg %p99
        %p247 = pneg %p96
        %p248 = pneg %p120
        %p249 = pneg %p117
        %p250 = pneg %p146
        %p251 = pneg %p143
        %p252 = scmp.lt.s32.totalorder %s20, 1
        %s253 = scalar_select %p252, %s20, 1
        %s254 = smul.addr %s253, 8
        %s255 = smul.addr %s254, 4
        %s256 = scalar_lea.vmem %s5, %s255
        %p257 = scmp.lt.s32.totalorder %s20, 1
        %s258 = scalar_select %p257, %s20, 1
        %s259 = smul.addr %s258, 8
        %s260 = smul.addr %s259, 4
        %s261 = scalar_lea.vmem %s5, %s260
        %v262 = vld [vmem:[#allocation8] sm:$0xff]
        %v263 = vld [vmem:[#allocation8 + $0x8] sm:$0xff]
        %v264 = vld [vmem:[#allocation8 + $0x10] sm:$0xff]
        %v265 = vld [vmem:[#allocation8 + $0x18] sm:$0xff]
        %v266 = vld [vmem:[#allocation8 + $0x20] sm:$0xff]
        %v267 = vld [vmem:[#allocation8 + $0x28] sm:$0xff]
        %v268 = vld [vmem:[#allocation8 + $0x30] sm:$0xff]
        %v269 = vld [vmem:[#allocation8 + $0x38] sm:$0xff]
        %v270 = vld [vmem:[#allocation8 + $0x40] sm:$0xff]
        %v271 = vld [vmem:[#allocation8 + $0x48] sm:$0xff]
        %v272 = vld [vmem:[#allocation8 + $0x50] sm:$0xff]
        %v273 = vld [vmem:[#allocation8 + $0x58] sm:$0xff]
        %v274 = vld [vmem:[#allocation8 + $0x60] sm:$0xff]
        %v275 = vld [vmem:[#allocation8 + $0x68] sm:$0xff]
        %v276 = vld [vmem:[#allocation8 + $0x70] sm:$0xff]
        %v277 = vld [vmem:[#allocation8 + $0x78] sm:$0xff]
        %v278 = vld [vmem:[#allocation8 + $0x80] sm:$0xff]
        %v279 = vld [vmem:[#allocation8 + $0x88] sm:$0xff]
        %v280 = vld [vmem:[#allocation8 + $0x90] sm:$0xff]
        %v281 = vld [vmem:[#allocation8 + $0x98] sm:$0xff]
        %v282 = vld [vmem:[#allocation8 + $0xa0] sm:$0xff]
        %v283 = vld [vmem:[#allocation8 + $0xa8] sm:$0xff]
        %v284 = vld [vmem:[#allocation8 + $0xb0] sm:$0xff]
        %v285 = vld [vmem:[#allocation8 + $0xb8] sm:$0xff]
        %v286 = vld [vmem:[#allocation8 + $0xc0] sm:$0xff]
        %v287 = vld [vmem:[#allocation8 + $0xc8] sm:$0xff]
        %v288 = vld [vmem:[#allocation8 + $0xd0] sm:$0xff]
        %v289 = vld [vmem:[#allocation8 + $0xd8] sm:$0xff]
        %v290 = vld [vmem:[#allocation8 + $0xe0] sm:$0xff]
        %v291 = vld [vmem:[#allocation8 + $0xe8] sm:$0xff]
        %v292 = vld [vmem:[#allocation8 + $0xf0] sm:$0xff]
        %v293 = vld [vmem:[#allocation8 + $0xf8] sm:$0xff]
        %s294 = smul.u32 %s20, 128
        %s295 = sld [smem:[#allocation4 + %s294]]
        %v296 = vld [vmem:[#allocation7] sm:$0xff]
        %v297 = vld [vmem:[#allocation7 + $0x8] sm:$0xff]
        %v298 = vld [vmem:[#allocation7 + $0x10] sm:$0xff]
        %v299 = vld [vmem:[#allocation7 + $0x18] sm:$0xff]
        %v300 = vld [vmem:[#allocation7 + $0x20] sm:$0xff]
        %v301 = vld [vmem:[#allocation7 + $0x28] sm:$0xff]
        %v302 = vld [vmem:[#allocation7 + $0x30] sm:$0xff]
        %v303 = vld [vmem:[#allocation7 + $0x38] sm:$0xff]
        %v304 = vld [vmem:[#allocation7 + $0x40] sm:$0xff]
        %v305 = vld [vmem:[#allocation7 + $0x48] sm:$0xff]
        %v306 = vld [vmem:[#allocation7 + $0x50] sm:$0xff]
        %v307 = vld [vmem:[#allocation7 + $0x58] sm:$0xff]
        %v308 = vld [vmem:[#allocation7 + $0x60] sm:$0xff]
        %v309 = vld [vmem:[#allocation7 + $0x68] sm:$0xff]
        %v310 = vld [vmem:[#allocation7 + $0x70] sm:$0xff]
        %v311 = vld [vmem:[#allocation7 + $0x78] sm:$0xff]
        %v312 = vld [vmem:[#allocation7 + $0x80] sm:$0xff]
        %v313 = vld [vmem:[#allocation7 + $0x88] sm:$0xff]
        %v314 = vld [vmem:[#allocation7 + $0x90] sm:$0xff]
        %v315 = vld [vmem:[#allocation7 + $0x98] sm:$0xff]
        %v316 = vld [vmem:[#allocation7 + $0xa0] sm:$0xff]
        %v317 = vld [vmem:[#allocation7 + $0xa8] sm:$0xff]
        %v318 = vld [vmem:[#allocation7 + $0xb0] sm:$0xff]
        %v319 = vld [vmem:[#allocation7 + $0xb8] sm:$0xff]
        %v320 = vld [vmem:[#allocation7 + $0xc0] sm:$0xff]
        %v321 = vld [vmem:[#allocation7 + $0xc8] sm:$0xff]
        %v322 = vld [vmem:[#allocation7 + $0xd0] sm:$0xff]
        %v323 = vld [vmem:[#allocation7 + $0xd8] sm:$0xff]
        %v324 = vld [vmem:[#allocation7 + $0xe0] sm:$0xff]
        %v325 = vld [vmem:[#allocation7 + $0xe8] sm:$0xff]
        %v326 = vld [vmem:[#allocation7 + $0xf0] sm:$0xff]
        %v327 = vld [vmem:[#allocation7 + $0xf8] sm:$0xff]
        %v328 = vstv %s295
        %v329 = vmul.f32 %v328, %v296
        %v330 = vmul.f32 %v328, %v297
        %v331 = vmul.f32 %v328, %v298
        %v332 = vmul.f32 %v328, %v299
        %v333 = vmul.f32 %v328, %v300
        %v334 = vmul.f32 %v328, %v301
        %v335 = vmul.f32 %v328, %v302
        %v336 = vmul.f32 %v328, %v303
        %v337 = vmul.f32 %v328, %v304
        %v338 = vmul.f32 %v328, %v305
        %v339 = vmul.f32 %v328, %v306
        %v340 = vmul.f32 %v328, %v307
        %v341 = vmul.f32 %v328, %v308
        %v342 = vmul.f32 %v328, %v309
        %v343 = vmul.f32 %v328, %v310
        %v344 = vmul.f32 %v328, %v311
        %v345 = vmul.f32 %v328, %v312
        %v346 = vmul.f32 %v328, %v313
        %v347 = vmul.f32 %v328, %v314
        %v348 = vmul.f32 %v328, %v315
        %v349 = vmul.f32 %v328, %v316
        %v350 = vmul.f32 %v328, %v317
        %v351 = vmul.f32 %v328, %v318
        %v352 = vmul.f32 %v328, %v319
        %v353 = vmul.f32 %v328, %v320
        %v354 = vmul.f32 %v328, %v321
        %v355 = vmul.f32 %v328, %v322
        %v356 = vmul.f32 %v328, %v323
        %v357 = vmul.f32 %v328, %v324
        %v358 = vmul.f32 %v328, %v325
        %v359 = vmul.f32 %v328, %v326
        %v360 = vmul.f32 %v328, %v327
        %v361 = vadd.f32 %v262, %v329
        %v362 = vadd.f32 %v263, %v330
        %v363 = vadd.f32 %v264, %v331
        %v364 = vadd.f32 %v265, %v332
        %v365 = vadd.f32 %v266, %v333
        %v366 = vadd.f32 %v267, %v334
        %v367 = vadd.f32 %v268, %v335
        %v368 = vadd.f32 %v269, %v336
        %v369 = vadd.f32 %v270, %v337
        %v370 = vadd.f32 %v271, %v338
        %v371 = vadd.f32 %v272, %v339
        %v372 = vadd.f32 %v273, %v340
        %v373 = vadd.f32 %v274, %v341
        %v374 = vadd.f32 %v275, %v342
        %v375 = vadd.f32 %v276, %v343
        %v376 = vadd.f32 %v277, %v344
        %v377 = vadd.f32 %v278, %v345
        %v378 = vadd.f32 %v279, %v346
        %v379 = vadd.f32 %v280, %v347
        %v380 = vadd.f32 %v281, %v348
        %v381 = vadd.f32 %v282, %v349
        %v382 = vadd.f32 %v283, %v350
        %v383 = vadd.f32 %v284, %v351
        %v384 = vadd.f32 %v285, %v352
        %v385 = vadd.f32 %v286, %v353
        %v386 = vadd.f32 %v287, %v354
        %v387 = vadd.f32 %v288, %v355
        %v388 = vadd.f32 %v289, %v356
        %v389 = vadd.f32 %v290, %v357
        %v390 = vadd.f32 %v291, %v358
        %v391 = vadd.f32 %v292, %v359
        %v392 = vadd.f32 %v293, %v360
        %s393 = sadd.s32 %s294, 1
        %s394 = sld [smem:[#allocation4 + %s393]]
        %s395 = scalar_lea.vmem [#allocation7], 256
        %v396 = vld [vmem:[%s395] sm:$0xff]
        %v397 = vld [vmem:[%s395 + $0x8] sm:$0xff]
        %v398 = vld [vmem:[%s395 + $0x10] sm:$0xff]
        %v399 = vld [vmem:[%s395 + $0x18] sm:$0xff]
        %v400 = vld [vmem:[%s395 + $0x20] sm:$0xff]
        %v401 = vld [vmem:[%s395 + $0x28] sm:$0xff]
        %v402 = vld [vmem:[%s395 + $0x30] sm:$0xff]
        %v403 = vld [vmem:[%s395 + $0x38] sm:$0xff]
        %v404 = vld [vmem:[%s395 + $0x40] sm:$0xff]
        %v405 = vld [vmem:[%s395 + $0x48] sm:$0xff]
        %v406 = vld [vmem:[%s395 + $0x50] sm:$0xff]
        %v407 = vld [vmem:[%s395 + $0x58] sm:$0xff]
        %v408 = vld [vmem:[%s395 + $0x60] sm:$0xff]
        %v409 = vld [vmem:[%s395 + $0x68] sm:$0xff]
        %v410 = vld [vmem:[%s395 + $0x70] sm:$0xff]
        %v411 = vld [vmem:[%s395 + $0x78] sm:$0xff]
        %v412 = vld [vmem:[%s395 + $0x80] sm:$0xff]
        %v413 = vld [vmem:[%s395 + $0x88] sm:$0xff]
        %v414 = vld [vmem:[%s395 + $0x90] sm:$0xff]
        %v415 = vld [vmem:[%s395 + $0x98] sm:$0xff]
        %v416 = vld [vmem:[%s395 + $0xa0] sm:$0xff]
        %v417 = vld [vmem:[%s395 + $0xa8] sm:$0xff]
        %v418 = vld [vmem:[%s395 + $0xb0] sm:$0xff]
        %v419 = vld [vmem:[%s395 + $0xb8] sm:$0xff]
        %v420 = vld [vmem:[%s395 + $0xc0] sm:$0xff]
        %v421 = vld [vmem:[%s395 + $0xc8] sm:$0xff]
        %v422 = vld [vmem:[%s395 + $0xd0] sm:$0xff]
        %v423 = vld [vmem:[%s395 + $0xd8] sm:$0xff]
        %v424 = vld [vmem:[%s395 + $0xe0] sm:$0xff]
        %v425 = vld [vmem:[%s395 + $0xe8] sm:$0xff]
        %v426 = vld [vmem:[%s395 + $0xf0] sm:$0xff]
        %v427 = vld [vmem:[%s395 + $0xf8] sm:$0xff]
        %v428 = vstv %s394
        %v429 = vmul.f32 %v428, %v396
        %v430 = vmul.f32 %v428, %v397
        %v431 = vmul.f32 %v428, %v398
        %v432 = vmul.f32 %v428, %v399
        %v433 = vmul.f32 %v428, %v400
        %v434 = vmul.f32 %v428, %v401
        %v435 = vmul.f32 %v428, %v402
        %v436 = vmul.f32 %v428, %v403
        %v437 = vmul.f32 %v428, %v404
        %v438 = vmul.f32 %v428, %v405
        %v439 = vmul.f32 %v428, %v406
        %v440 = vmul.f32 %v428, %v407
        %v441 = vmul.f32 %v428, %v408
        %v442 = vmul.f32 %v428, %v409
        %v443 = vmul.f32 %v428, %v410
        %v444 = vmul.f32 %v428, %v411
        %v445 = vmul.f32 %v428, %v412
        %v446 = vmul.f32 %v428, %v413
        %v447 = vmul.f32 %v428, %v414
        %v448 = vmul.f32 %v428, %v415
        %v449 = vmul.f32 %v428, %v416
        %v450 = vmul.f32 %v428, %v417
        %v451 = vmul.f32 %v428, %v418
        %v452 = vmul.f32 %v428, %v419
        %v453 = vmul.f32 %v428, %v420
        %v454 = vmul.f32 %v428, %v421
        %v455 = vmul.f32 %v428, %v422
        %v456 = vmul.f32 %v428, %v423
        %v457 = vmul.f32 %v428, %v424
        %v458 = vmul.f32 %v428, %v425
        %v459 = vmul.f32 %v428, %v426
        %v460 = vmul.f32 %v428, %v427
        %v461 = vadd.f32 %v361, %v429
        %v462 = vadd.f32 %v362, %v430
        %v463 = vadd.f32 %v363, %v431
        %v464 = vadd.f32 %v364, %v432
        %v465 = vadd.f32 %v365, %v433
        %v466 = vadd.f32 %v366, %v434
        %v467 = vadd.f32 %v367, %v435
        %v468 = vadd.f32 %v368, %v436
        %v469 = vadd.f32 %v369, %v437
        %v470 = vadd.f32 %v370, %v438
        %v471 = vadd.f32 %v371, %v439
        %v472 = vadd.f32 %v372, %v440
        %v473 = vadd.f32 %v373, %v441
        %v474 = vadd.f32 %v374, %v442
        %v475 = vadd.f32 %v375, %v443
        %v476 = vadd.f32 %v376, %v444
        %v477 = vadd.f32 %v377, %v445
        %v478 = vadd.f32 %v378, %v446
        %v479 = vadd.f32 %v379, %v447
        %v480 = vadd.f32 %v380, %v448
        %v481 = vadd.f32 %v381, %v449
        %v482 = vadd.f32 %v382, %v450
        %v483 = vadd.f32 %v383, %v451
        %v484 = vadd.f32 %v384, %v452
        %v485 = vadd.f32 %v385, %v453
        %v486 = vadd.f32 %v386, %v454
        %v487 = vadd.f32 %v387, %v455
        %v488 = vadd.f32 %v388, %v456
        %v489 = vadd.f32 %v389, %v457
        %v490 = vadd.f32 %v390, %v458
        %v491 = vadd.f32 %v391, %v459
        %v492 = vadd.f32 %v392, %v460
        %s493 = sadd.s32 %s294, 2
        %s494 = sld [smem:[#allocation4 + %s493]]
        %s495 = scalar_lea.vmem [#allocation7], 512
        %v496 = vld [vmem:[%s495] sm:$0xff]
        %v497 = vld [vmem:[%s495 + $0x8] sm:$0xff]
        %v498 = vld [vmem:[%s495 + $0x10] sm:$0xff]
        %v499 = vld [vmem:[%s495 + $0x18] sm:$0xff]
        %v500 = vld [vmem:[%s495 + $0x20] sm:$0xff]
        %v501 = vld [vmem:[%s495 + $0x28] sm:$0xff]
        %v502 = vld [vmem:[%s495 + $0x30] sm:$0xff]
        %v503 = vld [vmem:[%s495 + $0x38] sm:$0xff]
        %v504 = vld [vmem:[%s495 + $0x40] sm:$0xff]
        %v505 = vld [vmem:[%s495 + $0x48] sm:$0xff]
        %v506 = vld [vmem:[%s495 + $0x50] sm:$0xff]
        %v507 = vld [vmem:[%s495 + $0x58] sm:$0xff]
        %v508 = vld [vmem:[%s495 + $0x60] sm:$0xff]
        %v509 = vld [vmem:[%s495 + $0x68] sm:$0xff]
        %v510 = vld [vmem:[%s495 + $0x70] sm:$0xff]
        %v511 = vld [vmem:[%s495 + $0x78] sm:$0xff]
        %v512 = vld [vmem:[%s495 + $0x80] sm:$0xff]
        %v513 = vld [vmem:[%s495 + $0x88] sm:$0xff]
        %v514 = vld [vmem:[%s495 + $0x90] sm:$0xff]
        %v515 = vld [vmem:[%s495 + $0x98] sm:$0xff]
        %v516 = vld [vmem:[%s495 + $0xa0] sm:$0xff]
        %v517 = vld [vmem:[%s495 + $0xa8] sm:$0xff]
        %v518 = vld [vmem:[%s495 + $0xb0] sm:$0xff]
        %v519 = vld [vmem:[%s495 + $0xb8] sm:$0xff]
        %v520 = vld [vmem:[%s495 + $0xc0] sm:$0xff]
        %v521 = vld [vmem:[%s495 + $0xc8] sm:$0xff]
        %v522 = vld [vmem:[%s495 + $0xd0] sm:$0xff]
        %v523 = vld [vmem:[%s495 + $0xd8] sm:$0xff]
        %v524 = vld [vmem:[%s495 + $0xe0] sm:$0xff]
        %v525 = vld [vmem:[%s495 + $0xe8] sm:$0xff]
        %v526 = vld [vmem:[%s495 + $0xf0] sm:$0xff]
        %v527 = vld [vmem:[%s495 + $0xf8] sm:$0xff]
        %v528 = vstv %s494
        %v529 = vmul.f32 %v528, %v496
        %v530 = vmul.f32 %v528, %v497
        %v531 = vmul.f32 %v528, %v498
        %v532 = vmul.f32 %v528, %v499
        %v533 = vmul.f32 %v528, %v500
        %v534 = vmul.f32 %v528, %v501
        %v535 = vmul.f32 %v528, %v502
        %v536 = vmul.f32 %v528, %v503
        %v537 = vmul.f32 %v528, %v504
        %v538 = vmul.f32 %v528, %v505
        %v539 = vmul.f32 %v528, %v506
        %v540 = vmul.f32 %v528, %v507
        %v541 = vmul.f32 %v528, %v508
        %v542 = vmul.f32 %v528, %v509
        %v543 = vmul.f32 %v528, %v510
        %v544 = vmul.f32 %v528, %v511
        %v545 = vmul.f32 %v528, %v512
        %v546 = vmul.f32 %v528, %v513
        %v547 = vmul.f32 %v528, %v514
        %v548 = vmul.f32 %v528, %v515
        %v549 = vmul.f32 %v528, %v516
        %v550 = vmul.f32 %v528, %v517
        %v551 = vmul.f32 %v528, %v518
        %v552 = vmul.f32 %v528, %v519
        %v553 = vmul.f32 %v528, %v520
        %v554 = vmul.f32 %v528, %v521
        %v555 = vmul.f32 %v528, %v522
        %v556 = vmul.f32 %v528, %v523
        %v557 = vmul.f32 %v528, %v524
        %v558 = vmul.f32 %v528, %v525
        %v559 = vmul.f32 %v528, %v526
        %v560 = vmul.f32 %v528, %v527
        %v561 = vadd.f32 %v461, %v529
        %v562 = vadd.f32 %v462, %v530
        %v563 = vadd.f32 %v463, %v531
        %v564 = vadd.f32 %v464, %v532
        %v565 = vadd.f32 %v465, %v533
        %v566 = vadd.f32 %v466, %v534
        %v567 = vadd.f32 %v467, %v535
        %v568 = vadd.f32 %v468, %v536
        %v569 = vadd.f32 %v469, %v537
        %v570 = vadd.f32 %v470, %v538
        %v571 = vadd.f32 %v471, %v539
        %v572 = vadd.f32 %v472, %v540
        %v573 = vadd.f32 %v473, %v541
        %v574 = vadd.f32 %v474, %v542
        %v575 = vadd.f32 %v475, %v543
        %v576 = vadd.f32 %v476, %v544
        %v577 = vadd.f32 %v477, %v545
        %v578 = vadd.f32 %v478, %v546
        %v579 = vadd.f32 %v479, %v547
        %v580 = vadd.f32 %v480, %v548
        %v581 = vadd.f32 %v481, %v549
        %v582 = vadd.f32 %v482, %v550
        %v583 = vadd.f32 %v483, %v551
        %v584 = vadd.f32 %v484, %v552
        %v585 = vadd.f32 %v485, %v553
        %v586 = vadd.f32 %v486, %v554
        %v587 = vadd.f32 %v487, %v555
        %v588 = vadd.f32 %v488, %v556
        %v589 = vadd.f32 %v489, %v557
        %v590 = vadd.f32 %v490, %v558
        %v591 = vadd.f32 %v491, %v559
        %v592 = vadd.f32 %v492, %v560
        %s593 = sadd.s32 %s294, 3
        %s594 = sld [smem:[#allocation4 + %s593]]
        %s595 = scalar_lea.vmem [#allocation7], 768
        %v596 = vld [vmem:[%s595] sm:$0xff]
        %v597 = vld [vmem:[%s595 + $0x8] sm:$0xff]
        %v598 = vld [vmem:[%s595 + $0x10] sm:$0xff]
        %v599 = vld [vmem:[%s595 + $0x18] sm:$0xff]
        %v600 = vld [vmem:[%s595 + $0x20] sm:$0xff]
        %v601 = vld [vmem:[%s595 + $0x28] sm:$0xff]
        %v602 = vld [vmem:[%s595 + $0x30] sm:$0xff]
        %v603 = vld [vmem:[%s595 + $0x38] sm:$0xff]
        %v604 = vld [vmem:[%s595 + $0x40] sm:$0xff]
        %v605 = vld [vmem:[%s595 + $0x48] sm:$0xff]
        %v606 = vld [vmem:[%s595 + $0x50] sm:$0xff]
        %v607 = vld [vmem:[%s595 + $0x58] sm:$0xff]
        %v608 = vld [vmem:[%s595 + $0x60] sm:$0xff]
        %v609 = vld [vmem:[%s595 + $0x68] sm:$0xff]
        %v610 = vld [vmem:[%s595 + $0x70] sm:$0xff]
        %v611 = vld [vmem:[%s595 + $0x78] sm:$0xff]
        %v612 = vld [vmem:[%s595 + $0x80] sm:$0xff]
        %v613 = vld [vmem:[%s595 + $0x88] sm:$0xff]
        %v614 = vld [vmem:[%s595 + $0x90] sm:$0xff]
        %v615 = vld [vmem:[%s595 + $0x98] sm:$0xff]
        %v616 = vld [vmem:[%s595 + $0xa0] sm:$0xff]
        %v617 = vld [vmem:[%s595 + $0xa8] sm:$0xff]
        %v618 = vld [vmem:[%s595 + $0xb0] sm:$0xff]
        %v619 = vld [vmem:[%s595 + $0xb8] sm:$0xff]
        %v620 = vld [vmem:[%s595 + $0xc0] sm:$0xff]
        %v621 = vld [vmem:[%s595 + $0xc8] sm:$0xff]
        %v622 = vld [vmem:[%s595 + $0xd0] sm:$0xff]
        %v623 = vld [vmem:[%s595 + $0xd8] sm:$0xff]
        %v624 = vld [vmem:[%s595 + $0xe0] sm:$0xff]
        %v625 = vld [vmem:[%s595 + $0xe8] sm:$0xff]
        %v626 = vld [vmem:[%s595 + $0xf0] sm:$0xff]
        %v627 = vld [vmem:[%s595 + $0xf8] sm:$0xff]
        %v628 = vstv %s594
        %v629 = vmul.f32 %v628, %v596
        %v630 = vmul.f32 %v628, %v597
        %v631 = vmul.f32 %v628, %v598
        %v632 = vmul.f32 %v628, %v599
        %v633 = vmul.f32 %v628, %v600
        %v634 = vmul.f32 %v628, %v601
        %v635 = vmul.f32 %v628, %v602
        %v636 = vmul.f32 %v628, %v603
        %v637 = vmul.f32 %v628, %v604
        %v638 = vmul.f32 %v628, %v605
        %v639 = vmul.f32 %v628, %v606
        %v640 = vmul.f32 %v628, %v607
        %v641 = vmul.f32 %v628, %v608
        %v642 = vmul.f32 %v628, %v609
        %v643 = vmul.f32 %v628, %v610
        %v644 = vmul.f32 %v628, %v611
        %v645 = vmul.f32 %v628, %v612
        %v646 = vmul.f32 %v628, %v613
        %v647 = vmul.f32 %v628, %v614
        %v648 = vmul.f32 %v628, %v615
        %v649 = vmul.f32 %v628, %v616
        %v650 = vmul.f32 %v628, %v617
        %v651 = vmul.f32 %v628, %v618
        %v652 = vmul.f32 %v628, %v619
        %v653 = vmul.f32 %v628, %v620
        %v654 = vmul.f32 %v628, %v621
        %v655 = vmul.f32 %v628, %v622
        %v656 = vmul.f32 %v628, %v623
        %v657 = vmul.f32 %v628, %v624
        %v658 = vmul.f32 %v628, %v625
        %v659 = vmul.f32 %v628, %v626
        %v660 = vmul.f32 %v628, %v627
        %v661 = vadd.f32 %v561, %v629
        %v662 = vadd.f32 %v562, %v630
        %v663 = vadd.f32 %v563, %v631
        %v664 = vadd.f32 %v564, %v632
        %v665 = vadd.f32 %v565, %v633
        %v666 = vadd.f32 %v566, %v634
        %v667 = vadd.f32 %v567, %v635
        %v668 = vadd.f32 %v568, %v636
        %v669 = vadd.f32 %v569, %v637
        %v670 = vadd.f32 %v570, %v638
        %v671 = vadd.f32 %v571, %v639
        %v672 = vadd.f32 %v572, %v640
        %v673 = vadd.f32 %v573, %v641
        %v674 = vadd.f32 %v574, %v642
        %v675 = vadd.f32 %v575, %v643
        %v676 = vadd.f32 %v576, %v644
        %v677 = vadd.f32 %v577, %v645
        %v678 = vadd.f32 %v578, %v646
        %v679 = vadd.f32 %v579, %v647
        %v680 = vadd.f32 %v580, %v648
        %v681 = vadd.f32 %v581, %v649
        %v682 = vadd.f32 %v582, %v650
        %v683 = vadd.f32 %v583, %v651
        %v684 = vadd.f32 %v584, %v652
        %v685 = vadd.f32 %v585, %v653
        %v686 = vadd.f32 %v586, %v654
        %v687 = vadd.f32 %v587, %v655
        %v688 = vadd.f32 %v588, %v656
        %v689 = vadd.f32 %v589, %v657
        %v690 = vadd.f32 %v590, %v658
        %v691 = vadd.f32 %v591, %v659
        %v692 = vadd.f32 %v592, %v660
        %s693 = sadd.s32 %s294, 4
        %s694 = sld [smem:[#allocation4 + %s693]]
        %s695 = scalar_lea.vmem [#allocation7], 1024
        %v696 = vld [vmem:[%s695] sm:$0xff]
        %v697 = vld [vmem:[%s695 + $0x8] sm:$0xff]
        %v698 = vld [vmem:[%s695 + $0x10] sm:$0xff]
        %v699 = vld [vmem:[%s695 + $0x18] sm:$0xff]
        %v700 = vld [vmem:[%s695 + $0x20] sm:$0xff]
        %v701 = vld [vmem:[%s695 + $0x28] sm:$0xff]
        %v702 = vld [vmem:[%s695 + $0x30] sm:$0xff]
        %v703 = vld [vmem:[%s695 + $0x38] sm:$0xff]
        %v704 = vld [vmem:[%s695 + $0x40] sm:$0xff]
        %v705 = vld [vmem:[%s695 + $0x48] sm:$0xff]
        %v706 = vld [vmem:[%s695 + $0x50] sm:$0xff]
        %v707 = vld [vmem:[%s695 + $0x58] sm:$0xff]
        %v708 = vld [vmem:[%s695 + $0x60] sm:$0xff]
        %v709 = vld [vmem:[%s695 + $0x68] sm:$0xff]
        %v710 = vld [vmem:[%s695 + $0x70] sm:$0xff]
        %v711 = vld [vmem:[%s695 + $0x78] sm:$0xff]
        %v712 = vld [vmem:[%s695 + $0x80] sm:$0xff]
        %v713 = vld [vmem:[%s695 + $0x88] sm:$0xff]
        %v714 = vld [vmem:[%s695 + $0x90] sm:$0xff]
        %v715 = vld [vmem:[%s695 + $0x98] sm:$0xff]
        %v716 = vld [vmem:[%s695 + $0xa0] sm:$0xff]
        %v717 = vld [vmem:[%s695 + $0xa8] sm:$0xff]
        %v718 = vld [vmem:[%s695 + $0xb0] sm:$0xff]
        %v719 = vld [vmem:[%s695 + $0xb8] sm:$0xff]
        %v720 = vld [vmem:[%s695 + $0xc0] sm:$0xff]
        %v721 = vld [vmem:[%s695 + $0xc8] sm:$0xff]
        %v722 = vld [vmem:[%s695 + $0xd0] sm:$0xff]
        %v723 = vld [vmem:[%s695 + $0xd8] sm:$0xff]
        %v724 = vld [vmem:[%s695 + $0xe0] sm:$0xff]
        %v725 = vld [vmem:[%s695 + $0xe8] sm:$0xff]
        %v726 = vld [vmem:[%s695 + $0xf0] sm:$0xff]
        %v727 = vld [vmem:[%s695 + $0xf8] sm:$0xff]
        %v728 = vstv %s694
        %v729 = vmul.f32 %v728, %v696
        %v730 = vmul.f32 %v728, %v697
        %v731 = vmul.f32 %v728, %v698
        %v732 = vmul.f32 %v728, %v699
        %v733 = vmul.f32 %v728, %v700
        %v734 = vmul.f32 %v728, %v701
        %v735 = vmul.f32 %v728, %v702
        %v736 = vmul.f32 %v728, %v703
        %v737 = vmul.f32 %v728, %v704
        %v738 = vmul.f32 %v728, %v705
        %v739 = vmul.f32 %v728, %v706
        %v740 = vmul.f32 %v728, %v707
        %v741 = vmul.f32 %v728, %v708
        %v742 = vmul.f32 %v728, %v709
        %v743 = vmul.f32 %v728, %v710
        %v744 = vmul.f32 %v728, %v711
        %v745 = vmul.f32 %v728, %v712
        %v746 = vmul.f32 %v728, %v713
        %v747 = vmul.f32 %v728, %v714
        %v748 = vmul.f32 %v728, %v715
        %v749 = vmul.f32 %v728, %v716
        %v750 = vmul.f32 %v728, %v717
        %v751 = vmul.f32 %v728, %v718
        %v752 = vmul.f32 %v728, %v719
        %v753 = vmul.f32 %v728, %v720
        %v754 = vmul.f32 %v728, %v721
        %v755 = vmul.f32 %v728, %v722
        %v756 = vmul.f32 %v728, %v723
        %v757 = vmul.f32 %v728, %v724
        %v758 = vmul.f32 %v728, %v725
        %v759 = vmul.f32 %v728, %v726
        %v760 = vmul.f32 %v728, %v727
        %v761 = vadd.f32 %v661, %v729
        %v762 = vadd.f32 %v662, %v730
        %v763 = vadd.f32 %v663, %v731
        %v764 = vadd.f32 %v664, %v732
        %v765 = vadd.f32 %v665, %v733
        %v766 = vadd.f32 %v666, %v734
        %v767 = vadd.f32 %v667, %v735
        %v768 = vadd.f32 %v668, %v736
        %v769 = vadd.f32 %v669, %v737
        %v770 = vadd.f32 %v670, %v738
        %v771 = vadd.f32 %v671, %v739
        %v772 = vadd.f32 %v672, %v740
        %v773 = vadd.f32 %v673, %v741
        %v774 = vadd.f32 %v674, %v742
        %v775 = vadd.f32 %v675, %v743
        %v776 = vadd.f32 %v676, %v744
        %v777 = vadd.f32 %v677, %v745
        %v778 = vadd.f32 %v678, %v746
        %v779 = vadd.f32 %v679, %v747
        %v780 = vadd.f32 %v680, %v748
        %v781 = vadd.f32 %v681, %v749
        %v782 = vadd.f32 %v682, %v750
        %v783 = vadd.f32 %v683, %v751
        %v784 = vadd.f32 %v684, %v752
        %v785 = vadd.f32 %v685, %v753
        %v786 = vadd.f32 %v686, %v754
        %v787 = vadd.f32 %v687, %v755
        %v788 = vadd.f32 %v688, %v756
        %v789 = vadd.f32 %v689, %v757
        %v790 = vadd.f32 %v690, %v758
        %v791 = vadd.f32 %v691, %v759
        %v792 = vadd.f32 %v692, %v760
        %s793 = sadd.s32 %s294, 5
        %s794 = sld [smem:[#allocation4 + %s793]]
        %s795 = scalar_lea.vmem [#allocation7], 1280
        %v796 = vld [vmem:[%s795] sm:$0xff]
        %v797 = vld [vmem:[%s795 + $0x8] sm:$0xff]
        %v798 = vld [vmem:[%s795 + $0x10] sm:$0xff]
        %v799 = vld [vmem:[%s795 + $0x18] sm:$0xff]
        %v800 = vld [vmem:[%s795 + $0x20] sm:$0xff]
        %v801 = vld [vmem:[%s795 + $0x28] sm:$0xff]
        %v802 = vld [vmem:[%s795 + $0x30] sm:$0xff]
        %v803 = vld [vmem:[%s795 + $0x38] sm:$0xff]
        %v804 = vld [vmem:[%s795 + $0x40] sm:$0xff]
        %v805 = vld [vmem:[%s795 + $0x48] sm:$0xff]
        %v806 = vld [vmem:[%s795 + $0x50] sm:$0xff]
        %v807 = vld [vmem:[%s795 + $0x58] sm:$0xff]
        %v808 = vld [vmem:[%s795 + $0x60] sm:$0xff]
        %v809 = vld [vmem:[%s795 + $0x68] sm:$0xff]
        %v810 = vld [vmem:[%s795 + $0x70] sm:$0xff]
        %v811 = vld [vmem:[%s795 + $0x78] sm:$0xff]
        %v812 = vld [vmem:[%s795 + $0x80] sm:$0xff]
        %v813 = vld [vmem:[%s795 + $0x88] sm:$0xff]
        %v814 = vld [vmem:[%s795 + $0x90] sm:$0xff]
        %v815 = vld [vmem:[%s795 + $0x98] sm:$0xff]
        %v816 = vld [vmem:[%s795 + $0xa0] sm:$0xff]
        %v817 = vld [vmem:[%s795 + $0xa8] sm:$0xff]
        %v818 = vld [vmem:[%s795 + $0xb0] sm:$0xff]
        %v819 = vld [vmem:[%s795 + $0xb8] sm:$0xff]
        %v820 = vld [vmem:[%s795 + $0xc0] sm:$0xff]
        %v821 = vld [vmem:[%s795 + $0xc8] sm:$0xff]
        %v822 = vld [vmem:[%s795 + $0xd0] sm:$0xff]
        %v823 = vld [vmem:[%s795 + $0xd8] sm:$0xff]
        %v824 = vld [vmem:[%s795 + $0xe0] sm:$0xff]
        %v825 = vld [vmem:[%s795 + $0xe8] sm:$0xff]
        %v826 = vld [vmem:[%s795 + $0xf0] sm:$0xff]
        %v827 = vld [vmem:[%s795 + $0xf8] sm:$0xff]
        %v828 = vstv %s794
        %v829 = vmul.f32 %v828, %v796
        %v830 = vmul.f32 %v828, %v797
        %v831 = vmul.f32 %v828, %v798
        %v832 = vmul.f32 %v828, %v799
        %v833 = vmul.f32 %v828, %v800
        %v834 = vmul.f32 %v828, %v801
        %v835 = vmul.f32 %v828, %v802
        %v836 = vmul.f32 %v828, %v803
        %v837 = vmul.f32 %v828, %v804
        %v838 = vmul.f32 %v828, %v805
        %v839 = vmul.f32 %v828, %v806
        %v840 = vmul.f32 %v828, %v807
        %v841 = vmul.f32 %v828, %v808
        %v842 = vmul.f32 %v828, %v809
        %v843 = vmul.f32 %v828, %v810
        %v844 = vmul.f32 %v828, %v811
        %v845 = vmul.f32 %v828, %v812
        %v846 = vmul.f32 %v828, %v813
        %v847 = vmul.f32 %v828, %v814
        %v848 = vmul.f32 %v828, %v815
        %v849 = vmul.f32 %v828, %v816
        %v850 = vmul.f32 %v828, %v817
        %v851 = vmul.f32 %v828, %v818
        %v852 = vmul.f32 %v828, %v819
        %v853 = vmul.f32 %v828, %v820
        %v854 = vmul.f32 %v828, %v821
        %v855 = vmul.f32 %v828, %v822
        %v856 = vmul.f32 %v828, %v823
        %v857 = vmul.f32 %v828, %v824
        %v858 = vmul.f32 %v828, %v825
        %v859 = vmul.f32 %v828, %v826
        %v860 = vmul.f32 %v828, %v827
        %v861 = vadd.f32 %v761, %v829
        %v862 = vadd.f32 %v762, %v830
        %v863 = vadd.f32 %v763, %v831
        %v864 = vadd.f32 %v764, %v832
        %v865 = vadd.f32 %v765, %v833
        %v866 = vadd.f32 %v766, %v834
        %v867 = vadd.f32 %v767, %v835
        %v868 = vadd.f32 %v768, %v836
        %v869 = vadd.f32 %v769, %v837
        %v870 = vadd.f32 %v770, %v838
        %v871 = vadd.f32 %v771, %v839
        %v872 = vadd.f32 %v772, %v840
        %v873 = vadd.f32 %v773, %v841
        %v874 = vadd.f32 %v774, %v842
        %v875 = vadd.f32 %v775, %v843
        %v876 = vadd.f32 %v776, %v844
        %v877 = vadd.f32 %v777, %v845
        %v878 = vadd.f32 %v778, %v846
        %v879 = vadd.f32 %v779, %v847
        %v880 = vadd.f32 %v780, %v848
        %v881 = vadd.f32 %v781, %v849
        %v882 = vadd.f32 %v782, %v850
        %v883 = vadd.f32 %v783, %v851
        %v884 = vadd.f32 %v784, %v852
        %v885 = vadd.f32 %v785, %v853
        %v886 = vadd.f32 %v786, %v854
        %v887 = vadd.f32 %v787, %v855
        %v888 = vadd.f32 %v788, %v856
        %v889 = vadd.f32 %v789, %v857
        %v890 = vadd.f32 %v790, %v858
        %v891 = vadd.f32 %v791, %v859
        %v892 = vadd.f32 %v792, %v860
        %s893 = sadd.s32 %s294, 6
        %s894 = sld [smem:[#allocation4 + %s893]]
        %s895 = scalar_lea.vmem [#allocation7], 1536
        %v896 = vld [vmem:[%s895] sm:$0xff]
        %v897 = vld [vmem:[%s895 + $0x8] sm:$0xff]
        %v898 = vld [vmem:[%s895 + $0x10] sm:$0xff]
        %v899 = vld [vmem:[%s895 + $0x18] sm:$0xff]
        %v900 = vld [vmem:[%s895 + $0x20] sm:$0xff]
        %v901 = vld [vmem:[%s895 + $0x28] sm:$0xff]
        %v902 = vld [vmem:[%s895 + $0x30] sm:$0xff]
        %v903 = vld [vmem:[%s895 + $0x38] sm:$0xff]
        %v904 = vld [vmem:[%s895 + $0x40] sm:$0xff]
        %v905 = vld [vmem:[%s895 + $0x48] sm:$0xff]
        %v906 = vld [vmem:[%s895 + $0x50] sm:$0xff]
        %v907 = vld [vmem:[%s895 + $0x58] sm:$0xff]
        %v908 = vld [vmem:[%s895 + $0x60] sm:$0xff]
        %v909 = vld [vmem:[%s895 + $0x68] sm:$0xff]
        %v910 = vld [vmem:[%s895 + $0x70] sm:$0xff]
        %v911 = vld [vmem:[%s895 + $0x78] sm:$0xff]
        %v912 = vld [vmem:[%s895 + $0x80] sm:$0xff]
        %v913 = vld [vmem:[%s895 + $0x88] sm:$0xff]
        %v914 = vld [vmem:[%s895 + $0x90] sm:$0xff]
        %v915 = vld [vmem:[%s895 + $0x98] sm:$0xff]
        %v916 = vld [vmem:[%s895 + $0xa0] sm:$0xff]
        %v917 = vld [vmem:[%s895 + $0xa8] sm:$0xff]
        %v918 = vld [vmem:[%s895 + $0xb0] sm:$0xff]
        %v919 = vld [vmem:[%s895 + $0xb8] sm:$0xff]
        %v920 = vld [vmem:[%s895 + $0xc0] sm:$0xff]
        %v921 = vld [vmem:[%s895 + $0xc8] sm:$0xff]
        %v922 = vld [vmem:[%s895 + $0xd0] sm:$0xff]
        %v923 = vld [vmem:[%s895 + $0xd8] sm:$0xff]
        %v924 = vld [vmem:[%s895 + $0xe0] sm:$0xff]
        %v925 = vld [vmem:[%s895 + $0xe8] sm:$0xff]
        %v926 = vld [vmem:[%s895 + $0xf0] sm:$0xff]
        %v927 = vld [vmem:[%s895 + $0xf8] sm:$0xff]
        %v928 = vstv %s894
        %v929 = vmul.f32 %v928, %v896
        %v930 = vmul.f32 %v928, %v897
        %v931 = vmul.f32 %v928, %v898
        %v932 = vmul.f32 %v928, %v899
        %v933 = vmul.f32 %v928, %v900
        %v934 = vmul.f32 %v928, %v901
        %v935 = vmul.f32 %v928, %v902
        %v936 = vmul.f32 %v928, %v903
        %v937 = vmul.f32 %v928, %v904
        %v938 = vmul.f32 %v928, %v905
        %v939 = vmul.f32 %v928, %v906
        %v940 = vmul.f32 %v928, %v907
        %v941 = vmul.f32 %v928, %v908
        %v942 = vmul.f32 %v928, %v909
        %v943 = vmul.f32 %v928, %v910
        %v944 = vmul.f32 %v928, %v911
        %v945 = vmul.f32 %v928, %v912
        %v946 = vmul.f32 %v928, %v913
        %v947 = vmul.f32 %v928, %v914
        %v948 = vmul.f32 %v928, %v915
        %v949 = vmul.f32 %v928, %v916
        %v950 = vmul.f32 %v928, %v917
        %v951 = vmul.f32 %v928, %v918
        %v952 = vmul.f32 %v928, %v919
        %v953 = vmul.f32 %v928, %v920
        %v954 = vmul.f32 %v928, %v921
        %v955 = vmul.f32 %v928, %v922
        %v956 = vmul.f32 %v928, %v923
        %v957 = vmul.f32 %v928, %v924
        %v958 = vmul.f32 %v928, %v925
        %v959 = vmul.f32 %v928, %v926
        %v960 = vmul.f32 %v928, %v927
        %v961 = vadd.f32 %v861, %v929
        %v962 = vadd.f32 %v862, %v930
        %v963 = vadd.f32 %v863, %v931
        %v964 = vadd.f32 %v864, %v932
        %v965 = vadd.f32 %v865, %v933
        %v966 = vadd.f32 %v866, %v934
        %v967 = vadd.f32 %v867, %v935
        %v968 = vadd.f32 %v868, %v936
        %v969 = vadd.f32 %v869, %v937
        %v970 = vadd.f32 %v870, %v938
        %v971 = vadd.f32 %v871, %v939
        %v972 = vadd.f32 %v872, %v940
        %v973 = vadd.f32 %v873, %v941
        %v974 = vadd.f32 %v874, %v942
        %v975 = vadd.f32 %v875, %v943
        %v976 = vadd.f32 %v876, %v944
        %v977 = vadd.f32 %v877, %v945
        %v978 = vadd.f32 %v878, %v946
        %v979 = vadd.f32 %v879, %v947
        %v980 = vadd.f32 %v880, %v948
        %v981 = vadd.f32 %v881, %v949
        %v982 = vadd.f32 %v882, %v950
        %v983 = vadd.f32 %v883, %v951
        %v984 = vadd.f32 %v884, %v952
        %v985 = vadd.f32 %v885, %v953
        %v986 = vadd.f32 %v886, %v954
        %v987 = vadd.f32 %v887, %v955
        %v988 = vadd.f32 %v888, %v956
        %v989 = vadd.f32 %v889, %v957
        %v990 = vadd.f32 %v890, %v958
        %v991 = vadd.f32 %v891, %v959
        %v992 = vadd.f32 %v892, %v960
        %s993 = sadd.s32 %s294, 7
        %s994 = sld [smem:[#allocation4 + %s993]]
        %s995 = scalar_lea.vmem [#allocation7], 1792
        %v996 = vld [vmem:[%s995] sm:$0xff]
        %v997 = vld [vmem:[%s995 + $0x8] sm:$0xff]
        %v998 = vld [vmem:[%s995 + $0x10] sm:$0xff]
        %v999 = vld [vmem:[%s995 + $0x18] sm:$0xff]
        %v1000 = vld [vmem:[%s995 + $0x20] sm:$0xff]
        %v1001 = vld [vmem:[%s995 + $0x28] sm:$0xff]
        %v1002 = vld [vmem:[%s995 + $0x30] sm:$0xff]
        %v1003 = vld [vmem:[%s995 + $0x38] sm:$0xff]
        %v1004 = vld [vmem:[%s995 + $0x40] sm:$0xff]
        %v1005 = vld [vmem:[%s995 + $0x48] sm:$0xff]
        %v1006 = vld [vmem:[%s995 + $0x50] sm:$0xff]
        %v1007 = vld [vmem:[%s995 + $0x58] sm:$0xff]
        %v1008 = vld [vmem:[%s995 + $0x60] sm:$0xff]
        %v1009 = vld [vmem:[%s995 + $0x68] sm:$0xff]
        %v1010 = vld [vmem:[%s995 + $0x70] sm:$0xff]
        %v1011 = vld [vmem:[%s995 + $0x78] sm:$0xff]
        %v1012 = vld [vmem:[%s995 + $0x80] sm:$0xff]
        %v1013 = vld [vmem:[%s995 + $0x88] sm:$0xff]
        %v1014 = vld [vmem:[%s995 + $0x90] sm:$0xff]
        %v1015 = vld [vmem:[%s995 + $0x98] sm:$0xff]
        %v1016 = vld [vmem:[%s995 + $0xa0] sm:$0xff]
        %v1017 = vld [vmem:[%s995 + $0xa8] sm:$0xff]
        %v1018 = vld [vmem:[%s995 + $0xb0] sm:$0xff]
        %v1019 = vld [vmem:[%s995 + $0xb8] sm:$0xff]
        %v1020 = vld [vmem:[%s995 + $0xc0] sm:$0xff]
        %v1021 = vld [vmem:[%s995 + $0xc8] sm:$0xff]
        %v1022 = vld [vmem:[%s995 + $0xd0] sm:$0xff]
        %v1023 = vld [vmem:[%s995 + $0xd8] sm:$0xff]
        %v1024 = vld [vmem:[%s995 + $0xe0] sm:$0xff]
        %v1025 = vld [vmem:[%s995 + $0xe8] sm:$0xff]
        %v1026 = vld [vmem:[%s995 + $0xf0] sm:$0xff]
        %v1027 = vld [vmem:[%s995 + $0xf8] sm:$0xff]
        %v1028 = vstv %s994
        %v1029 = vmul.f32 %v1028, %v996
        %v1030 = vmul.f32 %v1028, %v997
        %v1031 = vmul.f32 %v1028, %v998
        %v1032 = vmul.f32 %v1028, %v999
        %v1033 = vmul.f32 %v1028, %v1000
        %v1034 = vmul.f32 %v1028, %v1001
        %v1035 = vmul.f32 %v1028, %v1002
        %v1036 = vmul.f32 %v1028, %v1003
        %v1037 = vmul.f32 %v1028, %v1004
        %v1038 = vmul.f32 %v1028, %v1005
        %v1039 = vmul.f32 %v1028, %v1006
        %v1040 = vmul.f32 %v1028, %v1007
        %v1041 = vmul.f32 %v1028, %v1008
        %v1042 = vmul.f32 %v1028, %v1009
        %v1043 = vmul.f32 %v1028, %v1010
        %v1044 = vmul.f32 %v1028, %v1011
        %v1045 = vmul.f32 %v1028, %v1012
        %v1046 = vmul.f32 %v1028, %v1013
        %v1047 = vmul.f32 %v1028, %v1014
        %v1048 = vmul.f32 %v1028, %v1015
        %v1049 = vmul.f32 %v1028, %v1016
        %v1050 = vmul.f32 %v1028, %v1017
        %v1051 = vmul.f32 %v1028, %v1018
        %v1052 = vmul.f32 %v1028, %v1019
        %v1053 = vmul.f32 %v1028, %v1020
        %v1054 = vmul.f32 %v1028, %v1021
        %v1055 = vmul.f32 %v1028, %v1022
        %v1056 = vmul.f32 %v1028, %v1023
        %v1057 = vmul.f32 %v1028, %v1024
        %v1058 = vmul.f32 %v1028, %v1025
        %v1059 = vmul.f32 %v1028, %v1026
        %v1060 = vmul.f32 %v1028, %v1027
        %v1061 = vadd.f32 %v961, %v1029
        %v1062 = vadd.f32 %v962, %v1030
        %v1063 = vadd.f32 %v963, %v1031
        %v1064 = vadd.f32 %v964, %v1032
        %v1065 = vadd.f32 %v965, %v1033
        %v1066 = vadd.f32 %v966, %v1034
        %v1067 = vadd.f32 %v967, %v1035
        %v1068 = vadd.f32 %v968, %v1036
        %v1069 = vadd.f32 %v969, %v1037
        %v1070 = vadd.f32 %v970, %v1038
        %v1071 = vadd.f32 %v971, %v1039
        %v1072 = vadd.f32 %v972, %v1040
        %v1073 = vadd.f32 %v973, %v1041
        %v1074 = vadd.f32 %v974, %v1042
        %v1075 = vadd.f32 %v975, %v1043
        %v1076 = vadd.f32 %v976, %v1044
        %v1077 = vadd.f32 %v977, %v1045
        %v1078 = vadd.f32 %v978, %v1046
        %v1079 = vadd.f32 %v979, %v1047
        %v1080 = vadd.f32 %v980, %v1048
        %v1081 = vadd.f32 %v981, %v1049
        %v1082 = vadd.f32 %v982, %v1050
        %v1083 = vadd.f32 %v983, %v1051
        %v1084 = vadd.f32 %v984, %v1052
        %v1085 = vadd.f32 %v985, %v1053
        %v1086 = vadd.f32 %v986, %v1054
        %v1087 = vadd.f32 %v987, %v1055
        %v1088 = vadd.f32 %v988, %v1056
        %v1089 = vadd.f32 %v989, %v1057
        %v1090 = vadd.f32 %v990, %v1058
        %v1091 = vadd.f32 %v991, %v1059
        %v1092 = vadd.f32 %v992, %v1060
        %v1093 = vmax.f32 %v1061, 0.0
        %v1094 = vmax.f32 %v1062, 0.0
        %v1095 = vmax.f32 %v1063, 0.0
        %v1096 = vmax.f32 %v1064, 0.0
        %v1097 = vmax.f32 %v1065, 0.0
        %v1098 = vmax.f32 %v1066, 0.0
        %v1099 = vmax.f32 %v1067, 0.0
        %v1100 = vmax.f32 %v1068, 0.0
        %v1101 = vmax.f32 %v1069, 0.0
        %v1102 = vmax.f32 %v1070, 0.0
        %v1103 = vmax.f32 %v1071, 0.0
        %v1104 = vmax.f32 %v1072, 0.0
        %v1105 = vmax.f32 %v1073, 0.0
        %v1106 = vmax.f32 %v1074, 0.0
        %v1107 = vmax.f32 %v1075, 0.0
        %v1108 = vmax.f32 %v1076, 0.0
        %v1109 = vmax.f32 %v1077, 0.0
        %v1110 = vmax.f32 %v1078, 0.0
        %v1111 = vmax.f32 %v1079, 0.0
        %v1112 = vmax.f32 %v1080, 0.0
        %v1113 = vmax.f32 %v1081, 0.0
        %v1114 = vmax.f32 %v1082, 0.0
        %v1115 = vmax.f32 %v1083, 0.0
        %v1116 = vmax.f32 %v1084, 0.0
        %v1117 = vmax.f32 %v1085, 0.0
        %v1118 = vmax.f32 %v1086, 0.0
        %v1119 = vmax.f32 %v1087, 0.0
        %v1120 = vmax.f32 %v1088, 0.0
        %v1121 = vmax.f32 %v1089, 0.0
        %v1122 = vmax.f32 %v1090, 0.0
        %v1123 = vmax.f32 %v1091, 0.0
        %v1124 = vmax.f32 %v1092, 0.0
        %v1125 = vld [vmem:[#allocation10] sm:$0xff]
        %v1126 = vld [vmem:[#allocation10 + $0x8] sm:$0xff]
        %vm1127 = vcmask 261120
        %v1129 = vsel %vm1127, %v1125, 0
        %v1132 = vsel %vm1127, %v1126, 0
        %1134 = vmatprep.subr.mxu0 0.0
        %1135 = vmatpush1.msra.mxu0 0.0
        %1136 = vmatprep.subr.mxu0 0.0
        %1137 = vmatpush1.msra.mxu0 0.0
        %1138 = vmatprep.subr.mxu0 0.0
        %1139 = vmatpush1.msra.mxu0 0.0
        %1140 = vmatprep.subr.mxu0 0.0
        %1141 = vmatpush1.msra.mxu0 0.0
        %1142 = vmatprep.subr.mxu0 0.0
        %1143 = vmatpush1.msra.mxu0 0.0
        %1144 = vmatprep.subr.mxu0 0.0
        %1145 = vmatpush1.msra.mxu0 0.0
        %1146 = vmatprep.subr.mxu0 0.0
        %1147 = vmatpush1.msra.mxu0 0.0
        %1148 = vmatprep.subr.mxu0 0.0
        %1149 = vmatpush1.msra.mxu0 0.0
        %1150 = vmatprep.subr.mxu0 0.0
        %1151 = vmatpush1.msra.mxu0 0.0
        %1152 = vmatprep.subr.mxu0 0.0
        %1153 = vmatpush1.msra.mxu0 0.0
        %1154 = vmatprep.subr.mxu0 0.0
        %1155 = vmatpush1.msra.mxu0 0.0
        %1156 = vmatprep.subr.mxu0 0.0
        %1157 = vmatpush1.msra.mxu0 0.0
        %1158 = vmatprep.subr.mxu0 %v1118
        %1159 = vmatpush1.msra.mxu0 %v1117
        %1160 = vmatprep.subr.mxu0 %v1110
        %1161 = vmatpush1.msra.mxu0 %v1109
        %1162 = vmatprep.subr.mxu0 %v1102
        %1163 = vmatpush1.msra.mxu0 %v1101
        %1164 = vmatprep.subr.mxu0 %v1094
        %1165 = vmatpush1.msra.mxu0 %v1093
        %1166 = vmatprep.subr.mxu0 0.0
        %1167 = vmatpush2.msra.mxu0 0.0
        %1168 = vmatprep.subr.mxu0 0.0
        %1169 = vmatpush2.msra.mxu0 0.0
        %1170 = vmatprep.subr.mxu0 0.0
        %1171 = vmatpush2.msra.mxu0 0.0
        %1172 = vmatprep.subr.mxu0 0.0
        %1173 = vmatpush2.msra.mxu0 0.0
        %1174 = vmatprep.subr.mxu0 0.0
        %1175 = vmatpush2.msra.mxu0 0.0
        %1176 = vmatprep.subr.mxu0 0.0
        %1177 = vmatpush2.msra.mxu0 0.0
        %1178 = vmatprep.subr.mxu0 0.0
        %1179 = vmatpush2.msra.mxu0 0.0
        %1180 = vmatprep.subr.mxu0 0.0
        %1181 = vmatpush2.msra.mxu0 0.0
        %1182 = vmatprep.subr.mxu0 0.0
        %1183 = vmatpush2.msra.mxu0 0.0
        %1184 = vmatprep.subr.mxu0 0.0
        %1185 = vmatpush2.msra.mxu0 0.0
        %1186 = vmatprep.subr.mxu0 0.0
        %1187 = vmatpush2.msra.mxu0 0.0
        %1188 = vmatprep.subr.mxu0 0.0
        %1189 = vmatpush2.msra.mxu0 0.0
        %1190 = vmatprep.subr.mxu0 0.0
        %1191 = vmatpush2.msra.mxu0 0.0
        %1192 = vmatprep.subr.mxu0 0.0
        %1193 = vmatpush2.msra.mxu0 0.0
        %1194 = vmatprep.subr.mxu0 0.0
        %1195 = vmatpush2.msra.mxu0 0.0
        %1196 = vmatprep.subr.mxu0 0.0
        %1197 = vmatpush2.msra.mxu0 0.0
        %1198 = vmatprep.mubr.f32.mxu0 0.0
        %1199 = vmatmul.mubr.f32.gmra.mxu0 %v1129
        %v1200 = vpop.f32.mrf.mxu0
        %v1201 = vadd.f32 0.0, %v1200
        %v1202 = vpop.f32.mrf.mxu0
        %v1203 = vadd.f32 0.0, %v1202
        %1204 = vmatprep.mubr.f32.mxu0 0.0
        %1205 = vmatmul.mubr.f32.gmra.mxu0 %v1132
        %v1206 = vpop.f32.mrf.mxu0
        %v1207 = vadd.f32 0.0, %v1206
        %v1208 = vpop.f32.mrf.mxu0
        %v1209 = vadd.f32 0.0, %v1208
        %1210 = vdwg.mxu0
        %1211 = vmatprep.subr.mxu0 0.0
        %1212 = vmatpush1.msra.mxu0 0.0
        %1213 = vmatprep.subr.mxu0 0.0
        %1214 = vmatpush1.msra.mxu0 0.0
        %1215 = vmatprep.subr.mxu0 0.0
        %1216 = vmatpush1.msra.mxu0 0.0
        %1217 = vmatprep.subr.mxu0 0.0
        %1218 = vmatpush1.msra.mxu0 0.0
        %1219 = vmatprep.subr.mxu0 0.0
        %1220 = vmatpush1.msra.mxu0 0.0
        %1221 = vmatprep.subr.mxu0 0.0
        %1222 = vmatpush1.msra.mxu0 0.0
        %1223 = vmatprep.subr.mxu0 0.0
        %1224 = vmatpush1.msra.mxu0 0.0
        %1225 = vmatprep.subr.mxu0 0.0
        %1226 = vmatpush1.msra.mxu0 0.0
        %1227 = vmatprep.subr.mxu0 0.0
        %1228 = vmatpush1.msra.mxu0 0.0
        %1229 = vmatprep.subr.mxu0 0.0
        %1230 = vmatpush1.msra.mxu0 0.0
        %1231 = vmatprep.subr.mxu0 0.0
        %1232 = vmatpush1.msra.mxu0 0.0
        %1233 = vmatprep.subr.mxu0 0.0
        %1234 = vmatpush1.msra.mxu0 0.0
        %1235 = vmatprep.subr.mxu0 %v1120
        %1236 = vmatpush1.msra.mxu0 %v1119
        %1237 = vmatprep.subr.mxu0 %v1112
        %1238 = vmatpush1.msra.mxu0 %v1111
        %1239 = vmatprep.subr.mxu0 %v1104
        %1240 = vmatpush1.msra.mxu0 %v1103
        %1241 = vmatprep.subr.mxu0 %v1096
        %1242 = vmatpush1.msra.mxu0 %v1095
        %1243 = vmatprep.subr.mxu0 0.0
        %1244 = vmatpush2.msra.mxu0 0.0
        %1245 = vmatprep.subr.mxu0 0.0
        %1246 = vmatpush2.msra.mxu0 0.0
        %1247 = vmatprep.subr.mxu0 0.0
        %1248 = vmatpush2.msra.mxu0 0.0
        %1249 = vmatprep.subr.mxu0 0.0
        %1250 = vmatpush2.msra.mxu0 0.0
        %1251 = vmatprep.subr.mxu0 0.0
        %1252 = vmatpush2.msra.mxu0 0.0
        %1253 = vmatprep.subr.mxu0 0.0
        %1254 = vmatpush2.msra.mxu0 0.0
        %1255 = vmatprep.subr.mxu0 0.0
        %1256 = vmatpush2.msra.mxu0 0.0
        %1257 = vmatprep.subr.mxu0 0.0
        %1258 = vmatpush2.msra.mxu0 0.0
        %1259 = vmatprep.subr.mxu0 0.0
        %1260 = vmatpush2.msra.mxu0 0.0
        %1261 = vmatprep.subr.mxu0 0.0
        %1262 = vmatpush2.msra.mxu0 0.0
        %1263 = vmatprep.subr.mxu0 0.0
        %1264 = vmatpush2.msra.mxu0 0.0
        %1265 = vmatprep.subr.mxu0 0.0
        %1266 = vmatpush2.msra.mxu0 0.0
        %1267 = vmatprep.subr.mxu0 0.0
        %1268 = vmatpush2.msra.mxu0 0.0
        %1269 = vmatprep.subr.mxu0 0.0
        %1270 = vmatpush2.msra.mxu0 0.0
        %1271 = vmatprep.subr.mxu0 0.0
        %1272 = vmatpush2.msra.mxu0 0.0
        %1273 = vmatprep.subr.mxu0 0.0
        %1274 = vmatpush2.msra.mxu0 0.0
        %1275 = vmatprep.mubr.f32.mxu0 0.0
        %1276 = vmatmul.mubr.f32.gmra.mxu0 %v1129
        %v1277 = vpop.f32.mrf.mxu0
        %v1278 = vadd.f32 0.0, %v1277
        %v1279 = vpop.f32.mrf.mxu0
        %v1280 = vadd.f32 0.0, %v1279
        %1281 = vmatprep.mubr.f32.mxu0 0.0
        %1282 = vmatmul.mubr.f32.gmra.mxu0 %v1132
        %v1283 = vpop.f32.mrf.mxu0
        %v1284 = vadd.f32 0.0, %v1283
        %v1285 = vpop.f32.mrf.mxu0
        %v1286 = vadd.f32 0.0, %v1285
        %1287 = vdwg.mxu0
        %1288 = vmatprep.subr.mxu0 0.0
        %1289 = vmatpush1.msra.mxu0 0.0
        %1290 = vmatprep.subr.mxu0 0.0
        %1291 = vmatpush1.msra.mxu0 0.0
        %1292 = vmatprep.subr.mxu0 0.0
        %1293 = vmatpush1.msra.mxu0 0.0
        %1294 = vmatprep.subr.mxu0 0.0
        %1295 = vmatpush1.msra.mxu0 0.0
        %1296 = vmatprep.subr.mxu0 0.0
        %1297 = vmatpush1.msra.mxu0 0.0
        %1298 = vmatprep.subr.mxu0 0.0
        %1299 = vmatpush1.msra.mxu0 0.0
        %1300 = vmatprep.subr.mxu0 0.0
        %1301 = vmatpush1.msra.mxu0 0.0
        %1302 = vmatprep.subr.mxu0 0.0
        %1303 = vmatpush1.msra.mxu0 0.0
        %1304 = vmatprep.subr.mxu0 0.0
        %1305 = vmatpush1.msra.mxu0 0.0
        %1306 = vmatprep.subr.mxu0 0.0
        %1307 = vmatpush1.msra.mxu0 0.0
        %1308 = vmatprep.subr.mxu0 0.0
        %1309 = vmatpush1.msra.mxu0 0.0
        %1310 = vmatprep.subr.mxu0 0.0
        %1311 = vmatpush1.msra.mxu0 0.0
        %1312 = vmatprep.subr.mxu0 %v1122
        %1313 = vmatpush1.msra.mxu0 %v1121
        %1314 = vmatprep.subr.mxu0 %v1114
        %1315 = vmatpush1.msra.mxu0 %v1113
        %1316 = vmatprep.subr.mxu0 %v1106
        %1317 = vmatpush1.msra.mxu0 %v1105
        %1318 = vmatprep.subr.mxu0 %v1098
        %1319 = vmatpush1.msra.mxu0 %v1097
        %1320 = vmatprep.subr.mxu0 0.0
        %1321 = vmatpush2.msra.mxu0 0.0
        %1322 = vmatprep.subr.mxu0 0.0
        %1323 = vmatpush2.msra.mxu0 0.0
        %1324 = vmatprep.subr.mxu0 0.0
        %1325 = vmatpush2.msra.mxu0 0.0
        %1326 = vmatprep.subr.mxu0 0.0
        %1327 = vmatpush2.msra.mxu0 0.0
        %1328 = vmatprep.subr.mxu0 0.0
        %1329 = vmatpush2.msra.mxu0 0.0
        %1330 = vmatprep.subr.mxu0 0.0
        %1331 = vmatpush2.msra.mxu0 0.0
        %1332 = vmatprep.subr.mxu0 0.0
        %1333 = vmatpush2.msra.mxu0 0.0
        %1334 = vmatprep.subr.mxu0 0.0
        %1335 = vmatpush2.msra.mxu0 0.0
        %1336 = vmatprep.subr.mxu0 0.0
        %1337 = vmatpush2.msra.mxu0 0.0
        %1338 = vmatprep.subr.mxu0 0.0
        %1339 = vmatpush2.msra.mxu0 0.0
        %1340 = vmatprep.subr.mxu0 0.0
        %1341 = vmatpush2.msra.mxu0 0.0
        %1342 = vmatprep.subr.mxu0 0.0
        %1343 = vmatpush2.msra.mxu0 0.0
        %1344 = vmatprep.subr.mxu0 0.0
        %1345 = vmatpush2.msra.mxu0 0.0
        %1346 = vmatprep.subr.mxu0 0.0
        %1347 = vmatpush2.msra.mxu0 0.0
        %1348 = vmatprep.subr.mxu0 0.0
        %1349 = vmatpush2.msra.mxu0 0.0
        %1350 = vmatprep.subr.mxu0 0.0
        %1351 = vmatpush2.msra.mxu0 0.0
        %1352 = vmatprep.mubr.f32.mxu0 0.0
        %1353 = vmatmul.mubr.f32.gmra.mxu0 %v1129
        %v1354 = vpop.f32.mrf.mxu0
        %v1355 = vadd.f32 0.0, %v1354
        %v1356 = vpop.f32.mrf.mxu0
        %v1357 = vadd.f32 0.0, %v1356
        %1358 = vmatprep.mubr.f32.mxu0 0.0
        %1359 = vmatmul.mubr.f32.gmra.mxu0 %v1132
        %v1360 = vpop.f32.mrf.mxu0
        %v1361 = vadd.f32 0.0, %v1360
        %v1362 = vpop.f32.mrf.mxu0
        %v1363 = vadd.f32 0.0, %v1362
        %1364 = vdwg.mxu0
        %1365 = vmatprep.subr.mxu0 0.0
        %1366 = vmatpush1.msra.mxu0 0.0
        %1367 = vmatprep.subr.mxu0 0.0
        %1368 = vmatpush1.msra.mxu0 0.0
        %1369 = vmatprep.subr.mxu0 0.0
        %1370 = vmatpush1.msra.mxu0 0.0
        %1371 = vmatprep.subr.mxu0 0.0
        %1372 = vmatpush1.msra.mxu0 0.0
        %1373 = vmatprep.subr.mxu0 0.0
        %1374 = vmatpush1.msra.mxu0 0.0
        %1375 = vmatprep.subr.mxu0 0.0
        %1376 = vmatpush1.msra.mxu0 0.0
        %1377 = vmatprep.subr.mxu0 0.0
        %1378 = vmatpush1.msra.mxu0 0.0
        %1379 = vmatprep.subr.mxu0 0.0
        %1380 = vmatpush1.msra.mxu0 0.0
        %1381 = vmatprep.subr.mxu0 0.0
        %1382 = vmatpush1.msra.mxu0 0.0
        %1383 = vmatprep.subr.mxu0 0.0
        %1384 = vmatpush1.msra.mxu0 0.0
        %1385 = vmatprep.subr.mxu0 0.0
        %1386 = vmatpush1.msra.mxu0 0.0
        %1387 = vmatprep.subr.mxu0 0.0
        %1388 = vmatpush1.msra.mxu0 0.0
        %1389 = vmatprep.subr.mxu0 %v1124
        %1390 = vmatpush1.msra.mxu0 %v1123
        %1391 = vmatprep.subr.mxu0 %v1116
        %1392 = vmatpush1.msra.mxu0 %v1115
        %1393 = vmatprep.subr.mxu0 %v1108
        %1394 = vmatpush1.msra.mxu0 %v1107
        %1395 = vmatprep.subr.mxu0 %v1100
        %1396 = vmatpush1.msra.mxu0 %v1099
        %1397 = vmatprep.subr.mxu0 0.0
        %1398 = vmatpush2.msra.mxu0 0.0
        %1399 = vmatprep.subr.mxu0 0.0
        %1400 = vmatpush2.msra.mxu0 0.0
        %1401 = vmatprep.subr.mxu0 0.0
        %1402 = vmatpush2.msra.mxu0 0.0
        %1403 = vmatprep.subr.mxu0 0.0
        %1404 = vmatpush2.msra.mxu0 0.0
        %1405 = vmatprep.subr.mxu0 0.0
        %1406 = vmatpush2.msra.mxu0 0.0
        %1407 = vmatprep.subr.mxu0 0.0
        %1408 = vmatpush2.msra.mxu0 0.0
        %1409 = vmatprep.subr.mxu0 0.0
        %1410 = vmatpush2.msra.mxu0 0.0
        %1411 = vmatprep.subr.mxu0 0.0
        %1412 = vmatpush2.msra.mxu0 0.0
        %1413 = vmatprep.subr.mxu0 0.0
        %1414 = vmatpush2.msra.mxu0 0.0
        %1415 = vmatprep.subr.mxu0 0.0
        %1416 = vmatpush2.msra.mxu0 0.0
        %1417 = vmatprep.subr.mxu0 0.0
        %1418 = vmatpush2.msra.mxu0 0.0
        %1419 = vmatprep.subr.mxu0 0.0
        %1420 = vmatpush2.msra.mxu0 0.0
        %1421 = vmatprep.subr.mxu0 0.0
        %1422 = vmatpush2.msra.mxu0 0.0
        %1423 = vmatprep.subr.mxu0 0.0
        %1424 = vmatpush2.msra.mxu0 0.0
        %1425 = vmatprep.subr.mxu0 0.0
        %1426 = vmatpush2.msra.mxu0 0.0
        %1427 = vmatprep.subr.mxu0 0.0
        %1428 = vmatpush2.msra.mxu0 0.0
        %1429 = vmatprep.mubr.f32.mxu0 0.0
        %1430 = vmatmul.mubr.f32.gmra.mxu0 %v1129
        %v1431 = vpop.f32.mrf.mxu0
        %v1432 = vadd.f32 0.0, %v1431
        %v1433 = vpop.f32.mrf.mxu0
        %v1434 = vadd.f32 0.0, %v1433
        %1435 = vmatprep.mubr.f32.mxu0 0.0
        %1436 = vmatmul.mubr.f32.gmra.mxu0 %v1132
        %v1437 = vpop.f32.mrf.mxu0
        %v1438 = vadd.f32 0.0, %v1437
        %v1439 = vpop.f32.mrf.mxu0
        %v1440 = vadd.f32 0.0, %v1439
        %1441 = vdwg.mxu0
        %1442 = vst [vmem:[#allocation2] sm:$0xff] 0.0
        %1443 = vst [vmem:[#allocation2 + $0x50] sm:$0xff] 0.0
        %1444 = vst [vmem:[#allocation2 + $0x48] sm:$0xff] 0.0
        %1445 = vst [vmem:[#allocation2 + $0x98] sm:$0xff] 0.0
        %1446 = vst [vmem:[#allocation2 + $0x8] sm:$0xff] %v1201
        %1447 = vst [vmem:[#allocation2 + $0x10] sm:$0xff] %v1203
        %1448 = vst [vmem:[#allocation2 + $0x18] sm:$0xff] %v1278
        %1449 = vst [vmem:[#allocation2 + $0x20] sm:$0xff] %v1280
        %1450 = vst [vmem:[#allocation2 + $0x28] sm:$0xff] %v1355
        %1451 = vst [vmem:[#allocation2 + $0x30] sm:$0xff] %v1357
        %1452 = vst [vmem:[#allocation2 + $0x38] sm:$0xff] %v1432
        %1453 = vst [vmem:[#allocation2 + $0x40] sm:$0xff] %v1434
        %1454 = vst [vmem:[#allocation2 + $0x58] sm:$0xff] %v1207
        %1455 = vst [vmem:[#allocation2 + $0x60] sm:$0xff] %v1209
        %1456 = vst [vmem:[#allocation2 + $0x68] sm:$0xff] %v1284
        %1457 = vst [vmem:[#allocation2 + $0x70] sm:$0xff] %v1286
        %1458 = vst [vmem:[#allocation2 + $0x78] sm:$0xff] %v1361
        %1459 = vst [vmem:[#allocation2 + $0x80] sm:$0xff] %v1363
        %1460 = vst [vmem:[#allocation2 + $0x88] sm:$0xff] %v1438
        %1461 = vst [vmem:[#allocation2 + $0x90] sm:$0xff] %v1440
        %v1462 = vlaneseq
        %v1463 = vand.u32 %v1462, 127
        %v1464 = vadd.s32 %v1463, 128
        %v1465 = vadd.s32 %v1463, 256
        %v1466 = vadd.s32 %v1463, 384
        %v1467 = vadd.s32 %v1463, 512
        %v1468 = vadd.s32 %v1463, 640
        %v1469 = vadd.s32 %v1463, 768
        %v1470 = vadd.s32 %v1463, 896
        %v1471 = vand.u32 %v1463, 31
        %v1472 = vand.u32 %v1464, 31
        %v1473 = vand.u32 %v1465, 31
        %v1474 = vand.u32 %v1466, 31
        %v1475 = vand.u32 %v1467, 31
        %v1476 = vand.u32 %v1468, 31
        %v1477 = vand.u32 %v1469, 31
        %v1478 = vand.u32 %v1470, 31
        %vm1479 = vcmp.ge.s32.totalorder %v1471, 1
        %vm1480 = vcmp.ge.s32.totalorder %v1472, 1
        %vm1481 = vcmp.ge.s32.totalorder %v1473, 1
        %vm1482 = vcmp.ge.s32.totalorder %v1474, 1
        %vm1483 = vcmp.ge.s32.totalorder %v1475, 1
        %vm1484 = vcmp.ge.s32.totalorder %v1476, 1
        %vm1485 = vcmp.ge.s32.totalorder %v1477, 1
        %vm1486 = vcmp.ge.s32.totalorder %v1478, 1
        %vm1487 = vcmp.le.s32.totalorder %v1471, 30
        %vm1488 = vcmp.le.s32.totalorder %v1472, 30
        %vm1489 = vcmp.le.s32.totalorder %v1473, 30
        %vm1490 = vcmp.le.s32.totalorder %v1474, 30
        %vm1491 = vcmp.le.s32.totalorder %v1475, 30
        %vm1492 = vcmp.le.s32.totalorder %v1476, 30
        %vm1493 = vcmp.le.s32.totalorder %v1477, 30
        %vm1494 = vcmp.le.s32.totalorder %v1478, 30
        %s1495 = sld [smem:[#allocation3]]
        %s1496 = scalar_lea.vmem [#allocation2], 13
        %v1497 = vld [vmem:[%s1496] ss:$8 sm:$0xf]
        %v1498 = vld [vmem:[%s1496] ss:$8 sm:$0xf0]
        %v1499 = vor.u32 %v1497, %v1498
        %v1500 = vadd.f32 %v1499, 0.0
        %s1501 = scalar_lea.vmem [#allocation2], 85
        %v1502 = vld [vmem:[%s1501] ss:$8 sm:$0xf]
        %v1503 = vld [vmem:[%s1501] ss:$8 sm:$0xf0]
        %v1504 = vor.u32 %v1502, %v1503
        %s1505 = scalar_lea.vmem [#allocation2], 149
        %v1506 = vld [vmem:[%s1505] ss:$8 sm:$0x1]
        %1509 = vrot.lane.b32.xlu0 %v1504, 32
        %v1510 = vpop.permute.xlu0 %1509
        %1511 = vrot.lane.b32.xlu0 %v1506, 32
        %v1512 = vpop.permute.xlu0 %1511
        %v1513 = vrot.slane %v1510, 1
        %v1514 = vrot.slane %v1512, 1
        %vm1515 = vcmask 1046528
        %v1516 = vsel %vm1515, %v1513, %v1514
        %v1517 = vsel %vm1127, %v1510, %v1516
        %v1519 = vadd.f32 %v1500, %v1517
        %s1520 = scalar_lea.vmem [#allocation2], 7
        %v1521 = vld [vmem:[%s1520] ss:$8 sm:$0xf]
        %v1522 = vld [vmem:[%s1520] ss:$8 sm:$0xf0]
        %v1523 = vor.u32 %v1521, %v1522
        %s1524 = scalar_lea.vmem [#allocation2], 71
        %v1525 = vld [vmem:[%s1524] ss:$8 sm:$0x1]
        %v1528 = vlaneseq
        %v1529 = vshrl.u32 %v1528, 7
        %v1530 = vsub.s32 0, %v1529
        %v1531 = vrot.slane %v1523, %v1530
        %v1532 = vlaneseq
        %v1533 = vshrl.u32 %v1532, 7
        %v1534 = vsub.s32 1, %v1533
        %v1535 = vrot.slane %v1523, %v1534
        %v1536 = vlaneseq
        %v1537 = vshrl.u32 %v1536, 7
        %v1538 = vsub.s32 2, %v1537
        %v1539 = vrot.slane %v1523, %v1538
        %v1540 = vlaneseq
        %v1541 = vshrl.u32 %v1540, 7
        %v1542 = vsub.s32 3, %v1541
        %v1543 = vrot.slane %v1523, %v1542
        %v1544 = vlaneseq
        %v1545 = vshrl.u32 %v1544, 7
        %v1546 = vsub.s32 4, %v1545
        %v1547 = vrot.slane %v1523, %v1546
        %v1548 = vlaneseq
        %v1549 = vshrl.u32 %v1548, 7
        %v1550 = vsub.s32 5, %v1549
        %v1551 = vrot.slane %v1523, %v1550
        %v1552 = vlaneseq
        %v1553 = vshrl.u32 %v1552, 7
        %v1554 = vsub.s32 6, %v1553
        %v1555 = vrot.slane %v1523, %v1554
        %v1556 = vlaneseq
        %v1557 = vshrl.u32 %v1556, 7
        %v1558 = vsub.s32 7, %v1557
        %v1559 = vrot.slane %v1523, %v1558
        %v1560 = vlaneseq
        %v1561 = vshrl.u32 %v1560, 7
        %v1562 = vsub.s32 0, %v1561
        %v1563 = vrot.slane %v1525, %v1562
        %1564 = vrot.lane.b32.xlu0 %v1531, 1
        %v1565 = vpop.permute.xlu0 %1564
        %1566 = vrot.lane.b32.xlu0 %v1535, 1
        %v1567 = vpop.permute.xlu0 %1566
        %1568 = vrot.lane.b32.xlu0 %v1539, 1
        %v1569 = vpop.permute.xlu0 %1568
        %1570 = vrot.lane.b32.xlu0 %v1543, 1
        %v1571 = vpop.permute.xlu0 %1570
        %1572 = vrot.lane.b32.xlu0 %v1547, 1
        %v1573 = vpop.permute.xlu0 %1572
        %1574 = vrot.lane.b32.xlu0 %v1551, 1
        %v1575 = vpop.permute.xlu0 %1574
        %1576 = vrot.lane.b32.xlu0 %v1555, 1
        %v1577 = vpop.permute.xlu0 %1576
        %1578 = vrot.lane.b32.xlu0 %v1559, 1
        %v1579 = vpop.permute.xlu0 %1578
        %1580 = vrot.lane.b32.xlu0 %v1563, 1
        %v1581 = vpop.permute.xlu0 %1580
        %vm1582 = vcmask 7168
        %v1583 = vsel %vm1582, %v1565, %v1567
        %v1584 = vsel %vm1582, %v1567, %v1569
        %v1585 = vsel %vm1582, %v1569, %v1571
        %v1586 = vsel %vm1582, %v1571, %v1573
        %v1587 = vsel %vm1582, %v1573, %v1575
        %v1588 = vsel %vm1582, %v1575, %v1577
        %v1589 = vsel %vm1582, %v1577, %v1579
        %v1590 = vsel %vm1582, %v1579, %v1581
        %v1599 = vsel %vm1479, %v1583, 0.0
        %v1600 = vsel %vm1480, %v1584, 0.0
        %v1601 = vsel %vm1481, %v1585, 0.0
        %v1602 = vsel %vm1482, %v1586, 0.0
        %v1603 = vsel %vm1483, %v1587, 0.0
        %v1604 = vsel %vm1484, %v1588, 0.0
        %v1605 = vsel %vm1485, %v1589, 0.0
        %v1606 = vsel %vm1486, %v1590, 0.0
        %v1615 = vcombine.low %v1599, %v1600
        %v1616 = vcombine.low %v1601, %v1602
        %v1617 = vcombine.low %v1603, %v1604
        %v1618 = vcombine.low %v1605, %v1606
        %v1620 = vunpack.c.l.s4 1966171168
        %v1621 = vunpack.c.0.s8 %v1620
        %v1622 = vlaneseq
        %v1623 = vshrl.u32 %v1622, 7
        %v1624 = vsub.s32 %v1621, %v1623
        %v1625 = vrot.slane %v1615, %v1624
        %v1627 = vunpack.c.l.s4 1966171168
        %v1628 = vunpack.c.0.s8 %v1627
        %v1629 = vlaneseq
        %v1630 = vshrl.u32 %v1629, 7
        %v1631 = vsub.s32 %v1628, %v1630
        %v1632 = vrot.slane %v1616, %v1631
        %v1634 = vunpack.c.l.s4 1966171168
        %v1635 = vunpack.c.0.s8 %v1634
        %v1636 = vlaneseq
        %v1637 = vshrl.u32 %v1636, 7
        %v1638 = vsub.s32 %v1635, %v1637
        %v1639 = vrot.slane %v1617, %v1638
        %v1641 = vunpack.c.l.s4 1966171168
        %v1642 = vunpack.c.0.s8 %v1641
        %v1643 = vlaneseq
        %v1644 = vshrl.u32 %v1643, 7
        %v1645 = vsub.s32 %v1642, %v1644
        %v1646 = vrot.slane %v1618, %v1645
        %v1647 = vcombine.low %v1625, %v1632
        %v1648 = vcombine.low %v1639, %v1646
        %v1650 = vunpack.c.l.s4 1966171168
        %v1651 = vunpack.c.0.s8 %v1650
        %v1652 = vlaneseq
        %v1653 = vshrl.u32 %v1652, 7
        %v1654 = vsub.s32 %v1651, %v1653
        %v1655 = vrot.slane %v1647, %v1654
        %v1657 = vunpack.c.l.s4 1966171168
        %v1658 = vunpack.c.0.s8 %v1657
        %v1659 = vlaneseq
        %v1660 = vshrl.u32 %v1659, 7
        %v1661 = vsub.s32 %v1658, %v1660
        %v1662 = vrot.slane %v1648, %v1661
        %v1663 = vcombine.low %v1655, %v1662
        %v1665 = vadd.f32 %v1519, %v1663
        %s1666 = scalar_lea.vmem [#allocation2], 87
        %v1667 = vld [vmem:[%s1666] ss:$8 sm:$0xf]
        %v1668 = vld [vmem:[%s1666] ss:$8 sm:$0xf0]
        %v1669 = vor.u32 %v1667, %v1668
        %s1670 = scalar_lea.vmem [#allocation2], 151
        %v1671 = vld [vmem:[%s1670] ss:$8 sm:$0x1]
        %v1674 = vlaneseq
        %v1675 = vshrl.u32 %v1674, 7
        %v1676 = vsub.s32 0, %v1675
        %v1677 = vrot.slane %v1669, %v1676
        %v1678 = vlaneseq
        %v1679 = vshrl.u32 %v1678, 7
        %v1680 = vsub.s32 1, %v1679
        %v1681 = vrot.slane %v1669, %v1680
        %v1682 = vlaneseq
        %v1683 = vshrl.u32 %v1682, 7
        %v1684 = vsub.s32 2, %v1683
        %v1685 = vrot.slane %v1669, %v1684
        %v1686 = vlaneseq
        %v1687 = vshrl.u32 %v1686, 7
        %v1688 = vsub.s32 3, %v1687
        %v1689 = vrot.slane %v1669, %v1688
        %v1690 = vlaneseq
        %v1691 = vshrl.u32 %v1690, 7
        %v1692 = vsub.s32 4, %v1691
        %v1693 = vrot.slane %v1669, %v1692
        %v1694 = vlaneseq
        %v1695 = vshrl.u32 %v1694, 7
        %v1696 = vsub.s32 5, %v1695
        %v1697 = vrot.slane %v1669, %v1696
        %v1698 = vlaneseq
        %v1699 = vshrl.u32 %v1698, 7
        %v1700 = vsub.s32 6, %v1699
        %v1701 = vrot.slane %v1669, %v1700
        %v1702 = vlaneseq
        %v1703 = vshrl.u32 %v1702, 7
        %v1704 = vsub.s32 7, %v1703
        %v1705 = vrot.slane %v1669, %v1704
        %v1706 = vlaneseq
        %v1707 = vshrl.u32 %v1706, 7
        %v1708 = vsub.s32 0, %v1707
        %v1709 = vrot.slane %v1671, %v1708
        %1710 = vrot.lane.b32.xlu0 %v1677, 33
        %v1711 = vpop.permute.xlu0 %1710
        %1712 = vrot.lane.b32.xlu0 %v1681, 33
        %v1713 = vpop.permute.xlu0 %1712
        %1714 = vrot.lane.b32.xlu0 %v1685, 33
        %v1715 = vpop.permute.xlu0 %1714
        %1716 = vrot.lane.b32.xlu0 %v1689, 33
        %v1717 = vpop.permute.xlu0 %1716
        %1718 = vrot.lane.b32.xlu0 %v1693, 33
        %v1719 = vpop.permute.xlu0 %1718
        %1720 = vrot.lane.b32.xlu0 %v1697, 33
        %v1721 = vpop.permute.xlu0 %1720
        %1722 = vrot.lane.b32.xlu0 %v1701, 33
        %v1723 = vpop.permute.xlu0 %1722
        %1724 = vrot.lane.b32.xlu0 %v1705, 33
        %v1725 = vpop.permute.xlu0 %1724
        %1726 = vrot.lane.b32.xlu0 %v1709, 33
        %v1727 = vpop.permute.xlu0 %1726
        %vm1728 = vcmask 269312
        %v1729 = vsel %vm1728, %v1711, %v1713
        %v1730 = vsel %vm1728, %v1713, %v1715
        %v1731 = vsel %vm1728, %v1715, %v1717
        %v1732 = vsel %vm1728, %v1717, %v1719
        %v1733 = vsel %vm1728, %v1719, %v1721
        %v1734 = vsel %vm1728, %v1721, %v1723
        %v1735 = vsel %vm1728, %v1723, %v1725
        %v1736 = vsel %vm1728, %v1725, %v1727
        %v1745 = vsel %vm1479, %v1729, 0.0
        %v1746 = vsel %vm1480, %v1730, 0.0
        %v1747 = vsel %vm1481, %v1731, 0.0
        %v1748 = vsel %vm1482, %v1732, 0.0
        %v1749 = vsel %vm1483, %v1733, 0.0
        %v1750 = vsel %vm1484, %v1734, 0.0
        %v1751 = vsel %vm1485, %v1735, 0.0
        %v1752 = vsel %vm1486, %v1736, 0.0
        %v1761 = vcombine.low %v1745, %v1746
        %v1762 = vcombine.low %v1747, %v1748
        %v1763 = vcombine.low %v1749, %v1750
        %v1764 = vcombine.low %v1751, %v1752
        %v1766 = vunpack.c.l.s4 1966171168
        %v1767 = vunpack.c.0.s8 %v1766
        %v1768 = vlaneseq
        %v1769 = vshrl.u32 %v1768, 7
        %v1770 = vsub.s32 %v1767, %v1769
        %v1771 = vrot.slane %v1761, %v1770
        %v1773 = vunpack.c.l.s4 1966171168
        %v1774 = vunpack.c.0.s8 %v1773
        %v1775 = vlaneseq
        %v1776 = vshrl.u32 %v1775, 7
        %v1777 = vsub.s32 %v1774, %v1776
        %v1778 = vrot.slane %v1762, %v1777
        %v1780 = vunpack.c.l.s4 1966171168
        %v1781 = vunpack.c.0.s8 %v1780
        %v1782 = vlaneseq
        %v1783 = vshrl.u32 %v1782, 7
        %v1784 = vsub.s32 %v1781, %v1783
        %v1785 = vrot.slane %v1763, %v1784
        %v1787 = vunpack.c.l.s4 1966171168
        %v1788 = vunpack.c.0.s8 %v1787
        %v1789 = vlaneseq
        %v1790 = vshrl.u32 %v1789, 7
        %v1791 = vsub.s32 %v1788, %v1790
        %v1792 = vrot.slane %v1764, %v1791
        %v1793 = vcombine.low %v1771, %v1778
        %v1794 = vcombine.low %v1785, %v1792
        %v1796 = vunpack.c.l.s4 1966171168
        %v1797 = vunpack.c.0.s8 %v1796
        %v1798 = vlaneseq
        %v1799 = vshrl.u32 %v1798, 7
        %v1800 = vsub.s32 %v1797, %v1799
        %v1801 = vrot.slane %v1793, %v1800
        %v1803 = vunpack.c.l.s4 1966171168
        %v1804 = vunpack.c.0.s8 %v1803
        %v1805 = vlaneseq
        %v1806 = vshrl.u32 %v1805, 7
        %v1807 = vsub.s32 %v1804, %v1806
        %v1808 = vrot.slane %v1794, %v1807
        %v1809 = vcombine.low %v1801, %v1808
        %v1811 = vadd.f32 %v1665, %v1809
        %v1812 = vstv %s1495
        %v1813 = vadd.f32 %v1811, %v1812
        %v1814 = vxor.u32 %v1813, 2147483648
        %v1815 = vmul.f32 %v1814, 1.442695
        %v1816 = vpow.pop %v1815
        %v1817 = vadd.f32 %v1816, 1.0
        %v1818 = vrcp.pop %v1817
        %v1819 = vmul.f32 1.0, %v1818
        %1820 = vst [vmem:[%s261] ss:$4 sm:$0xff] %v1819
        %s1821 = scalar_lea.vmem [#allocation2], 12
        %v1822 = vld [vmem:[%s1821] ss:$8 sm:$0xf]
        %v1823 = vld [vmem:[%s1821] ss:$8 sm:$0xf0]
        %v1824 = vor.u32 %v1822, %v1823
        %s1825 = scalar_lea.vmem [#allocation2], 76
        %v1826 = vld [vmem:[%s1825] ss:$8 sm:$0x1]
        %v1829 = vlaneseq
        %v1830 = vshrl.u32 %v1829, 7
        %v1831 = vsub.s32 0, %v1830
        %v1832 = vrot.slane %v1824, %v1831
        %v1833 = vlaneseq
        %v1834 = vshrl.u32 %v1833, 7
        %v1835 = vsub.s32 1, %v1834
        %v1836 = vrot.slane %v1824, %v1835
        %v1837 = vlaneseq
        %v1838 = vshrl.u32 %v1837, 7
        %v1839 = vsub.s32 2, %v1838
        %v1840 = vrot.slane %v1824, %v1839
        %v1841 = vlaneseq
        %v1842 = vshrl.u32 %v1841, 7
        %v1843 = vsub.s32 3, %v1842
        %v1844 = vrot.slane %v1824, %v1843
        %v1845 = vlaneseq
        %v1846 = vshrl.u32 %v1845, 7
        %v1847 = vsub.s32 4, %v1846
        %v1848 = vrot.slane %v1824, %v1847
        %v1849 = vlaneseq
        %v1850 = vshrl.u32 %v1849, 7
        %v1851 = vsub.s32 5, %v1850
        %v1852 = vrot.slane %v1824, %v1851
        %v1853 = vlaneseq
        %v1854 = vshrl.u32 %v1853, 7
        %v1855 = vsub.s32 6, %v1854
        %v1856 = vrot.slane %v1824, %v1855
        %v1857 = vlaneseq
        %v1858 = vshrl.u32 %v1857, 7
        %v1859 = vsub.s32 7, %v1858
        %v1860 = vrot.slane %v1824, %v1859
        %v1861 = vlaneseq
        %v1862 = vshrl.u32 %v1861, 7
        %v1863 = vsub.s32 0, %v1862
        %v1864 = vrot.slane %v1826, %v1863
        %1865 = vrot.lane.b32.xlu0 %v1832, 127
        %v1866 = vpop.permute.xlu0 %1865
        %1867 = vrot.lane.b32.xlu0 %v1836, 127
        %v1868 = vpop.permute.xlu0 %1867
        %1869 = vrot.lane.b32.xlu0 %v1840, 127
        %v1870 = vpop.permute.xlu0 %1869
        %1871 = vrot.lane.b32.xlu0 %v1844, 127
        %v1872 = vpop.permute.xlu0 %1871
        %1873 = vrot.lane.b32.xlu0 %v1848, 127
        %v1874 = vpop.permute.xlu0 %1873
        %1875 = vrot.lane.b32.xlu0 %v1852, 127
        %v1876 = vpop.permute.xlu0 %1875
        %1877 = vrot.lane.b32.xlu0 %v1856, 127
        %v1878 = vpop.permute.xlu0 %1877
        %1879 = vrot.lane.b32.xlu0 %v1860, 127
        %v1880 = vpop.permute.xlu0 %1879
        %1881 = vrot.lane.b32.xlu0 %v1864, 127
        %v1882 = vpop.permute.xlu0 %1881
        %vm1883 = vcmask 1039360
        %v1884 = vsel %vm1883, %v1866, %v1868
        %v1885 = vsel %vm1883, %v1868, %v1870
        %v1886 = vsel %vm1883, %v1870, %v1872
        %v1887 = vsel %vm1883, %v1872, %v1874
        %v1888 = vsel %vm1883, %v1874, %v1876
        %v1889 = vsel %vm1883, %v1876, %v1878
        %v1890 = vsel %vm1883, %v1878, %v1880
        %v1891 = vsel %vm1883, %v1880, %v1882
        %v1900 = vsel %vm1487, %v1884, 0.0
        %v1901 = vsel %vm1488, %v1885, 0.0
        %v1902 = vsel %vm1489, %v1886, 0.0
        %v1903 = vsel %vm1490, %v1887, 0.0
        %v1904 = vsel %vm1491, %v1888, 0.0
        %v1905 = vsel %vm1492, %v1889, 0.0
        %v1906 = vsel %vm1493, %v1890, 0.0
        %v1907 = vsel %vm1494, %v1891, 0.0
        %v1908 = vadd.f32 %v1900, 0.0
        %v1909 = vadd.f32 %v1901, 0.0
        %v1910 = vadd.f32 %v1902, 0.0
        %v1911 = vadd.f32 %v1903, 0.0
        %v1912 = vadd.f32 %v1904, 0.0
        %v1913 = vadd.f32 %v1905, 0.0
        %v1914 = vadd.f32 %v1906, 0.0
        %v1915 = vadd.f32 %v1907, 0.0
        %s1916 = scalar_lea.vmem [#allocation2], 14
        %v1917 = vld [vmem:[%s1916] ss:$8 sm:$0xf]
        %v1918 = vld [vmem:[%s1916] ss:$8 sm:$0xf0]
        %v1919 = vor.u32 %v1917, %v1918
        %v1921 = vlaneseq
        %v1922 = vshrl.u32 %v1921, 7
        %v1923 = vsub.s32 0, %v1922
        %v1924 = vrot.slane %v1919, %v1923
        %v1925 = vlaneseq
        %v1926 = vshrl.u32 %v1925, 7
        %v1927 = vsub.s32 1, %v1926
        %v1928 = vrot.slane %v1919, %v1927
        %v1929 = vlaneseq
        %v1930 = vshrl.u32 %v1929, 7
        %v1931 = vsub.s32 2, %v1930
        %v1932 = vrot.slane %v1919, %v1931
        %v1933 = vlaneseq
        %v1934 = vshrl.u32 %v1933, 7
        %v1935 = vsub.s32 3, %v1934
        %v1936 = vrot.slane %v1919, %v1935
        %v1937 = vlaneseq
        %v1938 = vshrl.u32 %v1937, 7
        %v1939 = vsub.s32 4, %v1938
        %v1940 = vrot.slane %v1919, %v1939
        %v1941 = vlaneseq
        %v1942 = vshrl.u32 %v1941, 7
        %v1943 = vsub.s32 5, %v1942
        %v1944 = vrot.slane %v1919, %v1943
        %v1945 = vlaneseq
        %v1946 = vshrl.u32 %v1945, 7
        %v1947 = vsub.s32 6, %v1946
        %v1948 = vrot.slane %v1919, %v1947
        %v1949 = vlaneseq
        %v1950 = vshrl.u32 %v1949, 7
        %v1951 = vsub.s32 7, %v1950
        %v1952 = vrot.slane %v1919, %v1951
        %v1961 = vadd.f32 %v1908, %v1924
        %v1962 = vadd.f32 %v1909, %v1928
        %v1963 = vadd.f32 %v1910, %v1932
        %v1964 = vadd.f32 %v1911, %v1936
        %v1965 = vadd.f32 %v1912, %v1940
        %v1966 = vadd.f32 %v1913, %v1944
        %v1967 = vadd.f32 %v1914, %v1948
        %v1968 = vadd.f32 %v1915, %v1952
        %s1969 = scalar_lea.vmem [#allocation2], 84
        %v1970 = vld [vmem:[%s1969] ss:$8 sm:$0xf]
        %v1971 = vld [vmem:[%s1969] ss:$8 sm:$0xf0]
        %v1972 = vor.u32 %v1970, %v1971
        %s1973 = scalar_lea.vmem [#allocation2], 148
        %v1974 = vld [vmem:[%s1973] ss:$8 sm:$0x1]
        %v1977 = vlaneseq
        %v1978 = vshrl.u32 %v1977, 7
        %v1979 = vsub.s32 0, %v1978
        %v1980 = vrot.slane %v1972, %v1979
        %v1981 = vlaneseq
        %v1982 = vshrl.u32 %v1981, 7
        %v1983 = vsub.s32 1, %v1982
        %v1984 = vrot.slane %v1972, %v1983
        %v1985 = vlaneseq
        %v1986 = vshrl.u32 %v1985, 7
        %v1987 = vsub.s32 2, %v1986
        %v1988 = vrot.slane %v1972, %v1987
        %v1989 = vlaneseq
        %v1990 = vshrl.u32 %v1989, 7
        %v1991 = vsub.s32 3, %v1990
        %v1992 = vrot.slane %v1972, %v1991
        %v1993 = vlaneseq
        %v1994 = vshrl.u32 %v1993, 7
        %v1995 = vsub.s32 4, %v1994
        %v1996 = vrot.slane %v1972, %v1995
        %v1997 = vlaneseq
        %v1998 = vshrl.u32 %v1997, 7
        %v1999 = vsub.s32 5, %v1998
        %v2000 = vrot.slane %v1972, %v1999
        %v2001 = vlaneseq
        %v2002 = vshrl.u32 %v2001, 7
        %v2003 = vsub.s32 6, %v2002
        %v2004 = vrot.slane %v1972, %v2003
        %v2005 = vlaneseq
        %v2006 = vshrl.u32 %v2005, 7
        %v2007 = vsub.s32 7, %v2006
        %v2008 = vrot.slane %v1972, %v2007
        %v2009 = vlaneseq
        %v2010 = vshrl.u32 %v2009, 7
        %v2011 = vsub.s32 0, %v2010
        %v2012 = vrot.slane %v1974, %v2011
        %2013 = vrot.lane.b32.xlu0 %v1980, 31
        %v2014 = vpop.permute.xlu0 %2013
        %2015 = vrot.lane.b32.xlu0 %v1984, 31
        %v2016 = vpop.permute.xlu0 %2015
        %2017 = vrot.lane.b32.xlu0 %v1988, 31
        %v2018 = vpop.permute.xlu0 %2017
        %2019 = vrot.lane.b32.xlu0 %v1992, 31
        %v2020 = vpop.permute.xlu0 %2019
        %2021 = vrot.lane.b32.xlu0 %v1996, 31
        %v2022 = vpop.permute.xlu0 %2021
        %2023 = vrot.lane.b32.xlu0 %v2000, 31
        %v2024 = vpop.permute.xlu0 %2023
        %2025 = vrot.lane.b32.xlu0 %v2004, 31
        %v2026 = vpop.permute.xlu0 %2025
        %2027 = vrot.lane.b32.xlu0 %v2008, 31
        %v2028 = vpop.permute.xlu0 %2027
        %2029 = vrot.lane.b32.xlu0 %v2012, 31
        %v2030 = vpop.permute.xlu0 %2029
        %vm2031 = vcmask 252928
        %v2032 = vsel %vm2031, %v2014, %v2016
        %v2033 = vsel %vm2031, %v2016, %v2018
        %v2034 = vsel %vm2031, %v2018, %v2020
        %v2035 = vsel %vm2031, %v2020, %v2022
        %v2036 = vsel %vm2031, %v2022, %v2024
        %v2037 = vsel %vm2031, %v2024, %v2026
        %v2038 = vsel %vm2031, %v2026, %v2028
        %v2039 = vsel %vm2031, %v2028, %v2030
        %v2048 = vsel %vm1487, %v2032, 0.0
        %v2049 = vsel %vm1488, %v2033, 0.0
        %v2050 = vsel %vm1489, %v2034, 0.0
        %v2051 = vsel %vm1490, %v2035, 0.0
        %v2052 = vsel %vm1491, %v2036, 0.0
        %v2053 = vsel %vm1492, %v2037, 0.0
        %v2054 = vsel %vm1493, %v2038, 0.0
        %v2055 = vsel %vm1494, %v2039, 0.0
        %v2056 = vadd.f32 %v1961, %v2048
        %v2057 = vadd.f32 %v1962, %v2049
        %v2058 = vadd.f32 %v1963, %v2050
        %v2059 = vadd.f32 %v1964, %v2051
        %v2060 = vadd.f32 %v1965, %v2052
        %v2061 = vadd.f32 %v1966, %v2053
        %v2062 = vadd.f32 %v1967, %v2054
        %v2063 = vadd.f32 %v1968, %v2055
        %s2064 = scalar_lea.vmem [#allocation2], 86
        %v2065 = vld [vmem:[%s2064] ss:$8 sm:$0xf]
        %v2066 = vld [vmem:[%s2064] ss:$8 sm:$0xf0]
        %v2067 = vor.u32 %v2065, %v2066
        %s2068 = scalar_lea.vmem [#allocation2], 150
        %v2069 = vld [vmem:[%s2068] ss:$8 sm:$0x1]
        %v2072 = vlaneseq
        %v2073 = vshrl.u32 %v2072, 7
        %v2074 = vsub.s32 0, %v2073
        %v2075 = vrot.slane %v2067, %v2074
        %v2076 = vlaneseq
        %v2077 = vshrl.u32 %v2076, 7
        %v2078 = vsub.s32 1, %v2077
        %v2079 = vrot.slane %v2067, %v2078
        %v2080 = vlaneseq
        %v2081 = vshrl.u32 %v2080, 7
        %v2082 = vsub.s32 2, %v2081
        %v2083 = vrot.slane %v2067, %v2082
        %v2084 = vlaneseq
        %v2085 = vshrl.u32 %v2084, 7
        %v2086 = vsub.s32 3, %v2085
        %v2087 = vrot.slane %v2067, %v2086
        %v2088 = vlaneseq
        %v2089 = vshrl.u32 %v2088, 7
        %v2090 = vsub.s32 4, %v2089
        %v2091 = vrot.slane %v2067, %v2090
        %v2092 = vlaneseq
        %v2093 = vshrl.u32 %v2092, 7
        %v2094 = vsub.s32 5, %v2093
        %v2095 = vrot.slane %v2067, %v2094
        %v2096 = vlaneseq
        %v2097 = vshrl.u32 %v2096, 7
        %v2098 = vsub.s32 6, %v2097
        %v2099 = vrot.slane %v2067, %v2098
        %v2100 = vlaneseq
        %v2101 = vshrl.u32 %v2100, 7
        %v2102 = vsub.s32 7, %v2101
        %v2103 = vrot.slane %v2067, %v2102
        %v2104 = vlaneseq
        %v2105 = vshrl.u32 %v2104, 7
        %v2106 = vsub.s32 0, %v2105
        %v2107 = vrot.slane %v2069, %v2106
        %2108 = vrot.lane.b32.xlu0 %v2075, 32
        %v2109 = vpop.permute.xlu0 %2108
        %2110 = vrot.lane.b32.xlu0 %v2079, 32
        %v2111 = vpop.permute.xlu0 %2110
        %2112 = vrot.lane.b32.xlu0 %v2083, 32
        %v2113 = vpop.permute.xlu0 %2112
        %2114 = vrot.lane.b32.xlu0 %v2087, 32
        %v2115 = vpop.permute.xlu0 %2114
        %2116 = vrot.lane.b32.xlu0 %v2091, 32
        %v2117 = vpop.permute.xlu0 %2116
        %2118 = vrot.lane.b32.xlu0 %v2095, 32
        %v2119 = vpop.permute.xlu0 %2118
        %2120 = vrot.lane.b32.xlu0 %v2099, 32
        %v2121 = vpop.permute.xlu0 %2120
        %2122 = vrot.lane.b32.xlu0 %v2103, 32
        %v2123 = vpop.permute.xlu0 %2122
        %2124 = vrot.lane.b32.xlu0 %v2107, 32
        %v2125 = vpop.permute.xlu0 %2124
        %v2126 = vsel %vm1127, %v2109, %v2111
        %v2127 = vsel %vm1127, %v2111, %v2113
        %v2128 = vsel %vm1127, %v2113, %v2115
        %v2129 = vsel %vm1127, %v2115, %v2117
        %v2130 = vsel %vm1127, %v2117, %v2119
        %v2131 = vsel %vm1127, %v2119, %v2121
        %v2132 = vsel %vm1127, %v2121, %v2123
        %v2133 = vsel %vm1127, %v2123, %v2125
        %v2142 = vadd.f32 %v2056, %v2126
        %v2143 = vadd.f32 %v2057, %v2127
        %v2144 = vadd.f32 %v2058, %v2128
        %v2145 = vadd.f32 %v2059, %v2129
        %v2146 = vadd.f32 %v2060, %v2130
        %v2147 = vadd.f32 %v2061, %v2131
        %v2148 = vadd.f32 %v2062, %v2132
        %v2149 = vadd.f32 %v2063, %v2133
        %v2150 = vadd.f32 %v2142, %v1812
        %v2151 = vadd.f32 %v2143, %v1812
        %v2152 = vadd.f32 %v2144, %v1812
        %v2153 = vadd.f32 %v2145, %v1812
        %v2154 = vadd.f32 %v2146, %v1812
        %v2155 = vadd.f32 %v2147, %v1812
        %v2156 = vadd.f32 %v2148, %v1812
        %v2157 = vadd.f32 %v2149, %v1812
        %v2158 = vxor.u32 %v2150, 2147483648
        %v2159 = vxor.u32 %v2151, 2147483648
        %v2160 = vxor.u32 %v2152, 2147483648
        %v2161 = vxor.u32 %v2153, 2147483648
        %v2162 = vxor.u32 %v2154, 2147483648
        %v2163 = vxor.u32 %v2155, 2147483648
        %v2164 = vxor.u32 %v2156, 2147483648
        %v2165 = vxor.u32 %v2157, 2147483648
        %v2166 = vmul.f32 %v2158, 1.442695
        %v2167 = vpow.pop %v2166
        %v2168 = vmul.f32 %v2159, 1.442695
        %v2169 = vpow.pop %v2168
        %v2170 = vmul.f32 %v2160, 1.442695
        %v2171 = vpow.pop %v2170
        %v2172 = vmul.f32 %v2161, 1.442695
        %v2173 = vpow.pop %v2172
        %v2174 = vmul.f32 %v2162, 1.442695
        %v2175 = vpow.pop %v2174
        %v2176 = vmul.f32 %v2163, 1.442695
        %v2177 = vpow.pop %v2176
        %v2178 = vmul.f32 %v2164, 1.442695
        %v2179 = vpow.pop %v2178
        %v2180 = vmul.f32 %v2165, 1.442695
        %v2181 = vpow.pop %v2180
        %v2182 = vadd.f32 %v2167, 1.0
        %v2183 = vadd.f32 %v2169, 1.0
        %v2184 = vadd.f32 %v2171, 1.0
        %v2185 = vadd.f32 %v2173, 1.0
        %v2186 = vadd.f32 %v2175, 1.0
        %v2187 = vadd.f32 %v2177, 1.0
        %v2188 = vadd.f32 %v2179, 1.0
        %v2189 = vadd.f32 %v2181, 1.0
        %v2190 = vrcp.pop %v2182
        %v2191 = vmul.f32 1.0, %v2190
        %v2192 = vrcp.pop %v2183
        %v2193 = vmul.f32 1.0, %v2192
        %v2194 = vrcp.pop %v2184
        %v2195 = vmul.f32 1.0, %v2194
        %v2196 = vrcp.pop %v2185
        %v2197 = vmul.f32 1.0, %v2196
        %v2198 = vrcp.pop %v2186
        %v2199 = vmul.f32 1.0, %v2198
        %v2200 = vrcp.pop %v2187
        %v2201 = vmul.f32 1.0, %v2200
        %v2202 = vrcp.pop %v2188
        %v2203 = vmul.f32 1.0, %v2202
        %v2204 = vrcp.pop %v2189
        %v2205 = vmul.f32 1.0, %v2204
        %v2214 = vcombine.low %v2191, %v2193
        %v2215 = vcombine.low %v2195, %v2197
        %v2216 = vcombine.low %v2199, %v2201
        %v2217 = vcombine.low %v2203, %v2205
        %v2219 = vunpack.c.l.s4 1966171168
        %v2220 = vunpack.c.0.s8 %v2219
        %v2221 = vlaneseq
        %v2222 = vshrl.u32 %v2221, 7
        %v2223 = vsub.s32 %v2220, %v2222
        %v2224 = vrot.slane %v2214, %v2223
        %v2226 = vunpack.c.l.s4 1966171168
        %v2227 = vunpack.c.0.s8 %v2226
        %v2228 = vlaneseq
        %v2229 = vshrl.u32 %v2228, 7
        %v2230 = vsub.s32 %v2227, %v2229
        %v2231 = vrot.slane %v2215, %v2230
        %v2233 = vunpack.c.l.s4 1966171168
        %v2234 = vunpack.c.0.s8 %v2233
        %v2235 = vlaneseq
        %v2236 = vshrl.u32 %v2235, 7
        %v2237 = vsub.s32 %v2234, %v2236
        %v2238 = vrot.slane %v2216, %v2237
        %v2240 = vunpack.c.l.s4 1966171168
        %v2241 = vunpack.c.0.s8 %v2240
        %v2242 = vlaneseq
        %v2243 = vshrl.u32 %v2242, 7
        %v2244 = vsub.s32 %v2241, %v2243
        %v2245 = vrot.slane %v2217, %v2244
        %v2246 = vcombine.low %v2224, %v2231
        %v2247 = vcombine.low %v2238, %v2245
        %v2249 = vunpack.c.l.s4 1966171168
        %v2250 = vunpack.c.0.s8 %v2249
        %v2251 = vlaneseq
        %v2252 = vshrl.u32 %v2251, 7
        %v2253 = vsub.s32 %v2250, %v2252
        %v2254 = vrot.slane %v2246, %v2253
        %v2256 = vunpack.c.l.s4 1966171168
        %v2257 = vunpack.c.0.s8 %v2256
        %v2258 = vlaneseq
        %v2259 = vshrl.u32 %v2258, 7
        %v2260 = vsub.s32 %v2257, %v2259
        %v2261 = vrot.slane %v2247, %v2260
        %v2262 = vcombine.low %v2254, %v2261
        %s2264 = scalar_lea.vmem %s261, 1
        %2265 = vst [vmem:[%s2264] ss:$4 sm:$0xff] %v2262
        %s2266 = scalar_lea.vmem [#allocation2], 9
        %v2267 = vld [vmem:[%s2266] ss:$8 sm:$0xf]
        %v2268 = vld [vmem:[%s2266] ss:$8 sm:$0xf0]
        %v2269 = vor.u32 %v2267, %v2268
        %s2270 = scalar_lea.vmem [#allocation2], 73
        %v2271 = vld [vmem:[%s2270] ss:$8 sm:$0x1]
        %v2272 = vadd.f32 %v2269, 0.0
        %v2273 = vadd.f32 %v2271, 0.0
        %s2274 = scalar_lea.vmem [#allocation2], 89
        %v2275 = vld [vmem:[%s2274] ss:$8 sm:$0xf]
        %v2276 = vld [vmem:[%s2274] ss:$8 sm:$0xf0]
        %v2277 = vor.u32 %v2275, %v2276
        %2279 = vrot.lane.b32.xlu0 %v2277, 32
        %v2280 = vpop.permute.xlu0 %2279
        %v2281 = vrot.slane %v2280, 7
        %v2282 = vsel %vm1127, %v2281, %v2280
        %v2285 = vadd.f32 %v2272, %v2282
        %v2286 = vadd.f32 %v2273, %v2281
        %s2287 = scalar_lea.vmem [#allocation2], 11
        %v2288 = vld [vmem:[%s2287] ss:$8 sm:$0xf]
        %v2289 = vld [vmem:[%s2287] ss:$8 sm:$0xf0]
        %v2290 = vor.u32 %v2288, %v2289
        %s2291 = scalar_lea.vmem [#allocation2], 75
        %v2292 = vld [vmem:[%s2291] ss:$8 sm:$0x1]
        %v2295 = vlaneseq
        %v2296 = vshrl.u32 %v2295, 7
        %v2297 = vsub.s32 0, %v2296
        %v2298 = vrot.slane %v2290, %v2297
        %v2299 = vlaneseq
        %v2300 = vshrl.u32 %v2299, 7
        %v2301 = vsub.s32 1, %v2300
        %v2302 = vrot.slane %v2290, %v2301
        %v2303 = vlaneseq
        %v2304 = vshrl.u32 %v2303, 7
        %v2305 = vsub.s32 2, %v2304
        %v2306 = vrot.slane %v2290, %v2305
        %v2307 = vlaneseq
        %v2308 = vshrl.u32 %v2307, 7
        %v2309 = vsub.s32 3, %v2308
        %v2310 = vrot.slane %v2290, %v2309
        %v2311 = vlaneseq
        %v2312 = vshrl.u32 %v2311, 7
        %v2313 = vsub.s32 4, %v2312
        %v2314 = vrot.slane %v2290, %v2313
        %v2315 = vlaneseq
        %v2316 = vshrl.u32 %v2315, 7
        %v2317 = vsub.s32 5, %v2316
        %v2318 = vrot.slane %v2290, %v2317
        %v2319 = vlaneseq
        %v2320 = vshrl.u32 %v2319, 7
        %v2321 = vsub.s32 6, %v2320
        %v2322 = vrot.slane %v2290, %v2321
        %v2323 = vlaneseq
        %v2324 = vshrl.u32 %v2323, 7
        %v2325 = vsub.s32 7, %v2324
        %v2326 = vrot.slane %v2290, %v2325
        %v2327 = vlaneseq
        %v2328 = vshrl.u32 %v2327, 7
        %v2329 = vsub.s32 0, %v2328
        %v2330 = vrot.slane %v2292, %v2329
        %2331 = vrot.lane.b32.xlu0 %v2298, 97
        %v2332 = vpop.permute.xlu0 %2331
        %2333 = vrot.lane.b32.xlu0 %v2302, 97
        %v2334 = vpop.permute.xlu0 %2333
        %2335 = vrot.lane.b32.xlu0 %v2306, 97
        %v2336 = vpop.permute.xlu0 %2335
        %2337 = vrot.lane.b32.xlu0 %v2310, 97
        %v2338 = vpop.permute.xlu0 %2337
        %2339 = vrot.lane.b32.xlu0 %v2314, 97
        %v2340 = vpop.permute.xlu0 %2339
        %2341 = vrot.lane.b32.xlu0 %v2318, 97
        %v2342 = vpop.permute.xlu0 %2341
        %2343 = vrot.lane.b32.xlu0 %v2322, 97
        %v2344 = vpop.permute.xlu0 %2343
        %2345 = vrot.lane.b32.xlu0 %v2326, 97
        %v2346 = vpop.permute.xlu0 %2345
        %2347 = vrot.lane.b32.xlu0 %v2330, 97
        %v2348 = vpop.permute.xlu0 %2347
        %vm2349 = vcmask 793600
        %v2350 = vsel %vm2349, %v2332, %v2334
        %v2351 = vsel %vm2349, %v2334, %v2336
        %v2352 = vsel %vm2349, %v2336, %v2338
        %v2353 = vsel %vm2349, %v2338, %v2340
        %v2354 = vsel %vm2349, %v2340, %v2342
        %v2355 = vsel %vm2349, %v2342, %v2344
        %v2356 = vsel %vm2349, %v2344, %v2346
        %v2357 = vsel %vm2349, %v2346, %v2348
        %v2366 = vsel %vm1479, %v2350, 0.0
        %v2367 = vsel %vm1480, %v2351, 0.0
        %v2368 = vsel %vm1481, %v2352, 0.0
        %v2369 = vsel %vm1482, %v2353, 0.0
        %v2370 = vsel %vm1483, %v2354, 0.0
        %v2371 = vsel %vm1484, %v2355, 0.0
        %v2372 = vsel %vm1485, %v2356, 0.0
        %v2373 = vsel %vm1486, %v2357, 0.0
        %v2382 = vcombine.low %v2366, %v2367
        %v2383 = vcombine.low %v2368, %v2369
        %v2384 = vcombine.low %v2370, %v2371
        %v2385 = vcombine.low %v2372, %v2373
        %v2387 = vunpack.c.l.s4 1966171168
        %v2388 = vunpack.c.0.s8 %v2387
        %v2389 = vlaneseq
        %v2390 = vshrl.u32 %v2389, 7
        %v2391 = vsub.s32 %v2388, %v2390
        %v2392 = vrot.slane %v2382, %v2391
        %v2394 = vunpack.c.l.s4 1966171168
        %v2395 = vunpack.c.0.s8 %v2394
        %v2396 = vlaneseq
        %v2397 = vshrl.u32 %v2396, 7
        %v2398 = vsub.s32 %v2395, %v2397
        %v2399 = vrot.slane %v2383, %v2398
        %v2401 = vunpack.c.l.s4 1966171168
        %v2402 = vunpack.c.0.s8 %v2401
        %v2403 = vlaneseq
        %v2404 = vshrl.u32 %v2403, 7
        %v2405 = vsub.s32 %v2402, %v2404
        %v2406 = vrot.slane %v2384, %v2405
        %v2408 = vunpack.c.l.s4 1966171168
        %v2409 = vunpack.c.0.s8 %v2408
        %v2410 = vlaneseq
        %v2411 = vshrl.u32 %v2410, 7
        %v2412 = vsub.s32 %v2409, %v2411
        %v2413 = vrot.slane %v2385, %v2412
        %v2414 = vcombine.low %v2392, %v2399
        %v2415 = vcombine.low %v2406, %v2413
        %v2417 = vunpack.c.l.s4 1966171168
        %v2418 = vunpack.c.0.s8 %v2417
        %v2419 = vlaneseq
        %v2420 = vshrl.u32 %v2419, 7
        %v2421 = vsub.s32 %v2418, %v2420
        %v2422 = vrot.slane %v2414, %v2421
        %v2424 = vunpack.c.l.s4 1966171168
        %v2425 = vunpack.c.0.s8 %v2424
        %v2426 = vlaneseq
        %v2427 = vshrl.u32 %v2426, 7
        %v2428 = vsub.s32 %v2425, %v2427
        %v2429 = vrot.slane %v2415, %v2428
        %v2430 = vcombine.low %v2422, %v2429
        %2431 = vrot.lane.b32.xlu0 %v2430, 32
        %v2432 = vpop.permute.xlu0 %2431
        %v2433 = vrot.slane %v2432, 7
        %v2434 = vsel %vm1127, %v2433, %v2432
        %v2437 = vadd.f32 %v2285, %v2434
        %v2438 = vadd.f32 %v2286, %v2433
        %s2439 = scalar_lea.vmem [#allocation2], 83
        %v2440 = vld [vmem:[%s2439] ss:$8 sm:$0xf]
        %v2441 = vld [vmem:[%s2439] ss:$8 sm:$0xf0]
        %v2442 = vor.u32 %v2440, %v2441
        %s2443 = scalar_lea.vmem [#allocation2], 147
        %v2444 = vld [vmem:[%s2443] ss:$8 sm:$0x1]
        %v2447 = vlaneseq
        %v2448 = vshrl.u32 %v2447, 7
        %v2449 = vsub.s32 0, %v2448
        %v2450 = vrot.slane %v2442, %v2449
        %v2451 = vlaneseq
        %v2452 = vshrl.u32 %v2451, 7
        %v2453 = vsub.s32 1, %v2452
        %v2454 = vrot.slane %v2442, %v2453
        %v2455 = vlaneseq
        %v2456 = vshrl.u32 %v2455, 7
        %v2457 = vsub.s32 2, %v2456
        %v2458 = vrot.slane %v2442, %v2457
        %v2459 = vlaneseq
        %v2460 = vshrl.u32 %v2459, 7
        %v2461 = vsub.s32 3, %v2460
        %v2462 = vrot.slane %v2442, %v2461
        %v2463 = vlaneseq
        %v2464 = vshrl.u32 %v2463, 7
        %v2465 = vsub.s32 4, %v2464
        %v2466 = vrot.slane %v2442, %v2465
        %v2467 = vlaneseq
        %v2468 = vshrl.u32 %v2467, 7
        %v2469 = vsub.s32 5, %v2468
        %v2470 = vrot.slane %v2442, %v2469
        %v2471 = vlaneseq
        %v2472 = vshrl.u32 %v2471, 7
        %v2473 = vsub.s32 6, %v2472
        %v2474 = vrot.slane %v2442, %v2473
        %v2475 = vlaneseq
        %v2476 = vshrl.u32 %v2475, 7
        %v2477 = vsub.s32 7, %v2476
        %v2478 = vrot.slane %v2442, %v2477
        %v2479 = vlaneseq
        %v2480 = vshrl.u32 %v2479, 7
        %v2481 = vsub.s32 0, %v2480
        %v2482 = vrot.slane %v2444, %v2481
        %2483 = vrot.lane.b32.xlu0 %v2450, 1
        %v2484 = vpop.permute.xlu0 %2483
        %2485 = vrot.lane.b32.xlu0 %v2454, 1
        %v2486 = vpop.permute.xlu0 %2485
        %2487 = vrot.lane.b32.xlu0 %v2458, 1
        %v2488 = vpop.permute.xlu0 %2487
        %2489 = vrot.lane.b32.xlu0 %v2462, 1
        %v2490 = vpop.permute.xlu0 %2489
        %2491 = vrot.lane.b32.xlu0 %v2466, 1
        %v2492 = vpop.permute.xlu0 %2491
        %2493 = vrot.lane.b32.xlu0 %v2470, 1
        %v2494 = vpop.permute.xlu0 %2493
        %2495 = vrot.lane.b32.xlu0 %v2474, 1
        %v2496 = vpop.permute.xlu0 %2495
        %2497 = vrot.lane.b32.xlu0 %v2478, 1
        %v2498 = vpop.permute.xlu0 %2497
        %2499 = vrot.lane.b32.xlu0 %v2482, 1
        %v2500 = vpop.permute.xlu0 %2499
        %v2501 = vsel %vm1582, %v2484, %v2486
        %v2502 = vsel %vm1582, %v2486, %v2488
        %v2503 = vsel %vm1582, %v2488, %v2490
        %v2504 = vsel %vm1582, %v2490, %v2492
        %v2505 = vsel %vm1582, %v2492, %v2494
        %v2506 = vsel %vm1582, %v2494, %v2496
        %v2507 = vsel %vm1582, %v2496, %v2498
        %v2508 = vsel %vm1582, %v2498, %v2500
        %v2517 = vsel %vm1479, %v2501, 0.0
        %v2518 = vsel %vm1480, %v2502, 0.0
        %v2519 = vsel %vm1481, %v2503, 0.0
        %v2520 = vsel %vm1482, %v2504, 0.0
        %v2521 = vsel %vm1483, %v2505, 0.0
        %v2522 = vsel %vm1484, %v2506, 0.0
        %v2523 = vsel %vm1485, %v2507, 0.0
        %v2524 = vsel %vm1486, %v2508, 0.0
        %v2533 = vcombine.low %v2517, %v2518
        %v2534 = vcombine.low %v2519, %v2520
        %v2535 = vcombine.low %v2521, %v2522
        %v2536 = vcombine.low %v2523, %v2524
        %v2538 = vunpack.c.l.s4 1966171168
        %v2539 = vunpack.c.0.s8 %v2538
        %v2540 = vlaneseq
        %v2541 = vshrl.u32 %v2540, 7
        %v2542 = vsub.s32 %v2539, %v2541
        %v2543 = vrot.slane %v2533, %v2542
        %v2545 = vunpack.c.l.s4 1966171168
        %v2546 = vunpack.c.0.s8 %v2545
        %v2547 = vlaneseq
        %v2548 = vshrl.u32 %v2547, 7
        %v2549 = vsub.s32 %v2546, %v2548
        %v2550 = vrot.slane %v2534, %v2549
        %v2552 = vunpack.c.l.s4 1966171168
        %v2553 = vunpack.c.0.s8 %v2552
        %v2554 = vlaneseq
        %v2555 = vshrl.u32 %v2554, 7
        %v2556 = vsub.s32 %v2553, %v2555
        %v2557 = vrot.slane %v2535, %v2556
        %v2559 = vunpack.c.l.s4 1966171168
        %v2560 = vunpack.c.0.s8 %v2559
        %v2561 = vlaneseq
        %v2562 = vshrl.u32 %v2561, 7
        %v2563 = vsub.s32 %v2560, %v2562
        %v2564 = vrot.slane %v2536, %v2563
        %v2565 = vcombine.low %v2543, %v2550
        %v2566 = vcombine.low %v2557, %v2564
        %v2568 = vunpack.c.l.s4 1966171168
        %v2569 = vunpack.c.0.s8 %v2568
        %v2570 = vlaneseq
        %v2571 = vshrl.u32 %v2570, 7
        %v2572 = vsub.s32 %v2569, %v2571
        %v2573 = vrot.slane %v2565, %v2572
        %v2575 = vunpack.c.l.s4 1966171168
        %v2576 = vunpack.c.0.s8 %v2575
        %v2577 = vlaneseq
        %v2578 = vshrl.u32 %v2577, 7
        %v2579 = vsub.s32 %v2576, %v2578
        %v2580 = vrot.slane %v2566, %v2579
        %v2581 = vcombine.low %v2573, %v2580
        %2582 = vrot.lane.b32.xlu0 %v2581, 32
        %v2583 = vpop.permute.xlu0 %2582
        %v2584 = vrot.slane %v2583, 7
        %v2585 = vsel %vm1127, %v2584, %v2583
        %v2588 = vadd.f32 %v2437, %v2585
        %v2589 = vadd.f32 %v2438, %v2584
        %v2590 = vadd.f32 %v2588, %v1812
        %v2591 = vadd.f32 %v2589, %v1812
        %v2592 = vxor.u32 %v2590, 2147483648
        %v2593 = vxor.u32 %v2591, 2147483648
        %v2594 = vmul.f32 %v2592, 1.442695
        %v2595 = vpow.pop %v2594
        %v2596 = vmul.f32 %v2593, 1.442695
        %v2597 = vpow.pop %v2596
        %v2598 = vadd.f32 %v2595, 1.0
        %v2599 = vadd.f32 %v2597, 1.0
        %v2600 = vrcp.pop %v2598
        %v2601 = vmul.f32 1.0, %v2600
        %v2602 = vrcp.pop %v2599
        %v2603 = vmul.f32 1.0, %v2602
        %2606 = vrot.lane.b32.xlu0 %v2601, 96
        %v2607 = vpop.permute.xlu0 %2606
        %2608 = vrot.lane.b32.xlu0 %v2603, 96
        %v2609 = vpop.permute.xlu0 %2608
        %v2610 = vrot.slane %v2607, 1
        %v2611 = vrot.slane %v2609, 1
        %v2612 = vsel %vm1515, %v2610, %v2611
        %vm2613 = vcmask 785408
        %v2614 = vsel %vm2613, %v2607, %v2612
        %s2616 = scalar_lea.vmem %s261, 2
        %2617 = vst [vmem:[%s2616] ss:$4 sm:$0xff] %v2614
        %s2618 = scalar_lea.vmem [#allocation2], 8
        %v2619 = vld [vmem:[%s2618] ss:$8 sm:$0xf]
        %v2620 = vld [vmem:[%s2618] ss:$8 sm:$0xf0]
        %v2621 = vor.u32 %v2619, %v2620
        %s2622 = scalar_lea.vmem [#allocation2], 72
        %v2623 = vld [vmem:[%s2622] ss:$8 sm:$0x1]
        %v2626 = vlaneseq
        %v2627 = vshrl.u32 %v2626, 7
        %v2628 = vsub.s32 0, %v2627
        %v2629 = vrot.slane %v2621, %v2628
        %v2630 = vlaneseq
        %v2631 = vshrl.u32 %v2630, 7
        %v2632 = vsub.s32 1, %v2631
        %v2633 = vrot.slane %v2621, %v2632
        %v2634 = vlaneseq
        %v2635 = vshrl.u32 %v2634, 7
        %v2636 = vsub.s32 2, %v2635
        %v2637 = vrot.slane %v2621, %v2636
        %v2638 = vlaneseq
        %v2639 = vshrl.u32 %v2638, 7
        %v2640 = vsub.s32 3, %v2639
        %v2641 = vrot.slane %v2621, %v2640
        %v2642 = vlaneseq
        %v2643 = vshrl.u32 %v2642, 7
        %v2644 = vsub.s32 4, %v2643
        %v2645 = vrot.slane %v2621, %v2644
        %v2646 = vlaneseq
        %v2647 = vshrl.u32 %v2646, 7
        %v2648 = vsub.s32 5, %v2647
        %v2649 = vrot.slane %v2621, %v2648
        %v2650 = vlaneseq
        %v2651 = vshrl.u32 %v2650, 7
        %v2652 = vsub.s32 6, %v2651
        %v2653 = vrot.slane %v2621, %v2652
        %v2654 = vlaneseq
        %v2655 = vshrl.u32 %v2654, 7
        %v2656 = vsub.s32 7, %v2655
        %v2657 = vrot.slane %v2621, %v2656
        %v2658 = vlaneseq
        %v2659 = vshrl.u32 %v2658, 7
        %v2660 = vsub.s32 0, %v2659
        %v2661 = vrot.slane %v2623, %v2660
        %2662 = vrot.lane.b32.xlu0 %v2629, 95
        %v2663 = vpop.permute.xlu0 %2662
        %2664 = vrot.lane.b32.xlu0 %v2633, 95
        %v2665 = vpop.permute.xlu0 %2664
        %2666 = vrot.lane.b32.xlu0 %v2637, 95
        %v2667 = vpop.permute.xlu0 %2666
        %2668 = vrot.lane.b32.xlu0 %v2641, 95
        %v2669 = vpop.permute.xlu0 %2668
        %2670 = vrot.lane.b32.xlu0 %v2645, 95
        %v2671 = vpop.permute.xlu0 %2670
        %2672 = vrot.lane.b32.xlu0 %v2649, 95
        %v2673 = vpop.permute.xlu0 %2672
        %2674 = vrot.lane.b32.xlu0 %v2653, 95
        %v2675 = vpop.permute.xlu0 %2674
        %2676 = vrot.lane.b32.xlu0 %v2657, 95
        %v2677 = vpop.permute.xlu0 %2676
        %2678 = vrot.lane.b32.xlu0 %v2661, 95
        %v2679 = vpop.permute.xlu0 %2678
        %vm2680 = vcmask 777216
        %v2681 = vsel %vm2680, %v2663, %v2665
        %v2682 = vsel %vm2680, %v2665, %v2667
        %v2683 = vsel %vm2680, %v2667, %v2669
        %v2684 = vsel %vm2680, %v2669, %v2671
        %v2685 = vsel %vm2680, %v2671, %v2673
        %v2686 = vsel %vm2680, %v2673, %v2675
        %v2687 = vsel %vm2680, %v2675, %v2677
        %v2688 = vsel %vm2680, %v2677, %v2679
        %v2697 = vsel %vm1487, %v2681, 0.0
        %v2698 = vsel %vm1488, %v2682, 0.0
        %v2699 = vsel %vm1489, %v2683, 0.0
        %v2700 = vsel %vm1490, %v2684, 0.0
        %v2701 = vsel %vm1491, %v2685, 0.0
        %v2702 = vsel %vm1492, %v2686, 0.0
        %v2703 = vsel %vm1493, %v2687, 0.0
        %v2704 = vsel %vm1494, %v2688, 0.0
        %v2705 = vadd.f32 %v2697, 0.0
        %v2706 = vadd.f32 %v2698, 0.0
        %v2707 = vadd.f32 %v2699, 0.0
        %v2708 = vadd.f32 %v2700, 0.0
        %v2709 = vadd.f32 %v2701, 0.0
        %v2710 = vadd.f32 %v2702, 0.0
        %v2711 = vadd.f32 %v2703, 0.0
        %v2712 = vadd.f32 %v2704, 0.0
        %s2713 = scalar_lea.vmem [#allocation2], 10
        %v2714 = vld [vmem:[%s2713] ss:$8 sm:$0xf]
        %v2715 = vld [vmem:[%s2713] ss:$8 sm:$0xf0]
        %v2716 = vor.u32 %v2714, %v2715
        %s2717 = scalar_lea.vmem [#allocation2], 74
        %v2718 = vld [vmem:[%s2717] ss:$8 sm:$0x1]
        %v2721 = vlaneseq
        %v2722 = vshrl.u32 %v2721, 7
        %v2723 = vsub.s32 0, %v2722
        %v2724 = vrot.slane %v2716, %v2723
        %v2725 = vlaneseq
        %v2726 = vshrl.u32 %v2725, 7
        %v2727 = vsub.s32 1, %v2726
        %v2728 = vrot.slane %v2716, %v2727
        %v2729 = vlaneseq
        %v2730 = vshrl.u32 %v2729, 7
        %v2731 = vsub.s32 2, %v2730
        %v2732 = vrot.slane %v2716, %v2731
        %v2733 = vlaneseq
        %v2734 = vshrl.u32 %v2733, 7
        %v2735 = vsub.s32 3, %v2734
        %v2736 = vrot.slane %v2716, %v2735
        %v2737 = vlaneseq
        %v2738 = vshrl.u32 %v2737, 7
        %v2739 = vsub.s32 4, %v2738
        %v2740 = vrot.slane %v2716, %v2739
        %v2741 = vlaneseq
        %v2742 = vshrl.u32 %v2741, 7
        %v2743 = vsub.s32 5, %v2742
        %v2744 = vrot.slane %v2716, %v2743
        %v2745 = vlaneseq
        %v2746 = vshrl.u32 %v2745, 7
        %v2747 = vsub.s32 6, %v2746
        %v2748 = vrot.slane %v2716, %v2747
        %v2749 = vlaneseq
        %v2750 = vshrl.u32 %v2749, 7
        %v2751 = vsub.s32 7, %v2750
        %v2752 = vrot.slane %v2716, %v2751
        %v2753 = vlaneseq
        %v2754 = vshrl.u32 %v2753, 7
        %v2755 = vsub.s32 0, %v2754
        %v2756 = vrot.slane %v2718, %v2755
        %2757 = vrot.lane.b32.xlu0 %v2724, 96
        %v2758 = vpop.permute.xlu0 %2757
        %2759 = vrot.lane.b32.xlu0 %v2728, 96
        %v2760 = vpop.permute.xlu0 %2759
        %2761 = vrot.lane.b32.xlu0 %v2732, 96
        %v2762 = vpop.permute.xlu0 %2761
        %2763 = vrot.lane.b32.xlu0 %v2736, 96
        %v2764 = vpop.permute.xlu0 %2763
        %2765 = vrot.lane.b32.xlu0 %v2740, 96
        %v2766 = vpop.permute.xlu0 %2765
        %2767 = vrot.lane.b32.xlu0 %v2744, 96
        %v2768 = vpop.permute.xlu0 %2767
        %2769 = vrot.lane.b32.xlu0 %v2748, 96
        %v2770 = vpop.permute.xlu0 %2769
        %2771 = vrot.lane.b32.xlu0 %v2752, 96
        %v2772 = vpop.permute.xlu0 %2771
        %2773 = vrot.lane.b32.xlu0 %v2756, 96
        %v2774 = vpop.permute.xlu0 %2773
        %v2775 = vsel %vm2613, %v2758, %v2760
        %v2776 = vsel %vm2613, %v2760, %v2762
        %v2777 = vsel %vm2613, %v2762, %v2764
        %v2778 = vsel %vm2613, %v2764, %v2766
        %v2779 = vsel %vm2613, %v2766, %v2768
        %v2780 = vsel %vm2613, %v2768, %v2770
        %v2781 = vsel %vm2613, %v2770, %v2772
        %v2782 = vsel %vm2613, %v2772, %v2774
        %v2791 = vadd.f32 %v2705, %v2775
        %v2792 = vadd.f32 %v2706, %v2776
        %v2793 = vadd.f32 %v2707, %v2777
        %v2794 = vadd.f32 %v2708, %v2778
        %v2795 = vadd.f32 %v2709, %v2779
        %v2796 = vadd.f32 %v2710, %v2780
        %v2797 = vadd.f32 %v2711, %v2781
        %v2798 = vadd.f32 %v2712, %v2782
        %s2799 = scalar_lea.vmem [#allocation2], 88
        %v2800 = vld [vmem:[%s2799] ss:$8 sm:$0xf]
        %v2801 = vld [vmem:[%s2799] ss:$8 sm:$0xf0]
        %v2802 = vor.u32 %v2800, %v2801
        %s2803 = scalar_lea.vmem [#allocation2], 152
        %v2804 = vld [vmem:[%s2803] ss:$8 sm:$0x1]
        %v2807 = vlaneseq
        %v2808 = vshrl.u32 %v2807, 7
        %v2809 = vsub.s32 0, %v2808
        %v2810 = vrot.slane %v2802, %v2809
        %v2811 = vlaneseq
        %v2812 = vshrl.u32 %v2811, 7
        %v2813 = vsub.s32 1, %v2812
        %v2814 = vrot.slane %v2802, %v2813
        %v2815 = vlaneseq
        %v2816 = vshrl.u32 %v2815, 7
        %v2817 = vsub.s32 2, %v2816
        %v2818 = vrot.slane %v2802, %v2817
        %v2819 = vlaneseq
        %v2820 = vshrl.u32 %v2819, 7
        %v2821 = vsub.s32 3, %v2820
        %v2822 = vrot.slane %v2802, %v2821
        %v2823 = vlaneseq
        %v2824 = vshrl.u32 %v2823, 7
        %v2825 = vsub.s32 4, %v2824
        %v2826 = vrot.slane %v2802, %v2825
        %v2827 = vlaneseq
        %v2828 = vshrl.u32 %v2827, 7
        %v2829 = vsub.s32 5, %v2828
        %v2830 = vrot.slane %v2802, %v2829
        %v2831 = vlaneseq
        %v2832 = vshrl.u32 %v2831, 7
        %v2833 = vsub.s32 6, %v2832
        %v2834 = vrot.slane %v2802, %v2833
        %v2835 = vlaneseq
        %v2836 = vshrl.u32 %v2835, 7
        %v2837 = vsub.s32 7, %v2836
        %v2838 = vrot.slane %v2802, %v2837
        %v2839 = vlaneseq
        %v2840 = vshrl.u32 %v2839, 7
        %v2841 = vsub.s32 0, %v2840
        %v2842 = vrot.slane %v2804, %v2841
        %2843 = vrot.lane.b32.xlu0 %v2810, 127
        %v2844 = vpop.permute.xlu0 %2843
        %2845 = vrot.lane.b32.xlu0 %v2814, 127
        %v2846 = vpop.permute.xlu0 %2845
        %2847 = vrot.lane.b32.xlu0 %v2818, 127
        %v2848 = vpop.permute.xlu0 %2847
        %2849 = vrot.lane.b32.xlu0 %v2822, 127
        %v2850 = vpop.permute.xlu0 %2849
        %2851 = vrot.lane.b32.xlu0 %v2826, 127
        %v2852 = vpop.permute.xlu0 %2851
        %2853 = vrot.lane.b32.xlu0 %v2830, 127
        %v2854 = vpop.permute.xlu0 %2853
        %2855 = vrot.lane.b32.xlu0 %v2834, 127
        %v2856 = vpop.permute.xlu0 %2855
        %2857 = vrot.lane.b32.xlu0 %v2838, 127
        %v2858 = vpop.permute.xlu0 %2857
        %2859 = vrot.lane.b32.xlu0 %v2842, 127
        %v2860 = vpop.permute.xlu0 %2859
        %v2861 = vsel %vm1883, %v2844, %v2846
        %v2862 = vsel %vm1883, %v2846, %v2848
        %v2863 = vsel %vm1883, %v2848, %v2850
        %v2864 = vsel %vm1883, %v2850, %v2852
        %v2865 = vsel %vm1883, %v2852, %v2854
        %v2866 = vsel %vm1883, %v2854, %v2856
        %v2867 = vsel %vm1883, %v2856, %v2858
        %v2868 = vsel %vm1883, %v2858, %v2860
        %v2877 = vsel %vm1487, %v2861, 0.0
        %v2878 = vsel %vm1488, %v2862, 0.0
        %v2879 = vsel %vm1489, %v2863, 0.0
        %v2880 = vsel %vm1490, %v2864, 0.0
        %v2881 = vsel %vm1491, %v2865, 0.0
        %v2882 = vsel %vm1492, %v2866, 0.0
        %v2883 = vsel %vm1493, %v2867, 0.0
        %v2884 = vsel %vm1494, %v2868, 0.0
        %v2885 = vadd.f32 %v2791, %v2877
        %v2886 = vadd.f32 %v2792, %v2878
        %v2887 = vadd.f32 %v2793, %v2879
        %v2888 = vadd.f32 %v2794, %v2880
        %v2889 = vadd.f32 %v2795, %v2881
        %v2890 = vadd.f32 %v2796, %v2882
        %v2891 = vadd.f32 %v2797, %v2883
        %v2892 = vadd.f32 %v2798, %v2884
        %s2893 = scalar_lea.vmem [#allocation2], 90
        %v2894 = vld [vmem:[%s2893] ss:$8 sm:$0xf]
        %v2895 = vld [vmem:[%s2893] ss:$8 sm:$0xf0]
        %v2896 = vor.u32 %v2894, %v2895
        %v2898 = vlaneseq
        %v2899 = vshrl.u32 %v2898, 7
        %v2900 = vsub.s32 0, %v2899
        %v2901 = vrot.slane %v2896, %v2900
        %v2902 = vlaneseq
        %v2903 = vshrl.u32 %v2902, 7
        %v2904 = vsub.s32 1, %v2903
        %v2905 = vrot.slane %v2896, %v2904
        %v2906 = vlaneseq
        %v2907 = vshrl.u32 %v2906, 7
        %v2908 = vsub.s32 2, %v2907
        %v2909 = vrot.slane %v2896, %v2908
        %v2910 = vlaneseq
        %v2911 = vshrl.u32 %v2910, 7
        %v2912 = vsub.s32 3, %v2911
        %v2913 = vrot.slane %v2896, %v2912
        %v2914 = vlaneseq
        %v2915 = vshrl.u32 %v2914, 7
        %v2916 = vsub.s32 4, %v2915
        %v2917 = vrot.slane %v2896, %v2916
        %v2918 = vlaneseq
        %v2919 = vshrl.u32 %v2918, 7
        %v2920 = vsub.s32 5, %v2919
        %v2921 = vrot.slane %v2896, %v2920
        %v2922 = vlaneseq
        %v2923 = vshrl.u32 %v2922, 7
        %v2924 = vsub.s32 6, %v2923
        %v2925 = vrot.slane %v2896, %v2924
        %v2926 = vlaneseq
        %v2927 = vshrl.u32 %v2926, 7
        %v2928 = vsub.s32 7, %v2927
        %v2929 = vrot.slane %v2896, %v2928
        %v2938 = vadd.f32 %v2885, %v2901
        %v2939 = vadd.f32 %v2886, %v2905
        %v2940 = vadd.f32 %v2887, %v2909
        %v2941 = vadd.f32 %v2888, %v2913
        %v2942 = vadd.f32 %v2889, %v2917
        %v2943 = vadd.f32 %v2890, %v2921
        %v2944 = vadd.f32 %v2891, %v2925
        %v2945 = vadd.f32 %v2892, %v2929
        %v2946 = vadd.f32 %v2938, %v1812
        %v2947 = vadd.f32 %v2939, %v1812
        %v2948 = vadd.f32 %v2940, %v1812
        %v2949 = vadd.f32 %v2941, %v1812
        %v2950 = vadd.f32 %v2942, %v1812
        %v2951 = vadd.f32 %v2943, %v1812
        %v2952 = vadd.f32 %v2944, %v1812
        %v2953 = vadd.f32 %v2945, %v1812
        %v2954 = vxor.u32 %v2946, 2147483648
        %v2955 = vxor.u32 %v2947, 2147483648
        %v2956 = vxor.u32 %v2948, 2147483648
        %v2957 = vxor.u32 %v2949, 2147483648
        %v2958 = vxor.u32 %v2950, 2147483648
        %v2959 = vxor.u32 %v2951, 2147483648
        %v2960 = vxor.u32 %v2952, 2147483648
        %v2961 = vxor.u32 %v2953, 2147483648
        %v2962 = vmul.f32 %v2954, 1.442695
        %v2963 = vpow.pop %v2962
        %v2964 = vmul.f32 %v2955, 1.442695
        %v2965 = vpow.pop %v2964
        %v2966 = vmul.f32 %v2956, 1.442695
        %v2967 = vpow.pop %v2966
        %v2968 = vmul.f32 %v2957, 1.442695
        %v2969 = vpow.pop %v2968
        %v2970 = vmul.f32 %v2958, 1.442695
        %v2971 = vpow.pop %v2970
        %v2972 = vmul.f32 %v2959, 1.442695
        %v2973 = vpow.pop %v2972
        %v2974 = vmul.f32 %v2960, 1.442695
        %v2975 = vpow.pop %v2974
        %v2976 = vmul.f32 %v2961, 1.442695
        %v2977 = vpow.pop %v2976
        %v2978 = vadd.f32 %v2963, 1.0
        %v2979 = vadd.f32 %v2965, 1.0
        %v2980 = vadd.f32 %v2967, 1.0
        %v2981 = vadd.f32 %v2969, 1.0
        %v2982 = vadd.f32 %v2971, 1.0
        %v2983 = vadd.f32 %v2973, 1.0
        %v2984 = vadd.f32 %v2975, 1.0
        %v2985 = vadd.f32 %v2977, 1.0
        %v2986 = vrcp.pop %v2978
        %v2987 = vmul.f32 1.0, %v2986
        %v2988 = vrcp.pop %v2979
        %v2989 = vmul.f32 1.0, %v2988
        %v2990 = vrcp.pop %v2980
        %v2991 = vmul.f32 1.0, %v2990
        %v2992 = vrcp.pop %v2981
        %v2993 = vmul.f32 1.0, %v2992
        %v2994 = vrcp.pop %v2982
        %v2995 = vmul.f32 1.0, %v2994
        %v2996 = vrcp.pop %v2983
        %v2997 = vmul.f32 1.0, %v2996
        %v2998 = vrcp.pop %v2984
        %v2999 = vmul.f32 1.0, %v2998
        %v3000 = vrcp.pop %v2985
        %v3001 = vmul.f32 1.0, %v3000
        %v3010 = vcombine.low %v2987, %v2989
        %v3011 = vcombine.low %v2991, %v2993
        %v3012 = vcombine.low %v2995, %v2997
        %v3013 = vcombine.low %v2999, %v3001
        %v3015 = vunpack.c.l.s4 1966171168
        %v3016 = vunpack.c.0.s8 %v3015
        %v3017 = vlaneseq
        %v3018 = vshrl.u32 %v3017, 7
        %v3019 = vsub.s32 %v3016, %v3018
        %v3020 = vrot.slane %v3010, %v3019
        %v3022 = vunpack.c.l.s4 1966171168
        %v3023 = vunpack.c.0.s8 %v3022
        %v3024 = vlaneseq
        %v3025 = vshrl.u32 %v3024, 7
        %v3026 = vsub.s32 %v3023, %v3025
        %v3027 = vrot.slane %v3011, %v3026
        %v3029 = vunpack.c.l.s4 1966171168
        %v3030 = vunpack.c.0.s8 %v3029
        %v3031 = vlaneseq
        %v3032 = vshrl.u32 %v3031, 7
        %v3033 = vsub.s32 %v3030, %v3032
        %v3034 = vrot.slane %v3012, %v3033
        %v3036 = vunpack.c.l.s4 1966171168
        %v3037 = vunpack.c.0.s8 %v3036
        %v3038 = vlaneseq
        %v3039 = vshrl.u32 %v3038, 7
        %v3040 = vsub.s32 %v3037, %v3039
        %v3041 = vrot.slane %v3013, %v3040
        %v3042 = vcombine.low %v3020, %v3027
        %v3043 = vcombine.low %v3034, %v3041
        %v3045 = vunpack.c.l.s4 1966171168
        %v3046 = vunpack.c.0.s8 %v3045
        %v3047 = vlaneseq
        %v3048 = vshrl.u32 %v3047, 7
        %v3049 = vsub.s32 %v3046, %v3048
        %v3050 = vrot.slane %v3042, %v3049
        %v3052 = vunpack.c.l.s4 1966171168
        %v3053 = vunpack.c.0.s8 %v3052
        %v3054 = vlaneseq
        %v3055 = vshrl.u32 %v3054, 7
        %v3056 = vsub.s32 %v3053, %v3055
        %v3057 = vrot.slane %v3043, %v3056
        %v3058 = vcombine.low %v3050, %v3057
        %s3060 = scalar_lea.vmem %s261, 3
        %3061 = vst [vmem:[%s3060] ss:$4 sm:$0xff] %v3058
        %p3062 = scmp.lt.s32.totalorder %s20, 1
        %s3063 = scalar_select %p3062, %s20, 1
        %s3064 = smul.addr %s3063, 8
        %s3065 = smul.addr %s3064, 4
        %s3066 = scalar_lea.vmem %s5, %s3065
        // Predicated region
        $region57: #{decoder2d_forward.1} parent=39 // pred_check
          %p3067 = pneg %p143
        $region58: #{decoder2d_forward.1} parent=39 // pred_check_branch
          %3069 = sbr.rel (%p3067) target = $region60
        $region59: #{decoder2d_forward.1} parent=39 // pred_region
          _
        $region60: #{decoder2d_forward.1} parent=39 // pred_fallthru
          _
      $region40: #{decoder2d_forward.1} parent=5 // pred_fallthru
        _
      %p3070 = scmp.le.s32.totalorder 2, %s15
      // Predicated region
      $region61: #{decoder2d_forward.1} parent=5 // pred_check
        %p3071 = pneg %p3070
      $region62: #{decoder2d_forward.1} parent=5 // pred_check_branch
        %3073 = sbr.rel (%p3071) target = $region64
      $region63: #{decoder2d_forward.1} parent=5 // pred_region
        %s3074 = ssub.s32 %s15, 2
        // Predicated region
        $region65: #{decoder2d_forward.1} parent=63 // pred_check
          %p3075 = pneg %p149
        $region66: #{decoder2d_forward.1} parent=63 // pred_check_branch
          %3077 = sbr.rel (%p3075) target = $region68
        $region67: #{decoder2d_forward.1} parent=63 // pred_region
          %p3078 = scmp.lt.s32.totalorder %s21, 1
          %s3079 = scalar_select %p3078, %s21, 1
          %s3080 = smul.addr %s3079, 8
          %s3081 = smul.addr %s3080, 4
          %s3082 = scalar_lea.vmem %s5, %s3081
        $region68: #{decoder2d_forward.1} parent=63 // pred_fallthru
          _
      $region64: #{decoder2d_forward.1} parent=5 // pred_fallthru
        _
    $region6: #{decoder2d_forward.1} parent=1 // loop_footer
      %s19 = sadd.s32 1, %s15
    $region7: #{decoder2d_forward.1} parent=1 // loop_footer_branch
      %14 = sbr.rel target = $region3
    $region8: #{decoder2d_forward.1} parent=1 // loop_exit
      _
    %3083 = vsyncpa [#allocation5], 1
    %s3084 = scalar_lea.sflag [#allocation5], 1
    %3085 = vsyncpa %s3084, 1
    %3086 = vsyncpa [#allocation9], 1
    %3087 = vsyncpa [#allocation6], 1
    %s3088 = scalar_lea.sflag [#allocation6], 1
    %3089 = vsyncpa %s3088, 1

</llo_original>
